<compile_context>
chip_gen: v6e
topology: v6e:2x2x1
jax: 0.10.0
libtpu: 0.0.40
codegen_flags: <defaults>
</compile_context>

<pallas_src>
import jax
import jax.numpy as jnp
from jax import lax
from jax.experimental import pallas as pl
from jax.experimental.pallas import tpu as pltpu

EXPANSION = 4
BN_EPS = 1e-5
LANES = 128


def _round_up(c, m=LANES):
    return ((c + m - 1) // m) * m


# ----------------------------------------------------------------------------
# Pallas kernel: fused  conv1(1x1)+bn+relu -> conv2(3x3,p=1)+bn+relu
#                      -> conv3(1x1)+bn    -> (+ shortcut 1x1 conv+bn) -> relu
# All channel dims are pre-padded to multiples of 128 (lane-dense).
# Weights are bf16 with the BN scale folded in; biases are f32.
# ----------------------------------------------------------------------------
def _bottleneck_kernel(x_ref, w1_ref, w2_ref, w3_ref, ws_ref,
                       b1_ref, b2_ref, b3_ref, bs_ref, out_ref):
    _, H, W, Cin = x_ref.shape
    Cmid = w1_ref.shape[1]
    Cout = w3_ref.shape[1]

    x2 = x_ref[0].reshape(H * W, Cin)                 # bf16, (H*W, Cin)

    # --- projection shortcut (1x1 conv + bn) first: it becomes the f32
    #     accumulator so h3 and sc are never both live with h2 -------------
    acc = jnp.dot(x2, ws_ref[...], preferred_element_type=jnp.float32)
    acc = acc + bs_ref[...]

    # --- conv1 (1x1, scale folded into w1) + bias + relu -------------------
    h1 = jnp.dot(x2, w1_ref[...], preferred_element_type=jnp.float32)
    h1 = jnp.maximum(h1 + b1_ref[...], 0.0)

    # --- conv2 (3x3, stride 1, pad 1) via im2col ----------------------------
    # dx taps: zero-column concat along W + static slices (handled in-value,
    #          no misaligned scratch store).
    # dy taps: zero-row concat along H + major-dim slices (always aligned).
    # Result: one (H*W, 9*Cmid) x (9*Cmid, Cmid) bf16 matmul on the MXU.
    h1_3d = h1.reshape(H, W, Cmid)
    zc = jnp.zeros((H, 1, Cmid), jnp.float32)
    hp = jnp.concatenate([zc, h1_3d, zc], axis=1)               # (H, W+2, C)
    im = jnp.concatenate(
        [hp[:, 0:W, :], hp[:, 1:W + 1, :], hp[:, 2:W + 2, :]], axis=2)  # (H, W, 3C)
    zr = jnp.zeros((1, W, 3 * Cmid), jnp.float32)
    imp = jnp.concatenate([zr, im, zr], axis=0)                 # (H+2, W, 3C)
    lhs = jnp.concatenate(
        [imp[dy:dy + H].reshape(H * W, 3 * Cmid) for dy in range(3)],
        axis=1)                                                 # (H*W, 9C)
    h2 = jnp.dot(lhs.astype(jnp.bfloat16), w2_ref[...],
                 preferred_element_type=jnp.float32)
    h2 = jnp.maximum(h2 + b2_ref[...], 0.0)

    # --- conv3 (1x1, scale folded) + bias, add shortcut, final relu ---------
    h3 = jnp.dot(h2.astype(jnp.bfloat16), w3_ref[...],
                 preferred_element_type=jnp.float32)
    out = jnp.maximum(h3 + b3_ref[...] + acc, 0.0)
    out_ref[0] = out.reshape(H, W, Cout).astype(out_ref.dtype)


# ----------------------------------------------------------------------------
# Wrappers
# ----------------------------------------------------------------------------
_PARAM_ORDER = ("w1", "w2", "w3", "ws", "b1", "b2", "b3", "bs")


def bottleneck_forward_nhwc(x_nhwc, kp):
    """NHWC in / NHWC out (preferred: avoids layout transposes entirely)."""
    x = x_nhwc.astype(jnp.bfloat16)
    N, H, W, Cin = x.shape
    Cin_p = kp["w1"].shape[0]
    Cout_p = kp["w3"].shape[1]
    if Cin_p > Cin:                       # lane-dense channel padding
        x = jnp.pad(x, ((0, 0), (0, 0), (0, 0), (0, Cin_p - Cin)))

    def full_spec(a):
        nd = a.ndim
        return pl.BlockSpec(a.shape, lambda n, nd=nd: (0,) * nd)

    grid_spec = pltpu.PrefetchScalarGridSpec(
        num_scalar_prefetch=0,
        grid=(N,),
        in_specs=[pl.BlockSpec((1, H, W, Cin_p), lambda n: (n, 0, 0, 0))]
                 + [full_spec(kp[k]) for k in _PARAM_ORDER],
        out_specs=pl.BlockSpec((1, H, W, Cout_p), lambda n: (n, 0, 0, 0)),
    )

    out_nhwc = pl.pallas_call(
        _bottleneck_kernel,
        out_shape=jax.ShapeDtypeStruct((N, H, W, Cout_p), jnp.float32),
        grid_spec=grid_spec,
        compiler_params=pltpu.CompilerParams(
            dimension_semantics=("parallel",),
            vmem_limit_bytes=64 * 1024 * 1024),
    )(x, *[kp[k] for k in _PARAM_ORDER])

    return out_nhwc[..., :kp["cout"]]     # strip lane padding


def bottleneck_forward(x_nchw, kp):
    """PyTorch-style NCHW in / NCHW out (transpose done in bf16)."""
    x_nhwc = jnp.transpose(x_nchw.astype(jnp.bfloat16), (0, 2, 3, 1))
    out = bottleneck_forward_nhwc(x_nhwc, kp)
    return jnp.transpose(out, (0, 3, 1, 2))


# ----------------------------------------------------------------------------
# Deterministic parameter init (PyTorch layouts), BN folding, JAX reference
# ----------------------------------------------------------------------------
def init_params(key, in_channels, out_channels):
    Cmid = out_channels
    Cout = out_channels * EXPANSION
    ks = jax.random.split(key, 8)
    rnd = lambda k, shape: 0.1 * jax.random.normal(k, shape, jnp.float32)
    p = {
        "conv1_w": rnd(ks[0], (Cmid, in_channels, 1, 1)),
        "conv1_b": rnd(ks[1], (Cmid,)),
        "conv2_w": rnd(ks[2], (Cmid, Cmid, 3, 3)),
        "conv2_b": rnd(ks[3], (Cmid,)),
        "conv3_w": rnd(ks[4], (Cout, Cmid, 1, 1)),
        "conv3_b": rnd(ks[5], (Cout,)),
        "convs_w": rnd(ks[6], (Cout, in_channels, 1, 1)),
        "convs_b": rnd(ks[7], (Cout,)),
    }

    def bn_params(kk, C):
        a, b, c, d = jax.random.split(kk, 4)
        return dict(gamma=1.0 + 0.1 * jax.random.normal(a, (C,), jnp.float32),
                    beta=0.1 * jax.random.normal(b, (C,), jnp.float32),
                    mean=0.1 * jax.random.normal(c, (C,), jnp.float32),
                    var=jnp.abs(jax.random.normal(d, (C,), jnp.float32)) + 0.5)

    kb = jax.random.split(jax.random.fold_in(key, 1), 4)
    p["bn1"] = bn_params(kb[0], Cmid)
    p["bn2"] = bn_params(kb[1], Cmid)
    p["bn3"] = bn_params(kb[2], Cout)
    p["bns"] = bn_params(kb[3], Cout)
    return p


def _fold_bn(conv_b, bn):
    scale = bn["gamma"] / jnp.sqrt(bn["var"] + BN_EPS)
    bias = (conv_b - bn["mean"]) * scale + bn["beta"]
    return scale, bias


def to_kernel_params(p):
    """Fold BN scale into conv weights, pad channels to lane multiples,
    cast matmul weights to bf16 (biases stay f32)."""
    Cmid, Cin = p["conv1_w"].shape[:2]
    Cout = p["conv3_w"].shape[0]
    Cin_p, Cmid_p, Cout_p = _round_up(Cin), _round_up(Cmid), _round_up(Cout)

    s1, b1 = _fold_bn(p["conv1_b"], p["bn1"])
    s2, b2 = _fold_bn(p["conv2_b"], p["bn2"])
    s3, b3 = _fold_bn(p["conv3_b"], p["bn3"])
    ss, bs = _fold_bn(p["convs_b"], p["bns"])

    # 1x1 convs -> (ci, co) matmul weights with BN scale folded into columns.
    w1 = jnp.transpose(p["conv1_w"][:, :, 0, 0], (1, 0)) * s1[None, :]
    w3 = jnp.transpose(p["conv3_w"][:, :, 0, 0], (1, 0)) * s3[None, :]
    ws = jnp.transpose(p["convs_w"][:, :, 0, 0], (1, 0)) * ss[None, :]

    # 3x3 conv -> im2col weight: (kh, kw, ci, co) flattened to (9*Cmid_p, Cmid_p),
    # matching the kernel's (dy-major, dx, ci) column order.
    w2 = jnp.transpose(p["conv2_w"], (2, 3, 1, 0)) * s2[None, None, None, :]
    w2 = jnp.pad(w2, ((0, 0), (0, 0), (0, Cmid_p - Cmid), (0, Cmid_p - Cmid)))
    w2 = w2.reshape(9 * Cmid_p, Cmid_p)

    def padw(w, rp, cp):
        r, c = w.shape
        return jnp.pad(w, ((0, rp - r), (0, cp - c))).astype(jnp.bfloat16)

    def padb(b, cp):
        return jnp.pad(b, (0, cp - b.shape[0])).reshape(1, -1).astype(jnp.float32)

    return {
        "w1": padw(w1, Cin_p, Cmid_p),
        "w2": w2.astype(jnp.bfloat16),
        "w3": padw(w3, Cmid_p, Cout_p),
        "ws": padw(ws, Cin_p, Cout_p),
        "b1": padb(b1, Cmid_p),
        "b2": padb(b2, Cmid_p),
        "b3": padb(b3, Cout_p),
        "bs": padb(bs, Cout_p),
        "cout": Cout,
    }


def ref_forward(x, p):
    def conv(x, w, b, pad=0):
        y = lax.conv_general_dilated(x, w, (1, 1), [(pad, pad), (pad, pad)],
                                     dimension_numbers=("NCHW", "OIHW", "NCHW"))
        return y + b[None, :, None, None]

    def bn(x, d):
        return ((x - d["mean"][None, :, None, None])
                / jnp.sqrt(d["var"][None, :, None, None] + BN_EPS)
                * d["gamma"][None, :, None, None] + d["beta"][None, :, None, None])

    out = jax.nn.relu(bn(conv(x, p["conv1_w"], p["conv1_b"]), p["bn1"]))
    out = jax.nn.relu(bn(conv(out, p["conv2_w"], p["conv2_b"], pad=1), p["bn2"]))
    out = bn(conv(out, p["conv3_w"], p["conv3_b"]), p["bn3"])
    sc = bn(conv(x, p["convs_w"], p["convs_b"]), p["bns"])
    return jax.nn.relu(out + sc)


# ----------------------------------------------------------------------------
if __name__ == "__main__":
    key = jax.random.PRNGKey(0)
    kx, kparams = jax.random.split(key)

    N, Cin, H, W = 2, 4, 16, 16          # small NCHW input, matches PyTorch conv
    out_channels = 4                     # Bottleneck(in_channels=4, out_channels=4)
    x = jax.random.normal(kx, (N, Cin, H, W), jnp.float32)

    params = init_params(kparams, Cin, out_channels)
    kparams_folded = to_kernel_params(params)

    out = bottleneck_forward(x, kparams_folded)
    out = jax.block_until_ready(out)

    ref = ref_forward(x, params)
    assert out.shape == (N, out_channels * EXPANSION, H, W), out.shape
    max_err = float(jnp.max(jnp.abs(out - ref)))
    # bf16 MXU operands -> loosened tolerance vs the pure-f32 reference.
    assert jnp.allclose(out, ref, atol=3e-2, rtol=3e-2), max_err

    print("KERNEL_OK")
</pallas_src>

<mosaic_0001>
module attributes {stable_mosaic.version = 11 : i64} {
  func.func @_bottleneck_kernel(%arg0: i32, %arg1: memref<1x16x16x128xbf16, #tpu.memory_space<vmem>>, %arg2: memref<128x128xbf16, #tpu.memory_space<vmem>>, %arg3: memref<1152x128xbf16, #tpu.memory_space<vmem>>, %arg4: memref<128x128xbf16, #tpu.memory_space<vmem>>, %arg5: memref<128x128xbf16, #tpu.memory_space<vmem>>, %arg6: memref<1x128xf32, #tpu.memory_space<vmem>>, %arg7: memref<1x128xf32, #tpu.memory_space<vmem>>, %arg8: memref<1x128xf32, #tpu.memory_space<vmem>>, %arg9: memref<1x128xf32, #tpu.memory_space<vmem>>, %arg10: memref<1x16x16x128xf32, #tpu.memory_space<vmem>>) attributes {dimension_semantics = [#tpu.dimension_semantics<parallel>], iteration_bounds = array<i64: 2>, scalar_prefetch = 0 : i64, scratch_operands = 0 : i64, tpu.core_type = #tpu.core_type<tc>, window_params = [{transform_indices = @transform_0, window_bounds = array<i64: 1, 16, 16, 128>}, {pipeline_mode = #tpu.pipeline_mode<synchronous>, transform_indices = @transform_1, window_bounds = array<i64: 128, 128>}, {pipeline_mode = #tpu.pipeline_mode<synchronous>, transform_indices = @transform_2, window_bounds = array<i64: 1152, 128>}, {pipeline_mode = #tpu.pipeline_mode<synchronous>, transform_indices = @transform_3, window_bounds = array<i64: 128, 128>}, {pipeline_mode = #tpu.pipeline_mode<synchronous>, transform_indices = @transform_4, window_bounds = array<i64: 128, 128>}, {pipeline_mode = #tpu.pipeline_mode<synchronous>, transform_indices = @transform_5, window_bounds = array<i64: 1, 128>}, {pipeline_mode = #tpu.pipeline_mode<synchronous>, transform_indices = @transform_6, window_bounds = array<i64: 1, 128>}, {pipeline_mode = #tpu.pipeline_mode<synchronous>, transform_indices = @transform_7, window_bounds = array<i64: 1, 128>}, {pipeline_mode = #tpu.pipeline_mode<synchronous>, transform_indices = @transform_8, window_bounds = array<i64: 1, 128>}, {transform_indices = @transform_9, window_bounds = array<i64: 1, 16, 16, 128>}]} {
    %c0 = arith.constant 0 : index
    %c0_0 = arith.constant 0 : index
    %c0_1 = arith.constant 0 : index
    %c0_2 = arith.constant 0 : index
    %0 = vector.load %arg1[%c0, %c0_0, %c0_1, %c0_2] : memref<1x16x16x128xbf16, #tpu.memory_space<vmem>>, vector<1x16x16x128xbf16>
    %1 = vector.shape_cast %0 : vector<1x16x16x128xbf16> to vector<16x16x128xbf16>
    %2 = vector.shape_cast %1 : vector<16x16x128xbf16> to vector<256x128xbf16>
    %c0_3 = arith.constant 0 : index
    %c0_4 = arith.constant 0 : index
    %3 = vector.load %arg5[%c0_3, %c0_4] : memref<128x128xbf16, #tpu.memory_space<vmem>>, vector<128x128xbf16>
    %cst = arith.constant dense<0.000000e+00> : vector<256x128xf32>
    %4 = tpu.matmul %2, %3, %cst {dimension_numbers = #tpu.dot_dimension_numbers<[1], [0], [0], [1], [0, 0, 1, 1], [], []>} : vector<256x128xbf16>, vector<128x128xbf16>, vector<256x128xf32> -> vector<256x128xf32>
    %c0_5 = arith.constant 0 : index
    %c0_6 = arith.constant 0 : index
    %5 = vector.load %arg9[%c0_5, %c0_6] : memref<1x128xf32, #tpu.memory_space<vmem>>, vector<1x128xf32>
    %6 = vector.broadcast %5 : vector<1x128xf32> to vector<256x128xf32>
    %7 = arith.addf %4, %6 : vector<256x128xf32>
    %c0_7 = arith.constant 0 : index
    %c0_8 = arith.constant 0 : index
    %8 = vector.load %arg2[%c0_7, %c0_8] : memref<128x128xbf16, #tpu.memory_space<vmem>>, vector<128x128xbf16>
    %cst_9 = arith.constant dense<0.000000e+00> : vector<256x128xf32>
    %9 = tpu.matmul %2, %8, %cst_9 {dimension_numbers = #tpu.dot_dimension_numbers<[1], [0], [0], [1], [0, 0, 1, 1], [], []>} : vector<256x128xbf16>, vector<128x128xbf16>, vector<256x128xf32> -> vector<256x128xf32>
    %c0_10 = arith.constant 0 : index
    %c0_11 = arith.constant 0 : index
    %10 = vector.load %arg6[%c0_10, %c0_11] : memref<1x128xf32, #tpu.memory_space<vmem>>, vector<1x128xf32>
    %11 = vector.broadcast %10 : vector<1x128xf32> to vector<256x128xf32>
    %12 = arith.addf %9, %11 : vector<256x128xf32>
    %cst_12 = arith.constant 0.000000e+00 : f32
    %13 = vector.broadcast %cst_12 : f32 to vector<256x128xf32>
    %14 = arith.maximumf %12, %13 : vector<256x128xf32>
    %15 = vector.shape_cast %14 : vector<256x128xf32> to vector<16x16x128xf32>
    %cst_13 = arith.constant 0.000000e+00 : f32
    %16 = vector.broadcast %cst_13 : f32 to vector<16x1x128xf32>
    %17 = tpu.concatenate %16, %15, %16 in 1 : vector<16x1x128xf32>, vector<16x16x128xf32>, vector<16x1x128xf32> -> vector<16x18x128xf32>
    %18 = vector.extract_strided_slice %17 {offsets = [0, 0, 0], sizes = [16, 16, 128], strides = [1, 1, 1]} : vector<16x18x128xf32> to vector<16x16x128xf32>
    %19 = vector.extract_strided_slice %17 {offsets = [0, 1, 0], sizes = [16, 16, 128], strides = [1, 1, 1]} : vector<16x18x128xf32> to vector<16x16x128xf32>
    %20 = vector.extract_strided_slice %17 {offsets = [0, 2, 0], sizes = [16, 16, 128], strides = [1, 1, 1]} : vector<16x18x128xf32> to vector<16x16x128xf32>
    %21 = tpu.concatenate %18, %19, %20 in 2 : vector<16x16x128xf32>, vector<16x16x128xf32>, vector<16x16x128xf32> -> vector<16x16x384xf32>
    %cst_14 = arith.constant 0.000000e+00 : f32
    %22 = vector.broadcast %cst_14 : f32 to vector<1x16x384xf32>
    %23 = tpu.concatenate %22, %21, %22 in 0 : vector<1x16x384xf32>, vector<16x16x384xf32>, vector<1x16x384xf32> -> vector<18x16x384xf32>
    %24 = vector.extract_strided_slice %23 {offsets = [0, 0, 0], sizes = [16, 16, 384], strides = [1, 1, 1]} : vector<18x16x384xf32> to vector<16x16x384xf32>
    %25 = vector.shape_cast %24 : vector<16x16x384xf32> to vector<256x384xf32>
    %26 = vector.extract_strided_slice %23 {offsets = [1, 0, 0], sizes = [16, 16, 384], strides = [1, 1, 1]} : vector<18x16x384xf32> to vector<16x16x384xf32>
    %27 = vector.shape_cast %26 : vector<16x16x384xf32> to vector<256x384xf32>
    %28 = vector.extract_strided_slice %23 {offsets = [2, 0, 0], sizes = [16, 16, 384], strides = [1, 1, 1]} : vector<18x16x384xf32> to vector<16x16x384xf32>
    %29 = vector.shape_cast %28 : vector<16x16x384xf32> to vector<256x384xf32>
    %30 = tpu.concatenate %25, %27, %29 in 1 : vector<256x384xf32>, vector<256x384xf32>, vector<256x384xf32> -> vector<256x1152xf32>
    %31 = arith.truncf %30 : vector<256x1152xf32> to vector<256x1152xbf16>
    %c0_15 = arith.constant 0 : index
    %c0_16 = arith.constant 0 : index
    %32 = vector.load %arg3[%c0_15, %c0_16] : memref<1152x128xbf16, #tpu.memory_space<vmem>>, vector<1152x128xbf16>
    %cst_17 = arith.constant dense<0.000000e+00> : vector<256x128xf32>
    %33 = tpu.matmul %31, %32, %cst_17 {dimension_numbers = #tpu.dot_dimension_numbers<[1], [0], [0], [1], [0, 0, 1, 1], [], []>} : vector<256x1152xbf16>, vector<1152x128xbf16>, vector<256x128xf32> -> vector<256x128xf32>
    %c0_18 = arith.constant 0 : index
    %c0_19 = arith.constant 0 : index
    %34 = vector.load %arg7[%c0_18, %c0_19] : memref<1x128xf32, #tpu.memory_space<vmem>>, vector<1x128xf32>
    %35 = vector.broadcast %34 : vector<1x128xf32> to vector<256x128xf32>
    %36 = arith.addf %33, %35 : vector<256x128xf32>
    %cst_20 = arith.constant 0.000000e+00 : f32
    %37 = vector.broadcast %cst_20 : f32 to vector<256x128xf32>
    %38 = arith.maximumf %36, %37 : vector<256x128xf32>
    %39 = arith.truncf %38 : vector<256x128xf32> to vector<256x128xbf16>
    %c0_21 = arith.constant 0 : index
    %c0_22 = arith.constant 0 : index
    %40 = vector.load %arg4[%c0_21, %c0_22] : memref<128x128xbf16, #tpu.memory_space<vmem>>, vector<128x128xbf16>
    %cst_23 = arith.constant dense<0.000000e+00> : vector<256x128xf32>
    %41 = tpu.matmul %39, %40, %cst_23 {dimension_numbers = #tpu.dot_dimension_numbers<[1], [0], [0], [1], [0, 0, 1, 1], [], []>} : vector<256x128xbf16>, vector<128x128xbf16>, vector<256x128xf32> -> vector<256x128xf32>
    %c0_24 = arith.constant 0 : index
    %c0_25 = arith.constant 0 : index
    %42 = vector.load %arg8[%c0_24, %c0_25] : memref<1x128xf32, #tpu.memory_space<vmem>>, vector<1x128xf32>
    %43 = vector.broadcast %42 : vector<1x128xf32> to vector<256x128xf32>
    %44 = arith.addf %41, %43 : vector<256x128xf32>
    %45 = arith.addf %44, %7 : vector<256x128xf32>
    %cst_26 = arith.constant 0.000000e+00 : f32
    %46 = vector.broadcast %cst_26 : f32 to vector<256x128xf32>
    %47 = arith.maximumf %45, %46 : vector<256x128xf32>
    %48 = vector.shape_cast %47 : vector<256x128xf32> to vector<16x16x128xf32>
    %c0_27 = arith.constant 0 : index
    %c0_28 = arith.constant 0 : index
    %c0_29 = arith.constant 0 : index
    %c0_30 = arith.constant 0 : index
    %49 = vector.load %arg10[%c0_27, %c0_28, %c0_29, %c0_30] : memref<1x16x16x128xf32, #tpu.memory_space<vmem>>, vector<1x16x16x128xf32>
    %50 = vector.shape_cast %49 : vector<1x16x16x128xf32> to vector<16x16x128xf32>
    %51 = vector.shape_cast %48 : vector<16x16x128xf32> to vector<1x16x16x128xf32>
    tpu.vector_store %arg10[%c0_27, %c0_28, %c0_29, %c0_30], %51 {strides = array<i32>} : memref<1x16x16x128xf32, #tpu.memory_space<vmem>>, vector<1x16x16x128xf32>,
    return
  }
  func.func @transform_0(%arg0: i32) -> (i32, i32, i32, i32) {
    %c0_i32 = arith.constant 0 : i32
    %c0_i32_0 = arith.constant 0 : i32
    %c0_i32_1 = arith.constant 0 : i32
    %c0_i32_2 = arith.constant 0 : i32
    return %arg0, %c0_i32, %c0_i32_0, %c0_i32_1 : i32, i32, i32, i32
  }
  func.func @transform_1(%arg0: i32) -> (i32, i32) {
    %c0_i32 = arith.constant 0 : i32
    %c0_i32_0 = arith.constant 0 : i32
    %c0_i32_1 = arith.constant 0 : i32
    return %c0_i32, %c0_i32_0 : i32, i32
  }
  func.func @transform_2(%arg0: i32) -> (i32, i32) {
    %c0_i32 = arith.constant 0 : i32
    %c0_i32_0 = arith.constant 0 : i32
    %c0_i32_1 = arith.constant 0 : i32
    return %c0_i32, %c0_i32_0 : i32, i32
  }
  func.func @transform_3(%arg0: i32) -> (i32, i32) {
    %c0_i32 = arith.constant 0 : i32
    %c0_i32_0 = arith.constant 0 : i32
    %c0_i32_1 = arith.constant 0 : i32
    return %c0_i32, %c0_i32_0 : i32, i32
  }
  func.func @transform_4(%arg0: i32) -> (i32, i32) {
    %c0_i32 = arith.constant 0 : i32
    %c0_i32_0 = arith.constant 0 : i32
    %c0_i32_1 = arith.constant 0 : i32
    return %c0_i32, %c0_i32_0 : i32, i32
  }
  func.func @transform_5(%arg0: i32) -> (i32, i32) {
    %c0_i32 = arith.constant 0 : i32
    %c0_i32_0 = arith.constant 0 : i32
    %c0_i32_1 = arith.constant 0 : i32
    return %c0_i32, %c0_i32_0 : i32, i32
  }
  func.func @transform_6(%arg0: i32) -> (i32, i32) {
    %c0_i32 = arith.constant 0 : i32
    %c0_i32_0 = arith.constant 0 : i32
    %c0_i32_1 = arith.constant 0 : i32
    return %c0_i32, %c0_i32_0 : i32, i32
  }
  func.func @transform_7(%arg0: i32) -> (i32, i32) {
    %c0_i32 = arith.constant 0 : i32
    %c0_i32_0 = arith.constant 0 : i32
    %c0_i32_1 = arith.constant 0 : i32
    return %c0_i32, %c0_i32_0 : i32, i32
  }
  func.func @transform_8(%arg0: i32) -> (i32, i32) {
    %c0_i32 = arith.constant 0 : i32
    %c0_i32_0 = arith.constant 0 : i32
    %c0_i32_1 = arith.constant 0 : i32
    return %c0_i32, %c0_i32_0 : i32, i32
  }
  func.func @transform_9(%arg0: i32) -> (i32, i32, i32, i32) {
    %c0_i32 = arith.constant 0 : i32
    %c0_i32_0 = arith.constant 0 : i32
    %c0_i32_1 = arith.constant 0 : i32
    %c0_i32_2 = arith.constant 0 : i32
    return %arg0, %c0_i32, %c0_i32_0, %c0_i32_1 : i32, i32, i32, i32
  }
}

</mosaic_0001>

<llo_original>
// kernel: tpu_custom_call.1
$region0: #{tpu_custom_call.1}
  #allocation0 [shape = 'u32[]', space=smem, size = 0x4, offset = 0x4, fixed_abs, tag = 'smem constant byte address 0x4 - core index']
  #allocation1 [shape = 'u32[144,128]{1,0:T(1,128)}', space=vmem, size = 0x12000, scoped, tag = 'internal scratch']
  %s0 = inlined_call_operand.hbm [shape: bf16[2,16,16,128], index: 0, kind: input, shape index: {}]
  %s1 = inlined_call_operand.hbm [shape: bf16[128,128], index: 1, kind: input, shape index: {}]
  %s2 = inlined_call_operand.hbm [shape: bf16[1152,128], index: 2, kind: input, shape index: {}]
  %s3 = inlined_call_operand.hbm [shape: bf16[128,128], index: 3, kind: input, shape index: {}]
  %s4 = inlined_call_operand.hbm [shape: bf16[128,128], index: 4, kind: input, shape index: {}]
  %s5 = inlined_call_operand.vmem [shape: f32[1,128], index: 5, kind: input, shape index: {}]
  %s6 = inlined_call_operand.vmem [shape: f32[1,128], index: 6, kind: input, shape index: {}]
  %s7 = inlined_call_operand.vmem [shape: f32[1,128], index: 7, kind: input, shape index: {}]
  %s8 = inlined_call_operand.vmem [shape: f32[1,128], index: 8, kind: input, shape index: {}]
  %s9 = inlined_call_operand.hbm [shape: f32[2,16,16,128], index: 9, kind: output, shape index: {}]
  %s10 = sld [smem:[#allocation0]]
  $region89: #{tpu_custom_call.1} parent=0
    _
  %s12 = ssub.s32 1, %s10
  %s13 = scalar_select 0, %s12, %s10
  $region1: #{tpu_custom_call.1} parent=0
    #allocation2 [shape = 'u8[131072]{0}', space=vmem, size = 0x20000, scoped, tag = 'input window, operand 0']
    #allocation3 [shape = 's32[2]{0}', space=sflag, size = 0x8, scoped, tag = 'scoped memory for tpu_custom_call.1']
    #allocation4 [shape = 's32[2]{0}', space=sflag, size = 0x8, scoped, tag = 'scoped memory for tpu_custom_call.1']
    #allocation5 [shape = 'u8[32768]{0}', space=vmem, size = 0x8000, scoped, tag = 'input window, operand 1, single buffered']
    #allocation6 [shape = 's32[1]{0}', space=sflag, size = 0x4, scoped, tag = 'scoped memory for tpu_custom_call.1']
    #allocation7 [shape = 'u8[294912]{0}', space=vmem, size = 0x48000, scoped, tag = 'input window, operand 2, single buffered']
    #allocation8 [shape = 'u8[32768]{0}', space=vmem, size = 0x8000, scoped, tag = 'input window, operand 3, single buffered']
    #allocation9 [shape = 's32[1]{0}', space=sflag, size = 0x4, scoped, tag = 'scoped memory for tpu_custom_call.1']
    #allocation10 [shape = 'u8[32768]{0}', space=vmem, size = 0x8000, scoped, tag = 'input window, operand 4, single buffered']
    #allocation11 [shape = 'u8[262144]{0}', space=vmem, size = 0x40000, scoped, tag = 'output window, operand 0']
    %14 = vsyncpa [#allocation3], 0
    %s15 = scalar_lea.sflag [#allocation3], 1
    %16 = vsyncpa %s15, 0
    %17 = vsyncpa [#allocation6], 0
    %18 = vsyncpa [#allocation9], 0
    %19 = vsyncpa [#allocation4], 0
    %s20 = scalar_lea.sflag [#allocation4], 1
    %21 = vsyncpa %s20, 0
    loop: start=0, step=1, limit=4
    $region2: #{tpu_custom_call.1} parent=1 // loop_pre_header
      _
    $region3: #{tpu_custom_call.1} parent=1 // loop_header
      %s23 = sphi 0, %s27
      %p24 = scmp.ge.s32.totalorder %s23, 4
      %s33 = sphi 0, %s35
      %s36 = sphi 0, %s33
      %s37 = sphi 0, %s36
      %s53 = sphi 0, %s37
      %s57 = sphi 0, %s57
      %s59 = sphi 0, %s57
      %s60 = sphi 0, %s59
      %s74 = sphi 0, %s60
      %s78 = sphi 0, %s78
      %s80 = sphi 0, %s78
      %s81 = sphi 0, %s80
      %s95 = sphi 0, %s81
      %s99 = sphi 0, %s99
      %s101 = sphi 0, %s99
      %s102 = sphi 0, %s101
      %s116 = sphi 0, %s102
      %s120 = sphi 0, %s120
      %s122 = sphi 0, %s120
      %s123 = sphi 0, %s122
      %s137 = sphi 0, %s123
      %s141 = sphi 0, %s141
      %s143 = sphi 0, %s141
      %s144 = sphi 0, %s143
      %s158 = sphi 0, %s144
      %s162 = sphi 0, %s162
      %s164 = sphi 0, %s162
      %s165 = sphi 0, %s164
      %s179 = sphi 0, %s165
      %s183 = sphi 0, %s183
      %s185 = sphi 0, %s183
      %s186 = sphi 0, %s185
      %s200 = sphi 0, %s186
      %s204 = sphi 0, %s204
      %s206 = sphi 0, %s204
      %s207 = sphi 0, %s206
      %s221 = sphi 0, %s207
      %s227 = sphi 0, %s229
      %s230 = sphi 0, %s227
      %s231 = sphi 0, %s230
      %s247 = sphi 0, %s231
    $region4: #{tpu_custom_call.1} parent=1 // loop_header_branch
      %26 = sbr.rel (%p24) target = $region8
    $region5: #{tpu_custom_call.1} parent=1 // loop_body
      %s28 = ssub.s32 %s23, 1
      %s29 = ssub.s32 %s23, 2
      %s30 = sadd.s32 %s23, 1
      %s31 = ssub.s32 %s23, %s30
      %p32 = scmp.eq.s32.totalorder %s31, 0
      %s34 = sadd.s32 %s33, 1
      %s35 = scalar_select %p32, %s33, %s34
      %p38 = pneg %p32
      %p39 = scmp.eq.s32.totalorder %s23, 1
      %p40 = por %p38, %p39
      %p41 = scmp.ne.s32.totalorder %s33, %s36
      %p42 = scmp.eq.s32.totalorder %s23, 0
      %p43 = por %p41, %p42
      %p44 = scmp.ne.s32.totalorder %s33, %s36
      %p45 = scmp.eq.s32.totalorder %s28, 1
      %p46 = por %p44, %p45
      %p47 = scmp.ne.s32.totalorder %s36, %s37
      %p48 = scmp.eq.s32.totalorder %s28, 0
      %p49 = por %p47, %p48
      %p50 = scmp.ne.s32.totalorder %s36, %s37
      %p51 = scmp.eq.s32.totalorder %s29, 1
      %p52 = por %p50, %p51
      %p54 = scmp.ne.s32.totalorder %s37, %s53
      %p55 = scmp.eq.s32.totalorder %s29, 0
      %p56 = por %p54, %p55
      %s58 = sadd.s32 %s57, 1
      %p61 = scmp.eq.s32.totalorder %s23, 1
      %p62 = scmp.ne.s32.totalorder %s57, %s59
      %p63 = scmp.eq.s32.totalorder %s23, 0
      %p64 = por %p62, %p63
      %p65 = scmp.ne.s32.totalorder %s57, %s59
      %p66 = scmp.eq.s32.totalorder %s28, 1
      %p67 = por %p65, %p66
      %p68 = scmp.ne.s32.totalorder %s59, %s60
      %p69 = scmp.eq.s32.totalorder %s28, 0
      %p70 = por %p68, %p69
      %p71 = scmp.ne.s32.totalorder %s59, %s60
      %p72 = scmp.eq.s32.totalorder %s29, 1
      %p73 = por %p71, %p72
      %p75 = scmp.ne.s32.totalorder %s60, %s74
      %p76 = scmp.eq.s32.totalorder %s29, 0
      %p77 = por %p75, %p76
      %s79 = sadd.s32 %s78, 1
      %p82 = scmp.eq.s32.totalorder %s23, 1
      %p83 = scmp.ne.s32.totalorder %s78, %s80
      %p84 = scmp.eq.s32.totalorder %s23, 0
      %p85 = por %p83, %p84
      %p86 = scmp.ne.s32.totalorder %s78, %s80
      %p87 = scmp.eq.s32.totalorder %s28, 1
      %p88 = por %p86, %p87
      %p89 = scmp.ne.s32.totalorder %s80, %s81
      %p90 = scmp.eq.s32.totalorder %s28, 0
      %p91 = por %p89, %p90
      %p92 = scmp.ne.s32.totalorder %s80, %s81
      %p93 = scmp.eq.s32.totalorder %s29, 1
      %p94 = por %p92, %p93
      %p96 = scmp.ne.s32.totalorder %s81, %s95
      %p97 = scmp.eq.s32.totalorder %s29, 0
      %p98 = por %p96, %p97
      %s100 = sadd.s32 %s99, 1
      %p103 = scmp.eq.s32.totalorder %s23, 1
      %p104 = scmp.ne.s32.totalorder %s99, %s101
      %p105 = scmp.eq.s32.totalorder %s23, 0
      %p106 = por %p104, %p105
      %p107 = scmp.ne.s32.totalorder %s99, %s101
      %p108 = scmp.eq.s32.totalorder %s28, 1
      %p109 = por %p107, %p108
      %p110 = scmp.ne.s32.totalorder %s101, %s102
      %p111 = scmp.eq.s32.totalorder %s28, 0
      %p112 = por %p110, %p111
      %p113 = scmp.ne.s32.totalorder %s101, %s102
      %p114 = scmp.eq.s32.totalorder %s29, 1
      %p115 = por %p113, %p114
      %p117 = scmp.ne.s32.totalorder %s102, %s116
      %p118 = scmp.eq.s32.totalorder %s29, 0
      %p119 = por %p117, %p118
      %s121 = sadd.s32 %s120, 1
      %p124 = scmp.eq.s32.totalorder %s23, 1
      %p125 = scmp.ne.s32.totalorder %s120, %s122
      %p126 = scmp.eq.s32.totalorder %s23, 0
      %p127 = por %p125, %p126
      %p128 = scmp.ne.s32.totalorder %s120, %s122
      %p129 = scmp.eq.s32.totalorder %s28, 1
      %p130 = por %p128, %p129
      %p131 = scmp.ne.s32.totalorder %s122, %s123
      %p132 = scmp.eq.s32.totalorder %s28, 0
      %p133 = por %p131, %p132
      %p134 = scmp.ne.s32.totalorder %s122, %s123
      %p135 = scmp.eq.s32.totalorder %s29, 1
      %p136 = por %p134, %p135
      %p138 = scmp.ne.s32.totalorder %s123, %s137
      %p139 = scmp.eq.s32.totalorder %s29, 0
      %p140 = por %p138, %p139
      %s142 = sadd.s32 %s141, 1
      %p145 = scmp.eq.s32.totalorder %s23, 1
      %p146 = scmp.ne.s32.totalorder %s141, %s143
      %p147 = scmp.eq.s32.totalorder %s23, 0
      %p148 = por %p146, %p147
      %p149 = scmp.ne.s32.totalorder %s141, %s143
      %p150 = scmp.eq.s32.totalorder %s28, 1
      %p151 = por %p149, %p150
      %p152 = scmp.ne.s32.totalorder %s143, %s144
      %p153 = scmp.eq.s32.totalorder %s28, 0
      %p154 = por %p152, %p153
      %p155 = scmp.ne.s32.totalorder %s143, %s144
      %p156 = scmp.eq.s32.totalorder %s29, 1
      %p157 = por %p155, %p156
      %p159 = scmp.ne.s32.totalorder %s144, %s158
      %p160 = scmp.eq.s32.totalorder %s29, 0
      %p161 = por %p159, %p160
      %s163 = sadd.s32 %s162, 1
      %p166 = scmp.eq.s32.totalorder %s23, 1
      %p167 = scmp.ne.s32.totalorder %s162, %s164
      %p168 = scmp.eq.s32.totalorder %s23, 0
      %p169 = por %p167, %p168
      %p170 = scmp.ne.s32.totalorder %s162, %s164
      %p171 = scmp.eq.s32.totalorder %s28, 1
      %p172 = por %p170, %p171
      %p173 = scmp.ne.s32.totalorder %s164, %s165
      %p174 = scmp.eq.s32.totalorder %s28, 0
      %p175 = por %p173, %p174
      %p176 = scmp.ne.s32.totalorder %s164, %s165
      %p177 = scmp.eq.s32.totalorder %s29, 1
      %p178 = por %p176, %p177
      %p180 = scmp.ne.s32.totalorder %s165, %s179
      %p181 = scmp.eq.s32.totalorder %s29, 0
      %p182 = por %p180, %p181
      %s184 = sadd.s32 %s183, 1
      %p187 = scmp.eq.s32.totalorder %s23, 1
      %p188 = scmp.ne.s32.totalorder %s183, %s185
      %p189 = scmp.eq.s32.totalorder %s23, 0
      %p190 = por %p188, %p189
      %p191 = scmp.ne.s32.totalorder %s183, %s185
      %p192 = scmp.eq.s32.totalorder %s28, 1
      %p193 = por %p191, %p192
      %p194 = scmp.ne.s32.totalorder %s185, %s186
      %p195 = scmp.eq.s32.totalorder %s28, 0
      %p196 = por %p194, %p195
      %p197 = scmp.ne.s32.totalorder %s185, %s186
      %p198 = scmp.eq.s32.totalorder %s29, 1
      %p199 = por %p197, %p198
      %p201 = scmp.ne.s32.totalorder %s186, %s200
      %p202 = scmp.eq.s32.totalorder %s29, 0
      %p203 = por %p201, %p202
      %s205 = sadd.s32 %s204, 1
      %p208 = scmp.eq.s32.totalorder %s23, 1
      %p209 = scmp.ne.s32.totalorder %s204, %s206
      %p210 = scmp.eq.s32.totalorder %s23, 0
      %p211 = por %p209, %p210
      %p212 = scmp.ne.s32.totalorder %s204, %s206
      %p213 = scmp.eq.s32.totalorder %s28, 1
      %p214 = por %p212, %p213
      %p215 = scmp.ne.s32.totalorder %s206, %s207
      %p216 = scmp.eq.s32.totalorder %s28, 0
      %p217 = por %p215, %p216
      %p218 = scmp.ne.s32.totalorder %s206, %s207
      %p219 = scmp.eq.s32.totalorder %s29, 1
      %p220 = por %p218, %p219
      %p222 = scmp.ne.s32.totalorder %s207, %s221
      %p223 = scmp.eq.s32.totalorder %s29, 0
      %p224 = por %p222, %p223
      %s225 = ssub.s32 %s23, %s30
      %p226 = scmp.eq.s32.totalorder %s225, 0
      %s228 = sadd.s32 %s227, 1
      %s229 = scalar_select %p226, %s227, %s228
      %p232 = pneg %p226
      %p233 = scmp.eq.s32.totalorder %s23, 1
      %p234 = por %p232, %p233
      %p235 = scmp.ne.s32.totalorder %s227, %s230
      %p236 = scmp.eq.s32.totalorder %s23, 0
      %p237 = por %p235, %p236
      %p238 = scmp.ne.s32.totalorder %s227, %s230
      %p239 = scmp.eq.s32.totalorder %s28, 1
      %p240 = por %p238, %p239
      %p241 = scmp.ne.s32.totalorder %s230, %s231
      %p242 = scmp.eq.s32.totalorder %s28, 0
      %p243 = por %p241, %p242
      %p244 = scmp.ne.s32.totalorder %s230, %s231
      %p245 = scmp.eq.s32.totalorder %s29, 1
      %p246 = por %p244, %p245
      %p248 = scmp.ne.s32.totalorder %s231, %s247
      %p249 = scmp.eq.s32.totalorder %s29, 0
      %p250 = por %p248, %p249
      %p251 = scmp.le.s32.totalorder 1, %s23
      %p252 = scmp.lt.s32.totalorder %s23, 3
      %p253 = pnand %p251, %p252
      %p254 = pneg %p253
      // Predicated region
      $region9: #{tpu_custom_call.1} parent=5 // pred_check
        _
      $region10: #{tpu_custom_call.1} parent=5 // pred_check_branch
        %256 = sbr.rel (%p253) target = $region12
      $region11: #{tpu_custom_call.1} parent=5 // pred_region
        %s257 = ssub.s32 %s23, 1
        // Predicated region
        $region13: #{tpu_custom_call.1} parent=11 // pred_check
          %p258 = pneg %p70
        $region14: #{tpu_custom_call.1} parent=11 // pred_check_branch
          %260 = sbr.rel (%p258) target = $region16
        $region15: #{tpu_custom_call.1} parent=11 // pred_region
          %s262 = ssub.s32 1024, 1024
          %263 = vsyncadd [#allocation6], %s262
          %s264 = sshll.u32 [#allocation5], 4
          %s265 = int_to_ptr.vmem [resolvable:$true] %s264
          %270 = dma.hbm_to_vmem [thread:$0]  %s1, 1024, %s265, [#allocation6], 64, 64, 4
        $region16: #{tpu_custom_call.1} parent=11 // pred_fallthru
          _
        // Predicated region
        $region17: #{tpu_custom_call.1} parent=11 // pred_check
          %p271 = pneg %p91
        $region18: #{tpu_custom_call.1} parent=11 // pred_check_branch
          %273 = sbr.rel (%p271) target = $region20
        $region19: #{tpu_custom_call.1} parent=11 // pred_region
          %s275 = ssub.s32 9216, 9216
          %276 = vsyncadd [#allocation6], %s275
          %s277 = sshll.u32 [#allocation7], 4
          %s278 = int_to_ptr.vmem [resolvable:$true] %s277
          %283 = dma.hbm_to_vmem [thread:$0]  %s2, 9216, %s278, [#allocation6], 64, 64, 4
        $region20: #{tpu_custom_call.1} parent=11 // pred_fallthru
          _
        // Predicated region
        $region21: #{tpu_custom_call.1} parent=11 // pred_check
          %p284 = pneg %p112
        $region22: #{tpu_custom_call.1} parent=11 // pred_check_branch
          %286 = sbr.rel (%p284) target = $region24
        $region23: #{tpu_custom_call.1} parent=11 // pred_region
          %s288 = ssub.s32 1024, 1024
          %289 = vsyncadd [#allocation9], %s288
          %s290 = sshll.u32 [#allocation8], 4
          %s291 = int_to_ptr.vmem [resolvable:$true] %s290
          %296 = dma.hbm_to_vmem [thread:$0]  %s3, 1024, %s291, [#allocation9], 64, 64, 4
        $region24: #{tpu_custom_call.1} parent=11 // pred_fallthru
          _
        // Predicated region
        $region25: #{tpu_custom_call.1} parent=11 // pred_check
          %p297 = pneg %p133
        $region26: #{tpu_custom_call.1} parent=11 // pred_check_branch
          %299 = sbr.rel (%p297) target = $region28
        $region27: #{tpu_custom_call.1} parent=11 // pred_region
          %s301 = ssub.s32 1024, 1024
          %302 = vsyncadd [#allocation9], %s301
          %s303 = sshll.u32 [#allocation10], 4
          %s304 = int_to_ptr.vmem [resolvable:$true] %s303
          %309 = dma.hbm_to_vmem [thread:$0]  %s4, 1024, %s304, [#allocation9], 64, 64, 4
        $region28: #{tpu_custom_call.1} parent=11 // pred_fallthru
          _
        // Predicated region
        $region29: #{tpu_custom_call.1} parent=11 // pred_check
          %p310 = pneg %p154
        $region30: #{tpu_custom_call.1} parent=11 // pred_check_branch
          %312 = sbr.rel (%p310) target = $region32
        $region31: #{tpu_custom_call.1} parent=11 // pred_region
          _
        $region32: #{tpu_custom_call.1} parent=11 // pred_fallthru
          _
        // Predicated region
        $region33: #{tpu_custom_call.1} parent=11 // pred_check
          %p313 = pneg %p175
        $region34: #{tpu_custom_call.1} parent=11 // pred_check_branch
          %315 = sbr.rel (%p313) target = $region36
        $region35: #{tpu_custom_call.1} parent=11 // pred_region
          _
        $region36: #{tpu_custom_call.1} parent=11 // pred_fallthru
          _
        // Predicated region
        $region37: #{tpu_custom_call.1} parent=11 // pred_check
          %p316 = pneg %p196
        $region38: #{tpu_custom_call.1} parent=11 // pred_check_branch
          %318 = sbr.rel (%p316) target = $region40
        $region39: #{tpu_custom_call.1} parent=11 // pred_region
          _
        $region40: #{tpu_custom_call.1} parent=11 // pred_fallthru
          _
        // Predicated region
        $region41: #{tpu_custom_call.1} parent=11 // pred_check
          %p319 = pneg %p217
        $region42: #{tpu_custom_call.1} parent=11 // pred_check_branch
          %321 = sbr.rel (%p319) target = $region44
        $region43: #{tpu_custom_call.1} parent=11 // pred_region
          _
        $region44: #{tpu_custom_call.1} parent=11 // pred_fallthru
          _
      $region12: #{tpu_custom_call.1} parent=5 // pred_fallthru
        _
      %p322 = scmp.lt.s32.totalorder %s23, 2
      // Predicated region
      $region45: #{tpu_custom_call.1} parent=5 // pred_check
        %p323 = pneg %p322
      $region46: #{tpu_custom_call.1} parent=5 // pred_check_branch
        %325 = sbr.rel (%p323) target = $region48
      $region47: #{tpu_custom_call.1} parent=5 // pred_region
        // Predicated region
        $region49: #{tpu_custom_call.1} parent=47 // pred_check
          %p326 = pneg %p43
        $region50: #{tpu_custom_call.1} parent=47 // pred_check_branch
          %328 = sbr.rel (%p326) target = $region52
        $region51: #{tpu_custom_call.1} parent=47 // pred_region
          %s329 = sand.u32 %s33, 1
          %s330 = scalar_lea.sflag [#allocation3], %s329
          %s331 = sand.u32 %s33, 1
          %s332 = smul.addr %s331, 128
          %s333 = scalar_lea.vmem [#allocation2], %s332
          %s335 = ssub.s32 2048, 2048
          %336 = vsyncadd %s330, %s335
          %s337 = smul.addr %s23, 32
          %s338 = smul.addr %s337, 64
          %s339 = scalar_lea.hbm %s0, %s338
          %s340 = sshll.u32 %s333, 4
          %s341 = int_to_ptr.vmem [resolvable:$true] %s340
          %346 = dma.hbm_to_vmem [thread:$0]  %s339, 2048, %s341, %s330, 64, 64, 4
        $region52: #{tpu_custom_call.1} parent=47 // pred_fallthru
          _
      $region48: #{tpu_custom_call.1} parent=5 // pred_fallthru
        _
      %p347 = scmp.le.s32.totalorder 1, %s23
      %p348 = scmp.lt.s32.totalorder %s23, 3
      %p349 = pnand %p347, %p348
      %p350 = pneg %p349
      // Predicated region
      $region53: #{tpu_custom_call.1} parent=5 // pred_check
        _
      $region54: #{tpu_custom_call.1} parent=5 // pred_check_branch
        %352 = sbr.rel (%p349) target = $region56
      $region55: #{tpu_custom_call.1} parent=5 // pred_region
        %s353 = ssub.s32 %s23, 1
        %s354 = sand.u32 %s36, 1
        %s355 = scalar_lea.sflag [#allocation3], %s354
        %s356 = sand.u32 %s36, 1
        %s357 = smul.addr %s356, 128
        %s358 = scalar_lea.vmem [#allocation2], %s357
        // Predicated region
        $region57: #{tpu_custom_call.1} parent=55 // pred_check
          %p359 = pneg %p49
        $region58: #{tpu_custom_call.1} parent=55 // pred_check_branch
          %361 = sbr.rel (%p359) target = $region60
        $region59: #{tpu_custom_call.1} parent=55 // pred_region
          %362 = dma.done %s355, 2048
        $region60: #{tpu_custom_call.1} parent=55 // pred_fallthru
          _
        // Predicated region
        $region61: #{tpu_custom_call.1} parent=55 // pred_check
          %p363 = pneg %p70
        $region62: #{tpu_custom_call.1} parent=55 // pred_check_branch
          %365 = sbr.rel (%p363) target = $region64
        $region63: #{tpu_custom_call.1} parent=55 // pred_region
          %366 = dma.done [#allocation6], 1024
        $region64: #{tpu_custom_call.1} parent=55 // pred_fallthru
          _
        // Predicated region
        $region65: #{tpu_custom_call.1} parent=55 // pred_check
          %p367 = pneg %p91
        $region66: #{tpu_custom_call.1} parent=55 // pred_check_branch
          %369 = sbr.rel (%p367) target = $region68
        $region67: #{tpu_custom_call.1} parent=55 // pred_region
          %370 = dma.done [#allocation6], 9216
        $region68: #{tpu_custom_call.1} parent=55 // pred_fallthru
          _
        // Predicated region
        $region69: #{tpu_custom_call.1} parent=55 // pred_check
          %p371 = pneg %p112
        $region70: #{tpu_custom_call.1} parent=55 // pred_check_branch
          %373 = sbr.rel (%p371) target = $region72
        $region71: #{tpu_custom_call.1} parent=55 // pred_region
          %374 = dma.done [#allocation9], 1024
        $region72: #{tpu_custom_call.1} parent=55 // pred_fallthru
          _
        // Predicated region
        $region73: #{tpu_custom_call.1} parent=55 // pred_check
          %p375 = pneg %p133
        $region74: #{tpu_custom_call.1} parent=55 // pred_check_branch
          %377 = sbr.rel (%p375) target = $region76
        $region75: #{tpu_custom_call.1} parent=55 // pred_region
          %378 = dma.done [#allocation9], 1024
        $region76: #{tpu_custom_call.1} parent=55 // pred_fallthru
          _
        %s379 = sand.u32 %s36, 1
        %s380 = scalar_lea.sflag [#allocation3], %s379
        %s381 = sand.u32 %s36, 1
        %s382 = smul.addr %s381, 128
        %s383 = scalar_lea.vmem [#allocation2], %s382
        %p384 = pneg %p49
        %p385 = pneg %p46
        %p386 = pneg %p70
        %p387 = pneg %p67
        %p388 = pneg %p91
        %p389 = pneg %p88
        %p390 = pneg %p112
        %p391 = pneg %p109
        %p392 = pneg %p133
        %p393 = pneg %p130
        %p394 = pneg %p154
        %p395 = pneg %p151
        %p396 = pneg %p175
        %p397 = pneg %p172
        %p398 = pneg %p196
        %p399 = pneg %p193
        %p400 = pneg %p217
        %p401 = pneg %p214
        %p402 = pneg %p243
        %p403 = pneg %p240
        %s404 = sand.u32 %s230, 1
        %s405 = scalar_lea.sflag [#allocation4], %s404
        %s406 = sand.u32 %s230, 1
        %s407 = smul.addr %s406, 256
        %s408 = scalar_lea.vmem [#allocation11], %s407
        %v410 = vld [vmem:[%s358] sm:$0xf]
        %v411 = vld [vmem:[%s358 + $0x4] sm:$0xf]
        %v412 = vld [vmem:[%s358 + $0x8] sm:$0xf]
        %v413 = vld [vmem:[%s358 + $0xc] sm:$0xf]
        %v414 = vld [vmem:[%s358 + $0x10] sm:$0xf]
        %v415 = vld [vmem:[%s358 + $0x14] sm:$0xf]
        %v416 = vld [vmem:[%s358 + $0x18] sm:$0xf]
        %v417 = vld [vmem:[%s358 + $0x1c] sm:$0xf]
        %v418 = vld [vmem:[%s358 + $0x20] sm:$0xf]
        %v419 = vld [vmem:[%s358 + $0x24] sm:$0xf]
        %v420 = vld [vmem:[%s358 + $0x28] sm:$0xf]
        %v421 = vld [vmem:[%s358 + $0x2c] sm:$0xf]
        %v422 = vld [vmem:[%s358 + $0x30] sm:$0xf]
        %v423 = vld [vmem:[%s358 + $0x34] sm:$0xf]
        %v424 = vld [vmem:[%s358 + $0x38] sm:$0xf]
        %v425 = vld [vmem:[%s358 + $0x3c] sm:$0xf]
        %v426 = vld [vmem:[%s358 + $0x40] sm:$0xf]
        %v427 = vld [vmem:[%s358 + $0x44] sm:$0xf]
        %v428 = vld [vmem:[%s358 + $0x48] sm:$0xf]
        %v429 = vld [vmem:[%s358 + $0x4c] sm:$0xf]
        %v430 = vld [vmem:[%s358 + $0x50] sm:$0xf]
        %v431 = vld [vmem:[%s358 + $0x54] sm:$0xf]
        %v432 = vld [vmem:[%s358 + $0x58] sm:$0xf]
        %v433 = vld [vmem:[%s358 + $0x5c] sm:$0xf]
        %v434 = vld [vmem:[%s358 + $0x60] sm:$0xf]
        %v435 = vld [vmem:[%s358 + $0x64] sm:$0xf]
        %v436 = vld [vmem:[%s358 + $0x68] sm:$0xf]
        %v437 = vld [vmem:[%s358 + $0x6c] sm:$0xf]
        %v438 = vld [vmem:[%s358 + $0x70] sm:$0xf]
        %v439 = vld [vmem:[%s358 + $0x74] sm:$0xf]
        %v440 = vld [vmem:[%s358 + $0x78] sm:$0xf]
        %v441 = vld [vmem:[%s358 + $0x7c] sm:$0xf]
        %v442 = vld [vmem:[#allocation10] sm:$0xf]
        %v443 = vld [vmem:[#allocation10 + $0x4] sm:$0xf]
        %v444 = vld [vmem:[#allocation10 + $0x8] sm:$0xf]
        %v445 = vld [vmem:[#allocation10 + $0xc] sm:$0xf]
        %v446 = vld [vmem:[#allocation10 + $0x10] sm:$0xf]
        %v447 = vld [vmem:[#allocation10 + $0x14] sm:$0xf]
        %v448 = vld [vmem:[#allocation10 + $0x18] sm:$0xf]
        %v449 = vld [vmem:[#allocation10 + $0x1c] sm:$0xf]
        %v450 = vld [vmem:[#allocation10 + $0x20] sm:$0xf]
        %v451 = vld [vmem:[#allocation10 + $0x24] sm:$0xf]
        %v452 = vld [vmem:[#allocation10 + $0x28] sm:$0xf]
        %v453 = vld [vmem:[#allocation10 + $0x2c] sm:$0xf]
        %v454 = vld [vmem:[#allocation10 + $0x30] sm:$0xf]
        %v455 = vld [vmem:[#allocation10 + $0x34] sm:$0xf]
        %v456 = vld [vmem:[#allocation10 + $0x38] sm:$0xf]
        %v457 = vld [vmem:[#allocation10 + $0x3c] sm:$0xf]
        %v458 = vld [vmem:[%s8] sm:$0x1]
        %v460 = vlaneseq
        %v461 = vshrl.u32 %v460, 7
        %v462 = vsub.s32 0, %v461
        %v463 = vrot.slane %v458, %v462
        %v497 = vunpack.c.l.b16 %v410
        %v498 = vunpack.c.l.b16 %v411
        %v499 = vunpack.c.l.b16 %v412
        %v500 = vunpack.c.l.b16 %v413
        %v501 = vunpack.c.l.b16 %v414
        %v502 = vunpack.c.l.b16 %v415
        %v503 = vunpack.c.l.b16 %v416
        %v504 = vunpack.c.l.b16 %v417
        %v505 = vunpack.c.l.b16 %v418
        %v506 = vunpack.c.l.b16 %v419
        %v507 = vunpack.c.l.b16 %v420
        %v508 = vunpack.c.l.b16 %v421
        %v509 = vunpack.c.l.b16 %v422
        %v510 = vunpack.c.l.b16 %v423
        %v511 = vunpack.c.l.b16 %v424
        %v512 = vunpack.c.l.b16 %v425
        %v513 = vunpack.c.l.b16 %v426
        %v514 = vunpack.c.l.b16 %v427
        %v515 = vunpack.c.l.b16 %v428
        %v516 = vunpack.c.l.b16 %v429
        %v517 = vunpack.c.l.b16 %v430
        %v518 = vunpack.c.l.b16 %v431
        %v519 = vunpack.c.l.b16 %v432
        %v520 = vunpack.c.l.b16 %v433
        %v521 = vunpack.c.l.b16 %v434
        %v522 = vunpack.c.l.b16 %v435
        %v523 = vunpack.c.l.b16 %v436
        %v524 = vunpack.c.l.b16 %v437
        %v525 = vunpack.c.l.b16 %v438
        %v526 = vunpack.c.l.b16 %v439
        %v527 = vunpack.c.l.b16 %v440
        %v528 = vunpack.c.l.b16 %v441
        %v529 = vpack.c.b16 %v498, %v497
        %v530 = vpack.c.b16 %v500, %v499
        %v531 = vpack.c.b16 %v502, %v501
        %v532 = vpack.c.b16 %v504, %v503
        %v533 = vpack.c.b16 %v506, %v505
        %v534 = vpack.c.b16 %v508, %v507
        %v535 = vpack.c.b16 %v510, %v509
        %v536 = vpack.c.b16 %v512, %v511
        %v537 = vpack.c.b16 %v514, %v513
        %v538 = vpack.c.b16 %v516, %v515
        %v539 = vpack.c.b16 %v518, %v517
        %v540 = vpack.c.b16 %v520, %v519
        %v541 = vpack.c.b16 %v522, %v521
        %v542 = vpack.c.b16 %v524, %v523
        %v543 = vpack.c.b16 %v526, %v525
        %v544 = vpack.c.b16 %v528, %v527
        %v577 = vunpack.c.l.b16 %v442
        %v578 = vunpack.c.l.b16 %v443
        %v579 = vunpack.c.l.b16 %v444
        %v580 = vunpack.c.l.b16 %v445
        %v581 = vunpack.c.l.b16 %v446
        %v582 = vunpack.c.l.b16 %v447
        %v583 = vunpack.c.l.b16 %v448
        %v584 = vunpack.c.l.b16 %v449
        %v585 = vunpack.c.l.b16 %v450
        %v586 = vunpack.c.l.b16 %v451
        %v587 = vunpack.c.l.b16 %v452
        %v588 = vunpack.c.l.b16 %v453
        %v589 = vunpack.c.l.b16 %v454
        %v590 = vunpack.c.l.b16 %v455
        %v591 = vunpack.c.l.b16 %v456
        %v592 = vunpack.c.l.b16 %v457
        %v593 = vpack.c.b16 %v578, %v577
        %v594 = vpack.c.b16 %v580, %v579
        %v595 = vpack.c.b16 %v582, %v581
        %v596 = vpack.c.b16 %v584, %v583
        %v597 = vpack.c.b16 %v586, %v585
        %v598 = vpack.c.b16 %v588, %v587
        %v599 = vpack.c.b16 %v590, %v589
        %v600 = vpack.c.b16 %v592, %v591
        %609 = vmatprep.subr.bf16.mxu0 0
        %610 = vmatpush1.bf16.msra.mxu0 %v600
        %611 = vmatprep.subr.bf16.mxu0 0
        %612 = vmatpush1.bf16.msra.mxu0 %v599
        %613 = vmatprep.subr.bf16.mxu0 0
        %614 = vmatpush1.bf16.msra.mxu0 %v598
        %615 = vmatprep.subr.bf16.mxu0 0
        %616 = vmatpush1.bf16.msra.mxu0 %v597
        %617 = vmatprep.subr.bf16.mxu0 0
        %618 = vmatpush1.bf16.msra.mxu0 %v596
        %619 = vmatprep.subr.bf16.mxu0 0
        %620 = vmatpush1.bf16.msra.mxu0 %v595
        %621 = vmatprep.subr.bf16.mxu0 0
        %622 = vmatpush1.bf16.msra.mxu0 %v594
        %623 = vmatprep.subr.bf16.mxu0 0
        %624 = vmatpush1.bf16.msra.mxu0 %v593
        %625 = vmatprep.subr.bf16.mxu0 0
        %626 = vmatpush2.bf16.msra.mxu0 0
        %627 = vmatprep.subr.bf16.mxu0 0
        %628 = vmatpush2.bf16.msra.mxu0 0
        %629 = vmatprep.subr.bf16.mxu0 0
        %630 = vmatpush2.bf16.msra.mxu0 0
        %631 = vmatprep.subr.bf16.mxu0 0
        %632 = vmatpush2.bf16.msra.mxu0 0
        %633 = vmatprep.subr.bf16.mxu0 0
        %634 = vmatpush2.bf16.msra.mxu0 0
        %635 = vmatprep.subr.bf16.mxu0 0
        %636 = vmatpush2.bf16.msra.mxu0 0
        %637 = vmatprep.subr.bf16.mxu0 0
        %638 = vmatpush2.bf16.msra.mxu0 0
        %639 = vmatprep.subr.bf16.mxu0 0
        %640 = vmatpush2.bf16.msra.mxu0 0
        %641 = vmatprep.mubr.bf16.mxu0 0
        %642 = vmatmul.mubr.bf16.gmra.mxu0 %v529
        %v643 = vpop.f32.mrf.mxu0
        %v644 = vadd.f32 %v463, %v643
        %v645 = vpop.f32.mrf.mxu0
        %v646 = vpop.f32.mrf.mxu0
        %v647 = vadd.f32 %v463, %v646
        %v648 = vpop.f32.mrf.mxu0
        %649 = vmatprep.mubr.bf16.mxu0 0
        %650 = vmatmul.mubr.bf16.gmra.mxu0 %v530
        %v651 = vpop.f32.mrf.mxu0
        %v652 = vadd.f32 %v463, %v651
        %v653 = vpop.f32.mrf.mxu0
        %v654 = vpop.f32.mrf.mxu0
        %v655 = vadd.f32 %v463, %v654
        %v656 = vpop.f32.mrf.mxu0
        %657 = vmatprep.mubr.bf16.mxu0 0
        %658 = vmatmul.mubr.bf16.gmra.mxu0 %v531
        %v659 = vpop.f32.mrf.mxu0
        %v660 = vadd.f32 %v463, %v659
        %v661 = vpop.f32.mrf.mxu0
        %v662 = vpop.f32.mrf.mxu0
        %v663 = vadd.f32 %v463, %v662
        %v664 = vpop.f32.mrf.mxu0
        %665 = vmatprep.mubr.bf16.mxu0 0
        %666 = vmatmul.mubr.bf16.gmra.mxu0 %v532
        %v667 = vpop.f32.mrf.mxu0
        %v668 = vadd.f32 %v463, %v667
        %v669 = vpop.f32.mrf.mxu0
        %v670 = vpop.f32.mrf.mxu0
        %v671 = vadd.f32 %v463, %v670
        %v672 = vpop.f32.mrf.mxu0
        %673 = vmatprep.mubr.bf16.mxu0 0
        %674 = vmatmul.mubr.bf16.gmra.mxu0 %v533
        %v675 = vpop.f32.mrf.mxu0
        %v676 = vadd.f32 %v463, %v675
        %v677 = vpop.f32.mrf.mxu0
        %v678 = vpop.f32.mrf.mxu0
        %v679 = vadd.f32 %v463, %v678
        %v680 = vpop.f32.mrf.mxu0
        %681 = vmatprep.mubr.bf16.mxu0 0
        %682 = vmatmul.mubr.bf16.gmra.mxu0 %v534
        %v683 = vpop.f32.mrf.mxu0
        %v684 = vadd.f32 %v463, %v683
        %v685 = vpop.f32.mrf.mxu0
        %v686 = vpop.f32.mrf.mxu0
        %v687 = vadd.f32 %v463, %v686
        %v688 = vpop.f32.mrf.mxu0
        %689 = vmatprep.mubr.bf16.mxu0 0
        %690 = vmatmul.mubr.bf16.gmra.mxu0 %v535
        %v691 = vpop.f32.mrf.mxu0
        %v692 = vadd.f32 %v463, %v691
        %v693 = vpop.f32.mrf.mxu0
        %v694 = vpop.f32.mrf.mxu0
        %v695 = vadd.f32 %v463, %v694
        %v696 = vpop.f32.mrf.mxu0
        %697 = vmatprep.mubr.bf16.mxu0 0
        %698 = vmatmul.mubr.bf16.gmra.mxu0 %v536
        %v699 = vpop.f32.mrf.mxu0
        %v700 = vadd.f32 %v463, %v699
        %v701 = vpop.f32.mrf.mxu0
        %v702 = vpop.f32.mrf.mxu0
        %v703 = vadd.f32 %v463, %v702
        %v704 = vpop.f32.mrf.mxu0
        %705 = vmatprep.mubr.bf16.mxu0 0
        %706 = vmatmul.mubr.bf16.gmra.mxu0 %v537
        %v707 = vpop.f32.mrf.mxu0
        %v708 = vadd.f32 %v463, %v707
        %v709 = vpop.f32.mrf.mxu0
        %v710 = vpop.f32.mrf.mxu0
        %v711 = vadd.f32 %v463, %v710
        %v712 = vpop.f32.mrf.mxu0
        %713 = vmatprep.mubr.bf16.mxu0 0
        %714 = vmatmul.mubr.bf16.gmra.mxu0 %v538
        %v715 = vpop.f32.mrf.mxu0
        %v716 = vadd.f32 %v463, %v715
        %v717 = vpop.f32.mrf.mxu0
        %v718 = vpop.f32.mrf.mxu0
        %v719 = vadd.f32 %v463, %v718
        %v720 = vpop.f32.mrf.mxu0
        %721 = vmatprep.mubr.bf16.mxu0 0
        %722 = vmatmul.mubr.bf16.gmra.mxu0 %v539
        %v723 = vpop.f32.mrf.mxu0
        %v724 = vadd.f32 %v463, %v723
        %v725 = vpop.f32.mrf.mxu0
        %v726 = vpop.f32.mrf.mxu0
        %v727 = vadd.f32 %v463, %v726
        %v728 = vpop.f32.mrf.mxu0
        %729 = vmatprep.mubr.bf16.mxu0 0
        %730 = vmatmul.mubr.bf16.gmra.mxu0 %v540
        %v731 = vpop.f32.mrf.mxu0
        %v732 = vadd.f32 %v463, %v731
        %v733 = vpop.f32.mrf.mxu0
        %v734 = vpop.f32.mrf.mxu0
        %v735 = vadd.f32 %v463, %v734
        %v736 = vpop.f32.mrf.mxu0
        %737 = vmatprep.mubr.bf16.mxu0 0
        %738 = vmatmul.mubr.bf16.gmra.mxu0 %v541
        %v739 = vpop.f32.mrf.mxu0
        %v740 = vadd.f32 %v463, %v739
        %v741 = vpop.f32.mrf.mxu0
        %v742 = vpop.f32.mrf.mxu0
        %v743 = vadd.f32 %v463, %v742
        %v744 = vpop.f32.mrf.mxu0
        %745 = vmatprep.mubr.bf16.mxu0 0
        %746 = vmatmul.mubr.bf16.gmra.mxu0 %v542
        %v747 = vpop.f32.mrf.mxu0
        %v748 = vadd.f32 %v463, %v747
        %v749 = vpop.f32.mrf.mxu0
        %v750 = vpop.f32.mrf.mxu0
        %v751 = vadd.f32 %v463, %v750
        %v752 = vpop.f32.mrf.mxu0
        %753 = vmatprep.mubr.bf16.mxu0 0
        %754 = vmatmul.mubr.bf16.gmra.mxu0 %v543
        %v755 = vpop.f32.mrf.mxu0
        %v756 = vadd.f32 %v463, %v755
        %v757 = vpop.f32.mrf.mxu0
        %v758 = vpop.f32.mrf.mxu0
        %v759 = vadd.f32 %v463, %v758
        %v760 = vpop.f32.mrf.mxu0
        %761 = vmatprep.mubr.bf16.mxu0 0
        %762 = vmatmul.mubr.bf16.gmra.mxu0 %v544
        %v763 = vpop.f32.mrf.mxu0
        %v764 = vadd.f32 %v463, %v763
        %v765 = vpop.f32.mrf.mxu0
        %v766 = vpop.f32.mrf.mxu0
        %v767 = vadd.f32 %v463, %v766
        %v768 = vpop.f32.mrf.mxu0
        %769 = vdwg.mxu0
        %v770 = vld [vmem:[#allocation5] sm:$0xf]
        %v771 = vld [vmem:[#allocation5 + $0x4] sm:$0xf]
        %v772 = vld [vmem:[#allocation5 + $0x8] sm:$0xf]
        %v773 = vld [vmem:[#allocation5 + $0xc] sm:$0xf]
        %v774 = vld [vmem:[#allocation5 + $0x10] sm:$0xf]
        %v775 = vld [vmem:[#allocation5 + $0x14] sm:$0xf]
        %v776 = vld [vmem:[#allocation5 + $0x18] sm:$0xf]
        %v777 = vld [vmem:[#allocation5 + $0x1c] sm:$0xf]
        %v778 = vld [vmem:[#allocation5 + $0x20] sm:$0xf]
        %v779 = vld [vmem:[#allocation5 + $0x24] sm:$0xf]
        %v780 = vld [vmem:[#allocation5 + $0x28] sm:$0xf]
        %v781 = vld [vmem:[#allocation5 + $0x2c] sm:$0xf]
        %v782 = vld [vmem:[#allocation5 + $0x30] sm:$0xf]
        %v783 = vld [vmem:[#allocation5 + $0x34] sm:$0xf]
        %v784 = vld [vmem:[#allocation5 + $0x38] sm:$0xf]
        %v785 = vld [vmem:[#allocation5 + $0x3c] sm:$0xf]
        %v786 = vld [vmem:[%s5] sm:$0x1]
        %v788 = vlaneseq
        %v789 = vshrl.u32 %v788, 7
        %v790 = vsub.s32 0, %v789
        %v791 = vrot.slane %v786, %v790
        %v809 = vunpack.c.l.b16 %v770
        %v810 = vunpack.c.l.b16 %v771
        %v811 = vunpack.c.l.b16 %v772
        %v812 = vunpack.c.l.b16 %v773
        %v813 = vunpack.c.l.b16 %v774
        %v814 = vunpack.c.l.b16 %v775
        %v815 = vunpack.c.l.b16 %v776
        %v816 = vunpack.c.l.b16 %v777
        %v817 = vunpack.c.l.b16 %v778
        %v818 = vunpack.c.l.b16 %v779
        %v819 = vunpack.c.l.b16 %v780
        %v820 = vunpack.c.l.b16 %v781
        %v821 = vunpack.c.l.b16 %v782
        %v822 = vunpack.c.l.b16 %v783
        %v823 = vunpack.c.l.b16 %v784
        %v824 = vunpack.c.l.b16 %v785
        %v825 = vpack.c.b16 %v810, %v809
        %v826 = vpack.c.b16 %v812, %v811
        %v827 = vpack.c.b16 %v814, %v813
        %v828 = vpack.c.b16 %v816, %v815
        %v829 = vpack.c.b16 %v818, %v817
        %v830 = vpack.c.b16 %v820, %v819
        %v831 = vpack.c.b16 %v822, %v821
        %v832 = vpack.c.b16 %v824, %v823
        %841 = vmatprep.subr.bf16.mxu0 0
        %842 = vmatpush1.bf16.msra.mxu0 %v832
        %843 = vmatprep.subr.bf16.mxu0 0
        %844 = vmatpush1.bf16.msra.mxu0 %v831
        %845 = vmatprep.subr.bf16.mxu0 0
        %846 = vmatpush1.bf16.msra.mxu0 %v830
        %847 = vmatprep.subr.bf16.mxu0 0
        %848 = vmatpush1.bf16.msra.mxu0 %v829
        %849 = vmatprep.subr.bf16.mxu0 0
        %850 = vmatpush1.bf16.msra.mxu0 %v828
        %851 = vmatprep.subr.bf16.mxu0 0
        %852 = vmatpush1.bf16.msra.mxu0 %v827
        %853 = vmatprep.subr.bf16.mxu0 0
        %854 = vmatpush1.bf16.msra.mxu0 %v826
        %855 = vmatprep.subr.bf16.mxu0 0
        %856 = vmatpush1.bf16.msra.mxu0 %v825
        %857 = vmatprep.subr.bf16.mxu0 0
        %858 = vmatpush2.bf16.msra.mxu0 0
        %859 = vmatprep.subr.bf16.mxu0 0
        %860 = vmatpush2.bf16.msra.mxu0 0
        %861 = vmatprep.subr.bf16.mxu0 0
        %862 = vmatpush2.bf16.msra.mxu0 0
        %863 = vmatprep.subr.bf16.mxu0 0
        %864 = vmatpush2.bf16.msra.mxu0 0
        %865 = vmatprep.subr.bf16.mxu0 0
        %866 = vmatpush2.bf16.msra.mxu0 0
        %867 = vmatprep.subr.bf16.mxu0 0
        %868 = vmatpush2.bf16.msra.mxu0 0
        %869 = vmatprep.subr.bf16.mxu0 0
        %870 = vmatpush2.bf16.msra.mxu0 0
        %871 = vmatprep.subr.bf16.mxu0 0
        %872 = vmatpush2.bf16.msra.mxu0 0
        %873 = vmatprep.mubr.bf16.mxu0 0
        %874 = vmatmul.mubr.bf16.gmra.mxu0 %v529
        %v875 = vpop.f32.mrf.mxu0
        %v876 = vadd.f32 %v791, %v875
        %v877 = vpop.f32.mrf.mxu0
        %v878 = vpop.f32.mrf.mxu0
        %v879 = vadd.f32 %v791, %v878
        %v880 = vpop.f32.mrf.mxu0
        %881 = vmatprep.mubr.bf16.mxu0 0
        %882 = vmatmul.mubr.bf16.gmra.mxu0 %v530
        %v883 = vpop.f32.mrf.mxu0
        %v884 = vadd.f32 %v791, %v883
        %v885 = vpop.f32.mrf.mxu0
        %v886 = vpop.f32.mrf.mxu0
        %v887 = vadd.f32 %v791, %v886
        %v888 = vpop.f32.mrf.mxu0
        %889 = vmatprep.mubr.bf16.mxu0 0
        %890 = vmatmul.mubr.bf16.gmra.mxu0 %v531
        %v891 = vpop.f32.mrf.mxu0
        %v892 = vadd.f32 %v791, %v891
        %v893 = vpop.f32.mrf.mxu0
        %v894 = vpop.f32.mrf.mxu0
        %v895 = vadd.f32 %v791, %v894
        %v896 = vpop.f32.mrf.mxu0
        %897 = vmatprep.mubr.bf16.mxu0 0
        %898 = vmatmul.mubr.bf16.gmra.mxu0 %v532
        %v899 = vpop.f32.mrf.mxu0
        %v900 = vadd.f32 %v791, %v899
        %v901 = vpop.f32.mrf.mxu0
        %v902 = vpop.f32.mrf.mxu0
        %v903 = vadd.f32 %v791, %v902
        %v904 = vpop.f32.mrf.mxu0
        %905 = vmatprep.mubr.bf16.mxu0 0
        %906 = vmatmul.mubr.bf16.gmra.mxu0 %v533
        %v907 = vpop.f32.mrf.mxu0
        %v908 = vadd.f32 %v791, %v907
        %v909 = vpop.f32.mrf.mxu0
        %v910 = vpop.f32.mrf.mxu0
        %v911 = vadd.f32 %v791, %v910
        %v912 = vpop.f32.mrf.mxu0
        %913 = vmatprep.mubr.bf16.mxu0 0
        %914 = vmatmul.mubr.bf16.gmra.mxu0 %v534
        %v915 = vpop.f32.mrf.mxu0
        %v916 = vadd.f32 %v791, %v915
        %v917 = vpop.f32.mrf.mxu0
        %v918 = vpop.f32.mrf.mxu0
        %v919 = vadd.f32 %v791, %v918
        %v920 = vpop.f32.mrf.mxu0
        %921 = vmatprep.mubr.bf16.mxu0 0
        %922 = vmatmul.mubr.bf16.gmra.mxu0 %v535
        %v923 = vpop.f32.mrf.mxu0
        %v924 = vadd.f32 %v791, %v923
        %v925 = vpop.f32.mrf.mxu0
        %v926 = vpop.f32.mrf.mxu0
        %v927 = vadd.f32 %v791, %v926
        %v928 = vpop.f32.mrf.mxu0
        %929 = vmatprep.mubr.bf16.mxu0 0
        %930 = vmatmul.mubr.bf16.gmra.mxu0 %v536
        %v931 = vpop.f32.mrf.mxu0
        %v932 = vadd.f32 %v791, %v931
        %v933 = vpop.f32.mrf.mxu0
        %v934 = vpop.f32.mrf.mxu0
        %v935 = vadd.f32 %v791, %v934
        %v936 = vpop.f32.mrf.mxu0
        %937 = vmatprep.mubr.bf16.mxu0 0
        %938 = vmatmul.mubr.bf16.gmra.mxu0 %v537
        %v939 = vpop.f32.mrf.mxu0
        %v940 = vadd.f32 %v791, %v939
        %v941 = vpop.f32.mrf.mxu0
        %v942 = vpop.f32.mrf.mxu0
        %v943 = vadd.f32 %v791, %v942
        %v944 = vpop.f32.mrf.mxu0
        %945 = vmatprep.mubr.bf16.mxu0 0
        %946 = vmatmul.mubr.bf16.gmra.mxu0 %v538
        %v947 = vpop.f32.mrf.mxu0
        %v948 = vadd.f32 %v791, %v947
        %v949 = vpop.f32.mrf.mxu0
        %v950 = vpop.f32.mrf.mxu0
        %v951 = vadd.f32 %v791, %v950
        %v952 = vpop.f32.mrf.mxu0
        %953 = vmatprep.mubr.bf16.mxu0 0
        %954 = vmatmul.mubr.bf16.gmra.mxu0 %v539
        %v955 = vpop.f32.mrf.mxu0
        %v956 = vadd.f32 %v791, %v955
        %v957 = vpop.f32.mrf.mxu0
        %v958 = vpop.f32.mrf.mxu0
        %v959 = vadd.f32 %v791, %v958
        %v960 = vpop.f32.mrf.mxu0
        %961 = vmatprep.mubr.bf16.mxu0 0
        %962 = vmatmul.mubr.bf16.gmra.mxu0 %v540
        %v963 = vpop.f32.mrf.mxu0
        %v964 = vadd.f32 %v791, %v963
        %v965 = vpop.f32.mrf.mxu0
        %v966 = vpop.f32.mrf.mxu0
        %v967 = vadd.f32 %v791, %v966
        %v968 = vpop.f32.mrf.mxu0
        %969 = vmatprep.mubr.bf16.mxu0 0
        %970 = vmatmul.mubr.bf16.gmra.mxu0 %v541
        %v971 = vpop.f32.mrf.mxu0
        %v972 = vadd.f32 %v791, %v971
        %v973 = vpop.f32.mrf.mxu0
        %v974 = vpop.f32.mrf.mxu0
        %v975 = vadd.f32 %v791, %v974
        %v976 = vpop.f32.mrf.mxu0
        %977 = vmatprep.mubr.bf16.mxu0 0
        %978 = vmatmul.mubr.bf16.gmra.mxu0 %v542
        %v979 = vpop.f32.mrf.mxu0
        %v980 = vadd.f32 %v791, %v979
        %v981 = vpop.f32.mrf.mxu0
        %v982 = vpop.f32.mrf.mxu0
        %v983 = vadd.f32 %v791, %v982
        %v984 = vpop.f32.mrf.mxu0
        %985 = vmatprep.mubr.bf16.mxu0 0
        %986 = vmatmul.mubr.bf16.gmra.mxu0 %v543
        %v987 = vpop.f32.mrf.mxu0
        %v988 = vadd.f32 %v791, %v987
        %v989 = vpop.f32.mrf.mxu0
        %v990 = vpop.f32.mrf.mxu0
        %v991 = vadd.f32 %v791, %v990
        %v992 = vpop.f32.mrf.mxu0
        %993 = vmatprep.mubr.bf16.mxu0 0
        %994 = vmatmul.mubr.bf16.gmra.mxu0 %v544
        %v995 = vpop.f32.mrf.mxu0
        %v996 = vadd.f32 %v791, %v995
        %v997 = vpop.f32.mrf.mxu0
        %v998 = vpop.f32.mrf.mxu0
        %v999 = vadd.f32 %v791, %v998
        %v1000 = vpop.f32.mrf.mxu0
        %1001 = vdwg.mxu0
        %v1002 = vmax.f32 %v876, 0.0
        %v1003 = vmax.f32 %v879, 0.0
        %v1004 = vmax.f32 %v884, 0.0
        %v1005 = vmax.f32 %v887, 0.0
        %v1006 = vmax.f32 %v892, 0.0
        %v1007 = vmax.f32 %v895, 0.0
        %v1008 = vmax.f32 %v900, 0.0
        %v1009 = vmax.f32 %v903, 0.0
        %v1010 = vmax.f32 %v908, 0.0
        %v1011 = vmax.f32 %v911, 0.0
        %v1012 = vmax.f32 %v916, 0.0
        %v1013 = vmax.f32 %v919, 0.0
        %v1014 = vmax.f32 %v924, 0.0
        %v1015 = vmax.f32 %v927, 0.0
        %v1016 = vmax.f32 %v932, 0.0
        %v1017 = vmax.f32 %v935, 0.0
        %v1018 = vmax.f32 %v940, 0.0
        %v1019 = vmax.f32 %v943, 0.0
        %v1020 = vmax.f32 %v948, 0.0
        %v1021 = vmax.f32 %v951, 0.0
        %v1022 = vmax.f32 %v956, 0.0
        %v1023 = vmax.f32 %v959, 0.0
        %v1024 = vmax.f32 %v964, 0.0
        %v1025 = vmax.f32 %v967, 0.0
        %v1026 = vmax.f32 %v972, 0.0
        %v1027 = vmax.f32 %v975, 0.0
        %v1028 = vmax.f32 %v980, 0.0
        %v1029 = vmax.f32 %v983, 0.0
        %v1030 = vmax.f32 %v988, 0.0
        %v1031 = vmax.f32 %v991, 0.0
        %v1032 = vmax.f32 %v996, 0.0
        %v1033 = vmax.f32 %v999, 0.0
        %vm1066 = vcmask 1040384
        %v1067 = vrot.slane %v1002, 7
        %v1068 = vrot.slane %v1003, 7
        %v1069 = vsel %vm1066, %v1067, %v1068
        %v1070 = vrot.slane %v1004, 7
        %v1071 = vrot.slane %v1005, 7
        %v1072 = vsel %vm1066, %v1070, %v1071
        %v1073 = vrot.slane %v1006, 7
        %v1074 = vrot.slane %v1007, 7
        %v1075 = vsel %vm1066, %v1073, %v1074
        %v1076 = vrot.slane %v1008, 7
        %v1077 = vrot.slane %v1009, 7
        %v1078 = vsel %vm1066, %v1076, %v1077
        %v1079 = vrot.slane %v1010, 7
        %v1080 = vrot.slane %v1011, 7
        %v1081 = vsel %vm1066, %v1079, %v1080
        %v1082 = vrot.slane %v1012, 7
        %v1083 = vrot.slane %v1013, 7
        %v1084 = vsel %vm1066, %v1082, %v1083
        %v1085 = vrot.slane %v1014, 7
        %v1086 = vrot.slane %v1015, 7
        %v1087 = vsel %vm1066, %v1085, %v1086
        %v1088 = vrot.slane %v1016, 7
        %v1089 = vrot.slane %v1017, 7
        %v1090 = vsel %vm1066, %v1088, %v1089
        %v1091 = vrot.slane %v1018, 7
        %v1092 = vrot.slane %v1019, 7
        %v1093 = vsel %vm1066, %v1091, %v1092
        %v1094 = vrot.slane %v1020, 7
        %v1095 = vrot.slane %v1021, 7
        %v1096 = vsel %vm1066, %v1094, %v1095
        %v1097 = vrot.slane %v1022, 7
        %v1098 = vrot.slane %v1023, 7
        %v1099 = vsel %vm1066, %v1097, %v1098
        %v1100 = vrot.slane %v1024, 7
        %v1101 = vrot.slane %v1025, 7
        %v1102 = vsel %vm1066, %v1100, %v1101
        %v1103 = vrot.slane %v1026, 7
        %v1104 = vrot.slane %v1027, 7
        %v1105 = vsel %vm1066, %v1103, %v1104
        %v1106 = vrot.slane %v1028, 7
        %v1107 = vrot.slane %v1029, 7
        %v1108 = vsel %vm1066, %v1106, %v1107
        %v1109 = vrot.slane %v1030, 7
        %v1110 = vrot.slane %v1031, 7
        %v1111 = vsel %vm1066, %v1109, %v1110
        %v1112 = vrot.slane %v1032, 7
        %v1113 = vrot.slane %v1033, 7
        %v1114 = vsel %vm1066, %v1112, %v1113
        %v1163 = vsel %vm1066, 0.0, %v1067
        %v1164 = vsel %vm1066, 0.0, %v1070
        %v1165 = vsel %vm1066, 0.0, %v1073
        %v1166 = vsel %vm1066, 0.0, %v1076
        %v1167 = vsel %vm1066, 0.0, %v1079
        %v1168 = vsel %vm1066, 0.0, %v1082
        %v1169 = vsel %vm1066, 0.0, %v1085
        %v1170 = vsel %vm1066, 0.0, %v1088
        %v1171 = vsel %vm1066, 0.0, %v1091
        %v1172 = vsel %vm1066, 0.0, %v1094
        %v1173 = vsel %vm1066, 0.0, %v1097
        %v1174 = vsel %vm1066, 0.0, %v1100
        %v1175 = vsel %vm1066, 0.0, %v1103
        %v1176 = vsel %vm1066, 0.0, %v1106
        %v1177 = vsel %vm1066, 0.0, %v1109
        %v1178 = vsel %vm1066, 0.0, %v1112
        %v1179 = vsel %vm1066, %v1068, 0.0
        %v1180 = vsel %vm1066, %v1071, 0.0
        %v1181 = vsel %vm1066, %v1074, 0.0
        %v1182 = vsel %vm1066, %v1077, 0.0
        %v1183 = vsel %vm1066, %v1080, 0.0
        %v1184 = vsel %vm1066, %v1083, 0.0
        %v1185 = vsel %vm1066, %v1086, 0.0
        %v1186 = vsel %vm1066, %v1089, 0.0
        %v1187 = vsel %vm1066, %v1092, 0.0
        %v1188 = vsel %vm1066, %v1095, 0.0
        %v1189 = vsel %vm1066, %v1098, 0.0
        %v1190 = vsel %vm1066, %v1101, 0.0
        %v1191 = vsel %vm1066, %v1104, 0.0
        %v1192 = vsel %vm1066, %v1107, 0.0
        %v1193 = vsel %vm1066, %v1110, 0.0
        %v1194 = vsel %vm1066, %v1113, 0.0
        %vm1227 = vcmask 1046528
        %v1228 = vrot.slane %v1163, 1
        %v1229 = vrot.slane %v1069, 1
        %v1230 = vsel %vm1227, %v1228, %v1229
        %v1231 = vrot.slane %v1179, 1
        %v1232 = vsel %vm1227, %v1229, %v1231
        %v1233 = vrot.slane %v1164, 1
        %v1234 = vrot.slane %v1072, 1
        %v1235 = vsel %vm1227, %v1233, %v1234
        %v1236 = vrot.slane %v1180, 1
        %v1237 = vsel %vm1227, %v1234, %v1236
        %v1238 = vrot.slane %v1165, 1
        %v1239 = vrot.slane %v1075, 1
        %v1240 = vsel %vm1227, %v1238, %v1239
        %v1241 = vrot.slane %v1181, 1
        %v1242 = vsel %vm1227, %v1239, %v1241
        %v1243 = vrot.slane %v1166, 1
        %v1244 = vrot.slane %v1078, 1
        %v1245 = vsel %vm1227, %v1243, %v1244
        %v1246 = vrot.slane %v1182, 1
        %v1247 = vsel %vm1227, %v1244, %v1246
        %v1248 = vrot.slane %v1167, 1
        %v1249 = vrot.slane %v1081, 1
        %v1250 = vsel %vm1227, %v1248, %v1249
        %v1251 = vrot.slane %v1183, 1
        %v1252 = vsel %vm1227, %v1249, %v1251
        %v1253 = vrot.slane %v1168, 1
        %v1254 = vrot.slane %v1084, 1
        %v1255 = vsel %vm1227, %v1253, %v1254
        %v1256 = vrot.slane %v1184, 1
        %v1257 = vsel %vm1227, %v1254, %v1256
        %v1258 = vrot.slane %v1169, 1
        %v1259 = vrot.slane %v1087, 1
        %v1260 = vsel %vm1227, %v1258, %v1259
        %v1261 = vrot.slane %v1185, 1
        %v1262 = vsel %vm1227, %v1259, %v1261
        %v1263 = vrot.slane %v1170, 1
        %v1264 = vrot.slane %v1090, 1
        %v1265 = vsel %vm1227, %v1263, %v1264
        %v1266 = vrot.slane %v1186, 1
        %v1267 = vsel %vm1227, %v1264, %v1266
        %v1268 = vrot.slane %v1171, 1
        %v1269 = vrot.slane %v1093, 1
        %v1270 = vsel %vm1227, %v1268, %v1269
        %v1271 = vrot.slane %v1187, 1
        %v1272 = vsel %vm1227, %v1269, %v1271
        %v1273 = vrot.slane %v1172, 1
        %v1274 = vrot.slane %v1096, 1
        %v1275 = vsel %vm1227, %v1273, %v1274
        %v1276 = vrot.slane %v1188, 1
        %v1277 = vsel %vm1227, %v1274, %v1276
        %v1278 = vrot.slane %v1173, 1
        %v1279 = vrot.slane %v1099, 1
        %v1280 = vsel %vm1227, %v1278, %v1279
        %v1281 = vrot.slane %v1189, 1
        %v1282 = vsel %vm1227, %v1279, %v1281
        %v1283 = vrot.slane %v1174, 1
        %v1284 = vrot.slane %v1102, 1
        %v1285 = vsel %vm1227, %v1283, %v1284
        %v1286 = vrot.slane %v1190, 1
        %v1287 = vsel %vm1227, %v1284, %v1286
        %v1288 = vrot.slane %v1175, 1
        %v1289 = vrot.slane %v1105, 1
        %v1290 = vsel %vm1227, %v1288, %v1289
        %v1291 = vrot.slane %v1191, 1
        %v1292 = vsel %vm1227, %v1289, %v1291
        %v1293 = vrot.slane %v1176, 1
        %v1294 = vrot.slane %v1108, 1
        %v1295 = vsel %vm1227, %v1293, %v1294
        %v1296 = vrot.slane %v1192, 1
        %v1297 = vsel %vm1227, %v1294, %v1296
        %v1298 = vrot.slane %v1177, 1
        %v1299 = vrot.slane %v1111, 1
        %v1300 = vsel %vm1227, %v1298, %v1299
        %v1301 = vrot.slane %v1193, 1
        %v1302 = vsel %vm1227, %v1299, %v1301
        %v1303 = vrot.slane %v1178, 1
        %v1304 = vrot.slane %v1114, 1
        %v1305 = vsel %vm1227, %v1303, %v1304
        %v1306 = vrot.slane %v1194, 1
        %v1307 = vsel %vm1227, %v1304, %v1306
        %vm1340 = vcmask 1045504
        %v1341 = vrot.slane %v1163, 2
        %v1342 = vrot.slane %v1069, 2
        %v1343 = vsel %vm1340, %v1341, %v1342
        %v1344 = vrot.slane %v1179, 2
        %v1345 = vsel %vm1340, %v1342, %v1344
        %v1346 = vrot.slane %v1164, 2
        %v1347 = vrot.slane %v1072, 2
        %v1348 = vsel %vm1340, %v1346, %v1347
        %v1349 = vrot.slane %v1180, 2
        %v1350 = vsel %vm1340, %v1347, %v1349
        %v1351 = vrot.slane %v1165, 2
        %v1352 = vrot.slane %v1075, 2
        %v1353 = vsel %vm1340, %v1351, %v1352
        %v1354 = vrot.slane %v1181, 2
        %v1355 = vsel %vm1340, %v1352, %v1354
        %v1356 = vrot.slane %v1166, 2
        %v1357 = vrot.slane %v1078, 2
        %v1358 = vsel %vm1340, %v1356, %v1357
        %v1359 = vrot.slane %v1182, 2
        %v1360 = vsel %vm1340, %v1357, %v1359
        %v1361 = vrot.slane %v1167, 2
        %v1362 = vrot.slane %v1081, 2
        %v1363 = vsel %vm1340, %v1361, %v1362
        %v1364 = vrot.slane %v1183, 2
        %v1365 = vsel %vm1340, %v1362, %v1364
        %v1366 = vrot.slane %v1168, 2
        %v1367 = vrot.slane %v1084, 2
        %v1368 = vsel %vm1340, %v1366, %v1367
        %v1369 = vrot.slane %v1184, 2
        %v1370 = vsel %vm1340, %v1367, %v1369
        %v1371 = vrot.slane %v1169, 2
        %v1372 = vrot.slane %v1087, 2
        %v1373 = vsel %vm1340, %v1371, %v1372
        %v1374 = vrot.slane %v1185, 2
        %v1375 = vsel %vm1340, %v1372, %v1374
        %v1376 = vrot.slane %v1170, 2
        %v1377 = vrot.slane %v1090, 2
        %v1378 = vsel %vm1340, %v1376, %v1377
        %v1379 = vrot.slane %v1186, 2
        %v1380 = vsel %vm1340, %v1377, %v1379
        %v1381 = vrot.slane %v1171, 2
        %v1382 = vrot.slane %v1093, 2
        %v1383 = vsel %vm1340, %v1381, %v1382
        %v1384 = vrot.slane %v1187, 2
        %v1385 = vsel %vm1340, %v1382, %v1384
        %v1386 = vrot.slane %v1172, 2
        %v1387 = vrot.slane %v1096, 2
        %v1388 = vsel %vm1340, %v1386, %v1387
        %v1389 = vrot.slane %v1188, 2
        %v1390 = vsel %vm1340, %v1387, %v1389
        %v1391 = vrot.slane %v1173, 2
        %v1392 = vrot.slane %v1099, 2
        %v1393 = vsel %vm1340, %v1391, %v1392
        %v1394 = vrot.slane %v1189, 2
        %v1395 = vsel %vm1340, %v1392, %v1394
        %v1396 = vrot.slane %v1174, 2
        %v1397 = vrot.slane %v1102, 2
        %v1398 = vsel %vm1340, %v1396, %v1397
        %v1399 = vrot.slane %v1190, 2
        %v1400 = vsel %vm1340, %v1397, %v1399
        %v1401 = vrot.slane %v1175, 2
        %v1402 = vrot.slane %v1105, 2
        %v1403 = vsel %vm1340, %v1401, %v1402
        %v1404 = vrot.slane %v1191, 2
        %v1405 = vsel %vm1340, %v1402, %v1404
        %v1406 = vrot.slane %v1176, 2
        %v1407 = vrot.slane %v1108, 2
        %v1408 = vsel %vm1340, %v1406, %v1407
        %v1409 = vrot.slane %v1192, 2
        %v1410 = vsel %vm1340, %v1407, %v1409
        %v1411 = vrot.slane %v1177, 2
        %v1412 = vrot.slane %v1111, 2
        %v1413 = vsel %vm1340, %v1411, %v1412
        %v1414 = vrot.slane %v1193, 2
        %v1415 = vsel %vm1340, %v1412, %v1414
        %v1416 = vrot.slane %v1178, 2
        %v1417 = vrot.slane %v1114, 2
        %v1418 = vsel %vm1340, %v1416, %v1417
        %v1419 = vrot.slane %v1194, 2
        %v1420 = vsel %vm1340, %v1417, %v1419
        %v1453 = vpack.c.bf16 0.0, 0.0
        %v1454 = vpack.c.bf16 %v1069, %v1163
        %v1455 = vpack.c.bf16 %v1232, %v1230
        %v1456 = vpack.c.bf16 %v1345, %v1343
        %v1457 = vpack.c.bf16 %v1072, %v1164
        %v1458 = vpack.c.bf16 %v1237, %v1235
        %v1459 = vpack.c.bf16 %v1350, %v1348
        %v1460 = vpack.c.bf16 %v1075, %v1165
        %v1461 = vpack.c.bf16 %v1242, %v1240
        %v1462 = vpack.c.bf16 %v1355, %v1353
        %v1463 = vpack.c.bf16 %v1078, %v1166
        %v1464 = vpack.c.bf16 %v1247, %v1245
        %v1465 = vpack.c.bf16 %v1360, %v1358
        %v1466 = vpack.c.bf16 %v1081, %v1167
        %v1467 = vpack.c.bf16 %v1252, %v1250
        %v1468 = vpack.c.bf16 %v1365, %v1363
        %v1469 = vpack.c.bf16 %v1084, %v1168
        %v1470 = vpack.c.bf16 %v1257, %v1255
        %v1471 = vpack.c.bf16 %v1370, %v1368
        %v1472 = vpack.c.bf16 %v1087, %v1169
        %v1473 = vpack.c.bf16 %v1262, %v1260
        %v1474 = vpack.c.bf16 %v1375, %v1373
        %v1475 = vpack.c.bf16 %v1090, %v1170
        %v1476 = vpack.c.bf16 %v1267, %v1265
        %v1477 = vpack.c.bf16 %v1380, %v1378
        %v1478 = vpack.c.bf16 %v1093, %v1171
        %v1479 = vpack.c.bf16 %v1272, %v1270
        %v1480 = vpack.c.bf16 %v1385, %v1383
        %v1481 = vpack.c.bf16 %v1096, %v1172
        %v1482 = vpack.c.bf16 %v1277, %v1275
        %v1483 = vpack.c.bf16 %v1390, %v1388
        %v1484 = vpack.c.bf16 %v1099, %v1173
        %v1485 = vpack.c.bf16 %v1282, %v1280
        %v1486 = vpack.c.bf16 %v1395, %v1393
        %v1487 = vpack.c.bf16 %v1102, %v1174
        %v1488 = vpack.c.bf16 %v1287, %v1285
        %v1489 = vpack.c.bf16 %v1400, %v1398
        %v1490 = vpack.c.bf16 %v1105, %v1175
        %v1491 = vpack.c.bf16 %v1292, %v1290
        %v1492 = vpack.c.bf16 %v1405, %v1403
        %v1493 = vpack.c.bf16 %v1108, %v1176
        %v1494 = vpack.c.bf16 %v1297, %v1295
        %v1495 = vpack.c.bf16 %v1410, %v1408
        %v1496 = vpack.c.bf16 %v1111, %v1177
        %v1497 = vpack.c.bf16 %v1302, %v1300
        %v1498 = vpack.c.bf16 %v1415, %v1413
        %v1499 = vpack.c.bf16 %v1114, %v1178
        %v1500 = vpack.c.bf16 %v1307, %v1305
        %v1501 = vpack.c.bf16 %v1420, %v1418
        %v1502 = vld [vmem:[#allocation7] sm:$0xf]
        %v1503 = vld [vmem:[#allocation7 + $0x4] sm:$0xf]
        %v1504 = vld [vmem:[#allocation7 + $0x8] sm:$0xf]
        %v1505 = vld [vmem:[#allocation7 + $0xc] sm:$0xf]
        %v1506 = vld [vmem:[#allocation7 + $0x10] sm:$0xf]
        %v1507 = vld [vmem:[#allocation7 + $0x14] sm:$0xf]
        %v1508 = vld [vmem:[#allocation7 + $0x18] sm:$0xf]
        %v1509 = vld [vmem:[#allocation7 + $0x1c] sm:$0xf]
        %v1510 = vld [vmem:[#allocation7 + $0x20] sm:$0xf]
        %v1511 = vld [vmem:[#allocation7 + $0x24] sm:$0xf]
        %v1512 = vld [vmem:[#allocation7 + $0x28] sm:$0xf]
        %v1513 = vld [vmem:[#allocation7 + $0x2c] sm:$0xf]
        %v1514 = vld [vmem:[#allocation7 + $0x30] sm:$0xf]
        %v1515 = vld [vmem:[#allocation7 + $0x34] sm:$0xf]
        %v1516 = vld [vmem:[#allocation7 + $0x38] sm:$0xf]
        %v1517 = vld [vmem:[#allocation7 + $0x3c] sm:$0xf]
        %v1518 = vld [vmem:[#allocation7 + $0x40] sm:$0xf]
        %v1519 = vld [vmem:[#allocation7 + $0x44] sm:$0xf]
        %v1520 = vld [vmem:[#allocation7 + $0x48] sm:$0xf]
        %v1521 = vld [vmem:[#allocation7 + $0x4c] sm:$0xf]
        %v1522 = vld [vmem:[#allocation7 + $0x50] sm:$0xf]
        %v1523 = vld [vmem:[#allocation7 + $0x54] sm:$0xf]
        %v1524 = vld [vmem:[#allocation7 + $0x58] sm:$0xf]
        %v1525 = vld [vmem:[#allocation7 + $0x5c] sm:$0xf]
        %v1526 = vld [vmem:[#allocation7 + $0x60] sm:$0xf]
        %v1527 = vld [vmem:[#allocation7 + $0x64] sm:$0xf]
        %v1528 = vld [vmem:[#allocation7 + $0x68] sm:$0xf]
        %v1529 = vld [vmem:[#allocation7 + $0x6c] sm:$0xf]
        %v1530 = vld [vmem:[#allocation7 + $0x70] sm:$0xf]
        %v1531 = vld [vmem:[#allocation7 + $0x74] sm:$0xf]
        %v1532 = vld [vmem:[#allocation7 + $0x78] sm:$0xf]
        %v1533 = vld [vmem:[#allocation7 + $0x7c] sm:$0xf]
        %v1534 = vld [vmem:[#allocation7 + $0x80] sm:$0xf]
        %v1535 = vld [vmem:[#allocation7 + $0x84] sm:$0xf]
        %v1536 = vld [vmem:[#allocation7 + $0x88] sm:$0xf]
        %v1537 = vld [vmem:[#allocation7 + $0x8c] sm:$0xf]
        %v1538 = vld [vmem:[#allocation7 + $0x90] sm:$0xf]
        %v1539 = vld [vmem:[#allocation7 + $0x94] sm:$0xf]
        %v1540 = vld [vmem:[#allocation7 + $0x98] sm:$0xf]
        %v1541 = vld [vmem:[#allocation7 + $0x9c] sm:$0xf]
        %v1542 = vld [vmem:[#allocation7 + $0xa0] sm:$0xf]
        %v1543 = vld [vmem:[#allocation7 + $0xa4] sm:$0xf]
        %v1544 = vld [vmem:[#allocation7 + $0xa8] sm:$0xf]
        %v1545 = vld [vmem:[#allocation7 + $0xac] sm:$0xf]
        %v1546 = vld [vmem:[#allocation7 + $0xb0] sm:$0xf]
        %v1547 = vld [vmem:[#allocation7 + $0xb4] sm:$0xf]
        %v1548 = vld [vmem:[#allocation7 + $0xb8] sm:$0xf]
        %v1549 = vld [vmem:[#allocation7 + $0xbc] sm:$0xf]
        %v1550 = vld [vmem:[#allocation7 + $0xc0] sm:$0xf]
        %v1551 = vld [vmem:[#allocation7 + $0xc4] sm:$0xf]
        %v1552 = vld [vmem:[#allocation7 + $0xc8] sm:$0xf]
        %v1553 = vld [vmem:[#allocation7 + $0xcc] sm:$0xf]
        %v1554 = vld [vmem:[#allocation7 + $0xd0] sm:$0xf]
        %v1555 = vld [vmem:[#allocation7 + $0xd4] sm:$0xf]
        %v1556 = vld [vmem:[#allocation7 + $0xd8] sm:$0xf]
        %v1557 = vld [vmem:[#allocation7 + $0xdc] sm:$0xf]
        %v1558 = vld [vmem:[#allocation7 + $0xe0] sm:$0xf]
        %v1559 = vld [vmem:[#allocation7 + $0xe4] sm:$0xf]
        %v1560 = vld [vmem:[#allocation7 + $0xe8] sm:$0xf]
        %v1561 = vld [vmem:[#allocation7 + $0xec] sm:$0xf]
        %v1562 = vld [vmem:[#allocation7 + $0xf0] sm:$0xf]
        %v1563 = vld [vmem:[#allocation7 + $0xf4] sm:$0xf]
        %v1564 = vld [vmem:[#allocation7 + $0xf8] sm:$0xf]
        %v1565 = vld [vmem:[#allocation7 + $0xfc] sm:$0xf]
        %v1566 = vld [vmem:[#allocation7 + $0x100] sm:$0xf]
        %v1567 = vld [vmem:[#allocation7 + $0x104] sm:$0xf]
        %v1568 = vld [vmem:[#allocation7 + $0x108] sm:$0xf]
        %v1569 = vld [vmem:[#allocation7 + $0x10c] sm:$0xf]
        %v1570 = vld [vmem:[#allocation7 + $0x110] sm:$0xf]
        %v1571 = vld [vmem:[#allocation7 + $0x114] sm:$0xf]
        %v1572 = vld [vmem:[#allocation7 + $0x118] sm:$0xf]
        %v1573 = vld [vmem:[#allocation7 + $0x11c] sm:$0xf]
        %v1574 = vld [vmem:[#allocation7 + $0x120] sm:$0xf]
        %v1575 = vld [vmem:[#allocation7 + $0x124] sm:$0xf]
        %v1576 = vld [vmem:[#allocation7 + $0x128] sm:$0xf]
        %v1577 = vld [vmem:[#allocation7 + $0x12c] sm:$0xf]
        %v1578 = vld [vmem:[#allocation7 + $0x130] sm:$0xf]
        %v1579 = vld [vmem:[#allocation7 + $0x134] sm:$0xf]
        %v1580 = vld [vmem:[#allocation7 + $0x138] sm:$0xf]
        %v1581 = vld [vmem:[#allocation7 + $0x13c] sm:$0xf]
        %v1582 = vld [vmem:[#allocation7 + $0x140] sm:$0xf]
        %v1583 = vld [vmem:[#allocation7 + $0x144] sm:$0xf]
        %v1584 = vld [vmem:[#allocation7 + $0x148] sm:$0xf]
        %v1585 = vld [vmem:[#allocation7 + $0x14c] sm:$0xf]
        %v1586 = vld [vmem:[#allocation7 + $0x150] sm:$0xf]
        %v1587 = vld [vmem:[#allocation7 + $0x154] sm:$0xf]
        %v1588 = vld [vmem:[#allocation7 + $0x158] sm:$0xf]
        %v1589 = vld [vmem:[#allocation7 + $0x15c] sm:$0xf]
        %v1590 = vld [vmem:[#allocation7 + $0x160] sm:$0xf]
        %v1591 = vld [vmem:[#allocation7 + $0x164] sm:$0xf]
        %v1592 = vld [vmem:[#allocation7 + $0x168] sm:$0xf]
        %v1593 = vld [vmem:[#allocation7 + $0x16c] sm:$0xf]
        %v1594 = vld [vmem:[#allocation7 + $0x170] sm:$0xf]
        %v1595 = vld [vmem:[#allocation7 + $0x174] sm:$0xf]
        %v1596 = vld [vmem:[#allocation7 + $0x178] sm:$0xf]
        %v1597 = vld [vmem:[#allocation7 + $0x17c] sm:$0xf]
        %v1598 = vld [vmem:[#allocation7 + $0x180] sm:$0xf]
        %v1599 = vld [vmem:[#allocation7 + $0x184] sm:$0xf]
        %v1600 = vld [vmem:[#allocation7 + $0x188] sm:$0xf]
        %v1601 = vld [vmem:[#allocation7 + $0x18c] sm:$0xf]
        %v1602 = vld [vmem:[#allocation7 + $0x190] sm:$0xf]
        %v1603 = vld [vmem:[#allocation7 + $0x194] sm:$0xf]
        %v1604 = vld [vmem:[#allocation7 + $0x198] sm:$0xf]
        %v1605 = vld [vmem:[#allocation7 + $0x19c] sm:$0xf]
        %v1606 = vld [vmem:[#allocation7 + $0x1a0] sm:$0xf]
        %v1607 = vld [vmem:[#allocation7 + $0x1a4] sm:$0xf]
        %v1608 = vld [vmem:[#allocation7 + $0x1a8] sm:$0xf]
        %v1609 = vld [vmem:[#allocation7 + $0x1ac] sm:$0xf]
        %v1610 = vld [vmem:[#allocation7 + $0x1b0] sm:$0xf]
        %v1611 = vld [vmem:[#allocation7 + $0x1b4] sm:$0xf]
        %v1612 = vld [vmem:[#allocation7 + $0x1b8] sm:$0xf]
        %v1613 = vld [vmem:[#allocation7 + $0x1bc] sm:$0xf]
        %v1614 = vld [vmem:[#allocation7 + $0x1c0] sm:$0xf]
        %v1615 = vld [vmem:[#allocation7 + $0x1c4] sm:$0xf]
        %v1616 = vld [vmem:[#allocation7 + $0x1c8] sm:$0xf]
        %v1617 = vld [vmem:[#allocation7 + $0x1cc] sm:$0xf]
        %v1618 = vld [vmem:[#allocation7 + $0x1d0] sm:$0xf]
        %v1619 = vld [vmem:[#allocation7 + $0x1d4] sm:$0xf]
        %v1620 = vld [vmem:[#allocation7 + $0x1d8] sm:$0xf]
        %v1621 = vld [vmem:[#allocation7 + $0x1dc] sm:$0xf]
        %v1622 = vld [vmem:[#allocation7 + $0x1e0] sm:$0xf]
        %v1623 = vld [vmem:[#allocation7 + $0x1e4] sm:$0xf]
        %v1624 = vld [vmem:[#allocation7 + $0x1e8] sm:$0xf]
        %v1625 = vld [vmem:[#allocation7 + $0x1ec] sm:$0xf]
        %v1626 = vld [vmem:[#allocation7 + $0x1f0] sm:$0xf]
        %v1627 = vld [vmem:[#allocation7 + $0x1f4] sm:$0xf]
        %v1628 = vld [vmem:[#allocation7 + $0x1f8] sm:$0xf]
        %v1629 = vld [vmem:[#allocation7 + $0x1fc] sm:$0xf]
        %v1630 = vld [vmem:[#allocation7 + $0x200] sm:$0xf]
        %v1631 = vld [vmem:[#allocation7 + $0x204] sm:$0xf]
        %v1632 = vld [vmem:[#allocation7 + $0x208] sm:$0xf]
        %v1633 = vld [vmem:[#allocation7 + $0x20c] sm:$0xf]
        %v1634 = vld [vmem:[#allocation7 + $0x210] sm:$0xf]
        %v1635 = vld [vmem:[#allocation7 + $0x214] sm:$0xf]
        %v1636 = vld [vmem:[#allocation7 + $0x218] sm:$0xf]
        %v1637 = vld [vmem:[#allocation7 + $0x21c] sm:$0xf]
        %v1638 = vld [vmem:[#allocation7 + $0x220] sm:$0xf]
        %v1639 = vld [vmem:[#allocation7 + $0x224] sm:$0xf]
        %v1640 = vld [vmem:[#allocation7 + $0x228] sm:$0xf]
        %v1641 = vld [vmem:[#allocation7 + $0x22c] sm:$0xf]
        %v1642 = vld [vmem:[#allocation7 + $0x230] sm:$0xf]
        %v1643 = vld [vmem:[#allocation7 + $0x234] sm:$0xf]
        %v1644 = vld [vmem:[#allocation7 + $0x238] sm:$0xf]
        %v1645 = vld [vmem:[#allocation7 + $0x23c] sm:$0xf]
        %v1646 = vld [vmem:[%s6] sm:$0x1]
        %v1648 = vlaneseq
        %v1649 = vshrl.u32 %v1648, 7
        %v1650 = vsub.s32 0, %v1649
        %v1651 = vrot.slane %v1646, %v1650
        %v1797 = vunpack.c.l.b16 %v1502
        %v1798 = vunpack.c.l.b16 %v1503
        %v1799 = vunpack.c.l.b16 %v1504
        %v1800 = vunpack.c.l.b16 %v1505
        %v1801 = vunpack.c.l.b16 %v1506
        %v1802 = vunpack.c.l.b16 %v1507
        %v1803 = vunpack.c.l.b16 %v1508
        %v1804 = vunpack.c.l.b16 %v1509
        %v1805 = vunpack.c.l.b16 %v1510
        %v1806 = vunpack.c.l.b16 %v1511
        %v1807 = vunpack.c.l.b16 %v1512
        %v1808 = vunpack.c.l.b16 %v1513
        %v1809 = vunpack.c.l.b16 %v1514
        %v1810 = vunpack.c.l.b16 %v1515
        %v1811 = vunpack.c.l.b16 %v1516
        %v1812 = vunpack.c.l.b16 %v1517
        %v1813 = vunpack.c.l.b16 %v1518
        %v1814 = vunpack.c.l.b16 %v1519
        %v1815 = vunpack.c.l.b16 %v1520
        %v1816 = vunpack.c.l.b16 %v1521
        %v1817 = vunpack.c.l.b16 %v1522
        %v1818 = vunpack.c.l.b16 %v1523
        %v1819 = vunpack.c.l.b16 %v1524
        %v1820 = vunpack.c.l.b16 %v1525
        %v1821 = vunpack.c.l.b16 %v1526
        %v1822 = vunpack.c.l.b16 %v1527
        %v1823 = vunpack.c.l.b16 %v1528
        %v1824 = vunpack.c.l.b16 %v1529
        %v1825 = vunpack.c.l.b16 %v1530
        %v1826 = vunpack.c.l.b16 %v1531
        %v1827 = vunpack.c.l.b16 %v1532
        %v1828 = vunpack.c.l.b16 %v1533
        %v1829 = vunpack.c.l.b16 %v1534
        %v1830 = vunpack.c.l.b16 %v1535
        %v1831 = vunpack.c.l.b16 %v1536
        %v1832 = vunpack.c.l.b16 %v1537
        %v1833 = vunpack.c.l.b16 %v1538
        %v1834 = vunpack.c.l.b16 %v1539
        %v1835 = vunpack.c.l.b16 %v1540
        %v1836 = vunpack.c.l.b16 %v1541
        %v1837 = vunpack.c.l.b16 %v1542
        %v1838 = vunpack.c.l.b16 %v1543
        %v1839 = vunpack.c.l.b16 %v1544
        %v1840 = vunpack.c.l.b16 %v1545
        %v1841 = vunpack.c.l.b16 %v1546
        %v1842 = vunpack.c.l.b16 %v1547
        %v1843 = vunpack.c.l.b16 %v1548
        %v1844 = vunpack.c.l.b16 %v1549
        %v1845 = vunpack.c.l.b16 %v1550
        %v1846 = vunpack.c.l.b16 %v1551
        %v1847 = vunpack.c.l.b16 %v1552
        %v1848 = vunpack.c.l.b16 %v1553
        %v1849 = vunpack.c.l.b16 %v1554
        %v1850 = vunpack.c.l.b16 %v1555
        %v1851 = vunpack.c.l.b16 %v1556
        %v1852 = vunpack.c.l.b16 %v1557
        %v1853 = vunpack.c.l.b16 %v1558
        %v1854 = vunpack.c.l.b16 %v1559
        %v1855 = vunpack.c.l.b16 %v1560
        %v1856 = vunpack.c.l.b16 %v1561
        %v1857 = vunpack.c.l.b16 %v1562
        %v1858 = vunpack.c.l.b16 %v1563
        %v1859 = vunpack.c.l.b16 %v1564
        %v1860 = vunpack.c.l.b16 %v1565
        %v1861 = vunpack.c.l.b16 %v1566
        %v1862 = vunpack.c.l.b16 %v1567
        %v1863 = vunpack.c.l.b16 %v1568
        %v1864 = vunpack.c.l.b16 %v1569
        %v1865 = vunpack.c.l.b16 %v1570
        %v1866 = vunpack.c.l.b16 %v1571
        %v1867 = vunpack.c.l.b16 %v1572
        %v1868 = vunpack.c.l.b16 %v1573
        %v1869 = vunpack.c.l.b16 %v1574
        %v1870 = vunpack.c.l.b16 %v1575
        %v1871 = vunpack.c.l.b16 %v1576
        %v1872 = vunpack.c.l.b16 %v1577
        %v1873 = vunpack.c.l.b16 %v1578
        %v1874 = vunpack.c.l.b16 %v1579
        %v1875 = vunpack.c.l.b16 %v1580
        %v1876 = vunpack.c.l.b16 %v1581
        %v1877 = vunpack.c.l.b16 %v1582
        %v1878 = vunpack.c.l.b16 %v1583
        %v1879 = vunpack.c.l.b16 %v1584
        %v1880 = vunpack.c.l.b16 %v1585
        %v1881 = vunpack.c.l.b16 %v1586
        %v1882 = vunpack.c.l.b16 %v1587
        %v1883 = vunpack.c.l.b16 %v1588
        %v1884 = vunpack.c.l.b16 %v1589
        %v1885 = vunpack.c.l.b16 %v1590
        %v1886 = vunpack.c.l.b16 %v1591
        %v1887 = vunpack.c.l.b16 %v1592
        %v1888 = vunpack.c.l.b16 %v1593
        %v1889 = vunpack.c.l.b16 %v1594
        %v1890 = vunpack.c.l.b16 %v1595
        %v1891 = vunpack.c.l.b16 %v1596
        %v1892 = vunpack.c.l.b16 %v1597
        %v1893 = vunpack.c.l.b16 %v1598
        %v1894 = vunpack.c.l.b16 %v1599
        %v1895 = vunpack.c.l.b16 %v1600
        %v1896 = vunpack.c.l.b16 %v1601
        %v1897 = vunpack.c.l.b16 %v1602
        %v1898 = vunpack.c.l.b16 %v1603
        %v1899 = vunpack.c.l.b16 %v1604
        %v1900 = vunpack.c.l.b16 %v1605
        %v1901 = vunpack.c.l.b16 %v1606
        %v1902 = vunpack.c.l.b16 %v1607
        %v1903 = vunpack.c.l.b16 %v1608
        %v1904 = vunpack.c.l.b16 %v1609
        %v1905 = vunpack.c.l.b16 %v1610
        %v1906 = vunpack.c.l.b16 %v1611
        %v1907 = vunpack.c.l.b16 %v1612
        %v1908 = vunpack.c.l.b16 %v1613
        %v1909 = vunpack.c.l.b16 %v1614
        %v1910 = vunpack.c.l.b16 %v1615
        %v1911 = vunpack.c.l.b16 %v1616
        %v1912 = vunpack.c.l.b16 %v1617
        %v1913 = vunpack.c.l.b16 %v1618
        %v1914 = vunpack.c.l.b16 %v1619
        %v1915 = vunpack.c.l.b16 %v1620
        %v1916 = vunpack.c.l.b16 %v1621
        %v1917 = vunpack.c.l.b16 %v1622
        %v1918 = vunpack.c.l.b16 %v1623
        %v1919 = vunpack.c.l.b16 %v1624
        %v1920 = vunpack.c.l.b16 %v1625
        %v1921 = vunpack.c.l.b16 %v1626
        %v1922 = vunpack.c.l.b16 %v1627
        %v1923 = vunpack.c.l.b16 %v1628
        %v1924 = vunpack.c.l.b16 %v1629
        %v1925 = vunpack.c.l.b16 %v1630
        %v1926 = vunpack.c.l.b16 %v1631
        %v1927 = vunpack.c.l.b16 %v1632
        %v1928 = vunpack.c.l.b16 %v1633
        %v1929 = vunpack.c.l.b16 %v1634
        %v1930 = vunpack.c.l.b16 %v1635
        %v1931 = vunpack.c.l.b16 %v1636
        %v1932 = vunpack.c.l.b16 %v1637
        %v1933 = vunpack.c.l.b16 %v1638
        %v1934 = vunpack.c.l.b16 %v1639
        %v1935 = vunpack.c.l.b16 %v1640
        %v1936 = vunpack.c.l.b16 %v1641
        %v1937 = vunpack.c.l.b16 %v1642
        %v1938 = vunpack.c.l.b16 %v1643
        %v1939 = vunpack.c.l.b16 %v1644
        %v1940 = vunpack.c.l.b16 %v1645
        %v1941 = vpack.c.b16 %v1798, %v1797
        %v1942 = vpack.c.b16 %v1800, %v1799
        %v1943 = vpack.c.b16 %v1802, %v1801
        %v1944 = vpack.c.b16 %v1804, %v1803
        %v1945 = vpack.c.b16 %v1806, %v1805
        %v1946 = vpack.c.b16 %v1808, %v1807
        %v1947 = vpack.c.b16 %v1810, %v1809
        %v1948 = vpack.c.b16 %v1812, %v1811
        %v1949 = vpack.c.b16 %v1814, %v1813
        %v1950 = vpack.c.b16 %v1816, %v1815
        %v1951 = vpack.c.b16 %v1818, %v1817
        %v1952 = vpack.c.b16 %v1820, %v1819
        %v1953 = vpack.c.b16 %v1822, %v1821
        %v1954 = vpack.c.b16 %v1824, %v1823
        %v1955 = vpack.c.b16 %v1826, %v1825
        %v1956 = vpack.c.b16 %v1828, %v1827
        %v1957 = vpack.c.b16 %v1830, %v1829
        %v1958 = vpack.c.b16 %v1832, %v1831
        %v1959 = vpack.c.b16 %v1834, %v1833
        %v1960 = vpack.c.b16 %v1836, %v1835
        %v1961 = vpack.c.b16 %v1838, %v1837
        %v1962 = vpack.c.b16 %v1840, %v1839
        %v1963 = vpack.c.b16 %v1842, %v1841
        %v1964 = vpack.c.b16 %v1844, %v1843
        %v1965 = vpack.c.b16 %v1846, %v1845
        %v1966 = vpack.c.b16 %v1848, %v1847
        %v1967 = vpack.c.b16 %v1850, %v1849
        %v1968 = vpack.c.b16 %v1852, %v1851
        %v1969 = vpack.c.b16 %v1854, %v1853
        %v1970 = vpack.c.b16 %v1856, %v1855
        %v1971 = vpack.c.b16 %v1858, %v1857
        %v1972 = vpack.c.b16 %v1860, %v1859
        %v1973 = vpack.c.b16 %v1862, %v1861
        %v1974 = vpack.c.b16 %v1864, %v1863
        %v1975 = vpack.c.b16 %v1866, %v1865
        %v1976 = vpack.c.b16 %v1868, %v1867
        %v1977 = vpack.c.b16 %v1870, %v1869
        %v1978 = vpack.c.b16 %v1872, %v1871
        %v1979 = vpack.c.b16 %v1874, %v1873
        %v1980 = vpack.c.b16 %v1876, %v1875
        %v1981 = vpack.c.b16 %v1878, %v1877
        %v1982 = vpack.c.b16 %v1880, %v1879
        %v1983 = vpack.c.b16 %v1882, %v1881
        %v1984 = vpack.c.b16 %v1884, %v1883
        %v1985 = vpack.c.b16 %v1886, %v1885
        %v1986 = vpack.c.b16 %v1888, %v1887
        %v1987 = vpack.c.b16 %v1890, %v1889
        %v1988 = vpack.c.b16 %v1892, %v1891
        %v1989 = vpack.c.b16 %v1894, %v1893
        %v1990 = vpack.c.b16 %v1896, %v1895
        %v1991 = vpack.c.b16 %v1898, %v1897
        %v1992 = vpack.c.b16 %v1900, %v1899
        %v1993 = vpack.c.b16 %v1902, %v1901
        %v1994 = vpack.c.b16 %v1904, %v1903
        %v1995 = vpack.c.b16 %v1906, %v1905
        %v1996 = vpack.c.b16 %v1908, %v1907
        %v1997 = vpack.c.b16 %v1910, %v1909
        %v1998 = vpack.c.b16 %v1912, %v1911
        %v1999 = vpack.c.b16 %v1914, %v1913
        %v2000 = vpack.c.b16 %v1916, %v1915
        %v2001 = vpack.c.b16 %v1918, %v1917
        %v2002 = vpack.c.b16 %v1920, %v1919
        %v2003 = vpack.c.b16 %v1922, %v1921
        %v2004 = vpack.c.b16 %v1924, %v1923
        %v2005 = vpack.c.b16 %v1926, %v1925
        %v2006 = vpack.c.b16 %v1928, %v1927
        %v2007 = vpack.c.b16 %v1930, %v1929
        %v2008 = vpack.c.b16 %v1932, %v1931
        %v2009 = vpack.c.b16 %v1934, %v1933
        %v2010 = vpack.c.b16 %v1936, %v1935
        %v2011 = vpack.c.b16 %v1938, %v1937
        %v2012 = vpack.c.b16 %v1940, %v1939
        %2085 = vmatprep.subr.bf16.mxu0 0
        %2086 = vmatpush1.bf16.msra.mxu0 %v1948
        %2087 = vmatprep.subr.bf16.mxu0 0
        %2088 = vmatpush1.bf16.msra.mxu0 %v1947
        %2089 = vmatprep.subr.bf16.mxu0 0
        %2090 = vmatpush1.bf16.msra.mxu0 %v1946
        %2091 = vmatprep.subr.bf16.mxu0 0
        %2092 = vmatpush1.bf16.msra.mxu0 %v1945
        %2093 = vmatprep.subr.bf16.mxu0 0
        %2094 = vmatpush1.bf16.msra.mxu0 %v1944
        %2095 = vmatprep.subr.bf16.mxu0 0
        %2096 = vmatpush1.bf16.msra.mxu0 %v1943
        %2097 = vmatprep.subr.bf16.mxu0 0
        %2098 = vmatpush1.bf16.msra.mxu0 %v1942
        %2099 = vmatprep.subr.bf16.mxu0 0
        %2100 = vmatpush1.bf16.msra.mxu0 %v1941
        %2101 = vmatprep.subr.bf16.mxu0 0
        %2102 = vmatpush2.bf16.msra.mxu0 %v1956
        %2103 = vmatprep.subr.bf16.mxu0 0
        %2104 = vmatpush2.bf16.msra.mxu0 %v1955
        %2105 = vmatprep.subr.bf16.mxu0 0
        %2106 = vmatpush2.bf16.msra.mxu0 %v1954
        %2107 = vmatprep.subr.bf16.mxu0 0
        %2108 = vmatpush2.bf16.msra.mxu0 %v1953
        %2109 = vmatprep.subr.bf16.mxu0 0
        %2110 = vmatpush2.bf16.msra.mxu0 %v1952
        %2111 = vmatprep.subr.bf16.mxu0 0
        %2112 = vmatpush2.bf16.msra.mxu0 %v1951
        %2113 = vmatprep.subr.bf16.mxu0 0
        %2114 = vmatpush2.bf16.msra.mxu0 %v1950
        %2115 = vmatprep.subr.bf16.mxu0 0
        %2116 = vmatpush2.bf16.msra.mxu0 %v1949
        %2117 = vmatprep.mubr.bf16.mxu0 %v1453
        %2118 = vmatmul.mubr.bf16.gmra.mxu0 %v1453
        %v2119 = vpop.f32.mrf.mxu0
        %v2120 = vadd.f32 %v1651, %v2119
        %v2121 = vpop.f32.mrf.mxu0
        %v2122 = vpop.f32.mrf.mxu0
        %v2123 = vadd.f32 %v1651, %v2122
        %v2124 = vpop.f32.mrf.mxu0
        %2125 = vmatprep.mubr.bf16.mxu0 %v1455
        %2126 = vmatmul.mubr.bf16.gmra.mxu0 %v1454
        %v2127 = vpop.f32.mrf.mxu0
        %v2128 = vadd.f32 %v1651, %v2127
        %v2129 = vpop.f32.mrf.mxu0
        %v2130 = vpop.f32.mrf.mxu0
        %v2131 = vadd.f32 %v1651, %v2130
        %v2132 = vpop.f32.mrf.mxu0
        %2133 = vmatprep.mubr.bf16.mxu0 %v1458
        %2134 = vmatmul.mubr.bf16.gmra.mxu0 %v1457
        %v2135 = vpop.f32.mrf.mxu0
        %v2136 = vadd.f32 %v1651, %v2135
        %v2137 = vpop.f32.mrf.mxu0
        %v2138 = vpop.f32.mrf.mxu0
        %v2139 = vadd.f32 %v1651, %v2138
        %v2140 = vpop.f32.mrf.mxu0
        %2141 = vmatprep.mubr.bf16.mxu0 %v1461
        %2142 = vmatmul.mubr.bf16.gmra.mxu0 %v1460
        %v2143 = vpop.f32.mrf.mxu0
        %v2144 = vadd.f32 %v1651, %v2143
        %v2145 = vpop.f32.mrf.mxu0
        %v2146 = vpop.f32.mrf.mxu0
        %v2147 = vadd.f32 %v1651, %v2146
        %v2148 = vpop.f32.mrf.mxu0
        %2149 = vmatprep.mubr.bf16.mxu0 %v1464
        %2150 = vmatmul.mubr.bf16.gmra.mxu0 %v1463
        %v2151 = vpop.f32.mrf.mxu0
        %v2152 = vadd.f32 %v1651, %v2151
        %v2153 = vpop.f32.mrf.mxu0
        %v2154 = vpop.f32.mrf.mxu0
        %v2155 = vadd.f32 %v1651, %v2154
        %v2156 = vpop.f32.mrf.mxu0
        %2157 = vmatprep.mubr.bf16.mxu0 %v1467
        %2158 = vmatmul.mubr.bf16.gmra.mxu0 %v1466
        %v2159 = vpop.f32.mrf.mxu0
        %v2160 = vadd.f32 %v1651, %v2159
        %v2161 = vpop.f32.mrf.mxu0
        %v2162 = vpop.f32.mrf.mxu0
        %v2163 = vadd.f32 %v1651, %v2162
        %v2164 = vpop.f32.mrf.mxu0
        %2165 = vmatprep.mubr.bf16.mxu0 %v1470
        %2166 = vmatmul.mubr.bf16.gmra.mxu0 %v1469
        %v2167 = vpop.f32.mrf.mxu0
        %v2168 = vadd.f32 %v1651, %v2167
        %v2169 = vpop.f32.mrf.mxu0
        %v2170 = vpop.f32.mrf.mxu0
        %v2171 = vadd.f32 %v1651, %v2170
        %v2172 = vpop.f32.mrf.mxu0
        %2173 = vmatprep.mubr.bf16.mxu0 %v1473
        %2174 = vmatmul.mubr.bf16.gmra.mxu0 %v1472
        %v2175 = vpop.f32.mrf.mxu0
        %v2176 = vadd.f32 %v1651, %v2175
        %v2177 = vpop.f32.mrf.mxu0
        %v2178 = vpop.f32.mrf.mxu0
        %v2179 = vadd.f32 %v1651, %v2178
        %v2180 = vpop.f32.mrf.mxu0
        %2181 = vmatprep.mubr.bf16.mxu0 %v1476
        %2182 = vmatmul.mubr.bf16.gmra.mxu0 %v1475
        %v2183 = vpop.f32.mrf.mxu0
        %v2184 = vadd.f32 %v1651, %v2183
        %v2185 = vpop.f32.mrf.mxu0
        %v2186 = vpop.f32.mrf.mxu0
        %v2187 = vadd.f32 %v1651, %v2186
        %v2188 = vpop.f32.mrf.mxu0
        %2189 = vmatprep.mubr.bf16.mxu0 %v1479
        %2190 = vmatmul.mubr.bf16.gmra.mxu0 %v1478
        %v2191 = vpop.f32.mrf.mxu0
        %v2192 = vadd.f32 %v1651, %v2191
        %v2193 = vpop.f32.mrf.mxu0
        %v2194 = vpop.f32.mrf.mxu0
        %v2195 = vadd.f32 %v1651, %v2194
        %v2196 = vpop.f32.mrf.mxu0
        %2197 = vmatprep.mubr.bf16.mxu0 %v1482
        %2198 = vmatmul.mubr.bf16.gmra.mxu0 %v1481
        %v2199 = vpop.f32.mrf.mxu0
        %v2200 = vadd.f32 %v1651, %v2199
        %v2201 = vpop.f32.mrf.mxu0
        %v2202 = vpop.f32.mrf.mxu0
        %v2203 = vadd.f32 %v1651, %v2202
        %v2204 = vpop.f32.mrf.mxu0
        %2205 = vmatprep.mubr.bf16.mxu0 %v1485
        %2206 = vmatmul.mubr.bf16.gmra.mxu0 %v1484
        %v2207 = vpop.f32.mrf.mxu0
        %v2208 = vadd.f32 %v1651, %v2207
        %v2209 = vpop.f32.mrf.mxu0
        %v2210 = vpop.f32.mrf.mxu0
        %v2211 = vadd.f32 %v1651, %v2210
        %v2212 = vpop.f32.mrf.mxu0
        %2213 = vmatprep.mubr.bf16.mxu0 %v1488
        %2214 = vmatmul.mubr.bf16.gmra.mxu0 %v1487
        %v2215 = vpop.f32.mrf.mxu0
        %v2216 = vadd.f32 %v1651, %v2215
        %v2217 = vpop.f32.mrf.mxu0
        %v2218 = vpop.f32.mrf.mxu0
        %v2219 = vadd.f32 %v1651, %v2218
        %v2220 = vpop.f32.mrf.mxu0
        %2221 = vmatprep.mubr.bf16.mxu0 %v1491
        %2222 = vmatmul.mubr.bf16.gmra.mxu0 %v1490
        %v2223 = vpop.f32.mrf.mxu0
        %v2224 = vadd.f32 %v1651, %v2223
        %v2225 = vpop.f32.mrf.mxu0
        %v2226 = vpop.f32.mrf.mxu0
        %v2227 = vadd.f32 %v1651, %v2226
        %v2228 = vpop.f32.mrf.mxu0
        %2229 = vmatprep.mubr.bf16.mxu0 %v1494
        %2230 = vmatmul.mubr.bf16.gmra.mxu0 %v1493
        %v2231 = vpop.f32.mrf.mxu0
        %v2232 = vadd.f32 %v1651, %v2231
        %v2233 = vpop.f32.mrf.mxu0
        %v2234 = vpop.f32.mrf.mxu0
        %v2235 = vadd.f32 %v1651, %v2234
        %v2236 = vpop.f32.mrf.mxu0
        %2237 = vmatprep.mubr.bf16.mxu0 %v1497
        %2238 = vmatmul.mubr.bf16.gmra.mxu0 %v1496
        %v2239 = vpop.f32.mrf.mxu0
        %v2240 = vadd.f32 %v1651, %v2239
        %v2241 = vpop.f32.mrf.mxu0
        %v2242 = vpop.f32.mrf.mxu0
        %v2243 = vadd.f32 %v1651, %v2242
        %v2244 = vpop.f32.mrf.mxu0
        %2245 = vdwg.mxu0
        %2246 = vmatprep.subr.bf16.mxu0 0
        %2247 = vmatpush1.bf16.msra.mxu0 %v1964
        %2248 = vmatprep.subr.bf16.mxu0 0
        %2249 = vmatpush1.bf16.msra.mxu0 %v1963
        %2250 = vmatprep.subr.bf16.mxu0 0
        %2251 = vmatpush1.bf16.msra.mxu0 %v1962
        %2252 = vmatprep.subr.bf16.mxu0 0
        %2253 = vmatpush1.bf16.msra.mxu0 %v1961
        %2254 = vmatprep.subr.bf16.mxu0 0
        %2255 = vmatpush1.bf16.msra.mxu0 %v1960
        %2256 = vmatprep.subr.bf16.mxu0 0
        %2257 = vmatpush1.bf16.msra.mxu0 %v1959
        %2258 = vmatprep.subr.bf16.mxu0 0
        %2259 = vmatpush1.bf16.msra.mxu0 %v1958
        %2260 = vmatprep.subr.bf16.mxu0 0
        %2261 = vmatpush1.bf16.msra.mxu0 %v1957
        %2262 = vmatprep.subr.bf16.mxu0 0
        %2263 = vmatpush2.bf16.msra.mxu0 %v1972
        %2264 = vmatprep.subr.bf16.mxu0 0
        %2265 = vmatpush2.bf16.msra.mxu0 %v1971
        %2266 = vmatprep.subr.bf16.mxu0 0
        %2267 = vmatpush2.bf16.msra.mxu0 %v1970
        %2268 = vmatprep.subr.bf16.mxu0 0
        %2269 = vmatpush2.bf16.msra.mxu0 %v1969
        %2270 = vmatprep.subr.bf16.mxu0 0
        %2271 = vmatpush2.bf16.msra.mxu0 %v1968
        %2272 = vmatprep.subr.bf16.mxu0 0
        %2273 = vmatpush2.bf16.msra.mxu0 %v1967
        %2274 = vmatprep.subr.bf16.mxu0 0
        %2275 = vmatpush2.bf16.msra.mxu0 %v1966
        %2276 = vmatprep.subr.bf16.mxu0 0
        %2277 = vmatpush2.bf16.msra.mxu0 %v1965
        %2278 = vmatprep.mubr.bf16.mxu0 %v1454
        %2279 = vmatmul.mubr.bf16.gmra.mxu0 %v1453
        %v2280 = vpop.f32.mrf.mxu0
        %v2281 = vadd.f32 %v2120, %v2280
        %v2282 = vpop.f32.mrf.mxu0
        %v2283 = vpop.f32.mrf.mxu0
        %v2284 = vadd.f32 %v2123, %v2283
        %v2285 = vpop.f32.mrf.mxu0
        %2286 = vmatprep.mubr.bf16.mxu0 %v1457
        %2287 = vmatmul.mubr.bf16.gmra.mxu0 %v1456
        %v2288 = vpop.f32.mrf.mxu0
        %v2289 = vadd.f32 %v2128, %v2288
        %v2290 = vpop.f32.mrf.mxu0
        %v2291 = vpop.f32.mrf.mxu0
        %v2292 = vadd.f32 %v2131, %v2291
        %v2293 = vpop.f32.mrf.mxu0
        %2294 = vmatprep.mubr.bf16.mxu0 %v1460
        %2295 = vmatmul.mubr.bf16.gmra.mxu0 %v1459
        %v2296 = vpop.f32.mrf.mxu0
        %v2297 = vadd.f32 %v2136, %v2296
        %v2298 = vpop.f32.mrf.mxu0
        %v2299 = vpop.f32.mrf.mxu0
        %v2300 = vadd.f32 %v2139, %v2299
        %v2301 = vpop.f32.mrf.mxu0
        %2302 = vmatprep.mubr.bf16.mxu0 %v1463
        %2303 = vmatmul.mubr.bf16.gmra.mxu0 %v1462
        %v2304 = vpop.f32.mrf.mxu0
        %v2305 = vadd.f32 %v2144, %v2304
        %v2306 = vpop.f32.mrf.mxu0
        %v2307 = vpop.f32.mrf.mxu0
        %v2308 = vadd.f32 %v2147, %v2307
        %v2309 = vpop.f32.mrf.mxu0
        %2310 = vmatprep.mubr.bf16.mxu0 %v1466
        %2311 = vmatmul.mubr.bf16.gmra.mxu0 %v1465
        %v2312 = vpop.f32.mrf.mxu0
        %v2313 = vadd.f32 %v2152, %v2312
        %v2314 = vpop.f32.mrf.mxu0
        %v2315 = vpop.f32.mrf.mxu0
        %v2316 = vadd.f32 %v2155, %v2315
        %v2317 = vpop.f32.mrf.mxu0
        %2318 = vmatprep.mubr.bf16.mxu0 %v1469
        %2319 = vmatmul.mubr.bf16.gmra.mxu0 %v1468
        %v2320 = vpop.f32.mrf.mxu0
        %v2321 = vadd.f32 %v2160, %v2320
        %v2322 = vpop.f32.mrf.mxu0
        %v2323 = vpop.f32.mrf.mxu0
        %v2324 = vadd.f32 %v2163, %v2323
        %v2325 = vpop.f32.mrf.mxu0
        %2326 = vmatprep.mubr.bf16.mxu0 %v1472
        %2327 = vmatmul.mubr.bf16.gmra.mxu0 %v1471
        %v2328 = vpop.f32.mrf.mxu0
        %v2329 = vadd.f32 %v2168, %v2328
        %v2330 = vpop.f32.mrf.mxu0
        %v2331 = vpop.f32.mrf.mxu0
        %v2332 = vadd.f32 %v2171, %v2331
        %v2333 = vpop.f32.mrf.mxu0
        %2334 = vmatprep.mubr.bf16.mxu0 %v1475
        %2335 = vmatmul.mubr.bf16.gmra.mxu0 %v1474
        %v2336 = vpop.f32.mrf.mxu0
        %v2337 = vadd.f32 %v2176, %v2336
        %v2338 = vpop.f32.mrf.mxu0
        %v2339 = vpop.f32.mrf.mxu0
        %v2340 = vadd.f32 %v2179, %v2339
        %v2341 = vpop.f32.mrf.mxu0
        %2342 = vmatprep.mubr.bf16.mxu0 %v1478
        %2343 = vmatmul.mubr.bf16.gmra.mxu0 %v1477
        %v2344 = vpop.f32.mrf.mxu0
        %v2345 = vadd.f32 %v2184, %v2344
        %v2346 = vpop.f32.mrf.mxu0
        %v2347 = vpop.f32.mrf.mxu0
        %v2348 = vadd.f32 %v2187, %v2347
        %v2349 = vpop.f32.mrf.mxu0
        %2350 = vmatprep.mubr.bf16.mxu0 %v1481
        %2351 = vmatmul.mubr.bf16.gmra.mxu0 %v1480
        %v2352 = vpop.f32.mrf.mxu0
        %v2353 = vadd.f32 %v2192, %v2352
        %v2354 = vpop.f32.mrf.mxu0
        %v2355 = vpop.f32.mrf.mxu0
        %v2356 = vadd.f32 %v2195, %v2355
        %v2357 = vpop.f32.mrf.mxu0
        %2358 = vmatprep.mubr.bf16.mxu0 %v1484
        %2359 = vmatmul.mubr.bf16.gmra.mxu0 %v1483
        %v2360 = vpop.f32.mrf.mxu0
        %v2361 = vadd.f32 %v2200, %v2360
        %v2362 = vpop.f32.mrf.mxu0
        %v2363 = vpop.f32.mrf.mxu0
        %v2364 = vadd.f32 %v2203, %v2363
        %v2365 = vpop.f32.mrf.mxu0
        %2366 = vmatprep.mubr.bf16.mxu0 %v1487
        %2367 = vmatmul.mubr.bf16.gmra.mxu0 %v1486
        %v2368 = vpop.f32.mrf.mxu0
        %v2369 = vadd.f32 %v2208, %v2368
        %v2370 = vpop.f32.mrf.mxu0
        %v2371 = vpop.f32.mrf.mxu0
        %v2372 = vadd.f32 %v2211, %v2371
        %v2373 = vpop.f32.mrf.mxu0
        %2374 = vmatprep.mubr.bf16.mxu0 %v1490
        %2375 = vmatmul.mubr.bf16.gmra.mxu0 %v1489
        %v2376 = vpop.f32.mrf.mxu0
        %v2377 = vadd.f32 %v2216, %v2376
        %v2378 = vpop.f32.mrf.mxu0
        %v2379 = vpop.f32.mrf.mxu0
        %v2380 = vadd.f32 %v2219, %v2379
        %v2381 = vpop.f32.mrf.mxu0
        %2382 = vmatprep.mubr.bf16.mxu0 %v1493
        %2383 = vmatmul.mubr.bf16.gmra.mxu0 %v1492
        %v2384 = vpop.f32.mrf.mxu0
        %v2385 = vadd.f32 %v2224, %v2384
        %v2386 = vpop.f32.mrf.mxu0
        %v2387 = vpop.f32.mrf.mxu0
        %v2388 = vadd.f32 %v2227, %v2387
        %v2389 = vpop.f32.mrf.mxu0
        %2390 = vmatprep.mubr.bf16.mxu0 %v1496
        %2391 = vmatmul.mubr.bf16.gmra.mxu0 %v1495
        %v2392 = vpop.f32.mrf.mxu0
        %v2393 = vadd.f32 %v2232, %v2392
        %v2394 = vpop.f32.mrf.mxu0
        %v2395 = vpop.f32.mrf.mxu0
        %v2396 = vadd.f32 %v2235, %v2395
        %v2397 = vpop.f32.mrf.mxu0
        %2398 = vmatprep.mubr.bf16.mxu0 %v1499
        %2399 = vmatmul.mubr.bf16.gmra.mxu0 %v1498
        %v2400 = vpop.f32.mrf.mxu0
        %v2401 = vadd.f32 %v2240, %v2400
        %v2402 = vpop.f32.mrf.mxu0
        %v2403 = vpop.f32.mrf.mxu0
        %v2404 = vadd.f32 %v2243, %v2403
        %v2405 = vpop.f32.mrf.mxu0
        %2406 = vdwg.mxu0
        %2407 = vmatprep.subr.bf16.mxu0 0
        %2408 = vmatpush1.bf16.msra.mxu0 %v1980
        %2409 = vmatprep.subr.bf16.mxu0 0
        %2410 = vmatpush1.bf16.msra.mxu0 %v1979
        %2411 = vmatprep.subr.bf16.mxu0 0
        %2412 = vmatpush1.bf16.msra.mxu0 %v1978
        %2413 = vmatprep.subr.bf16.mxu0 0
        %2414 = vmatpush1.bf16.msra.mxu0 %v1977
        %2415 = vmatprep.subr.bf16.mxu0 0
        %2416 = vmatpush1.bf16.msra.mxu0 %v1976
        %2417 = vmatprep.subr.bf16.mxu0 0
        %2418 = vmatpush1.bf16.msra.mxu0 %v1975
        %2419 = vmatprep.subr.bf16.mxu0 0
        %2420 = vmatpush1.bf16.msra.mxu0 %v1974
        %2421 = vmatprep.subr.bf16.mxu0 0
        %2422 = vmatpush1.bf16.msra.mxu0 %v1973
        %2423 = vmatprep.subr.bf16.mxu0 0
        %2424 = vmatpush2.bf16.msra.mxu0 %v1988
        %2425 = vmatprep.subr.bf16.mxu0 0
        %2426 = vmatpush2.bf16.msra.mxu0 %v1987
        %2427 = vmatprep.subr.bf16.mxu0 0
        %2428 = vmatpush2.bf16.msra.mxu0 %v1986
        %2429 = vmatprep.subr.bf16.mxu0 0
        %2430 = vmatpush2.bf16.msra.mxu0 %v1985
        %2431 = vmatprep.subr.bf16.mxu0 0
        %2432 = vmatpush2.bf16.msra.mxu0 %v1984
        %2433 = vmatprep.subr.bf16.mxu0 0
        %2434 = vmatpush2.bf16.msra.mxu0 %v1983
        %2435 = vmatprep.subr.bf16.mxu0 0
        %2436 = vmatpush2.bf16.msra.mxu0 %v1982
        %2437 = vmatprep.subr.bf16.mxu0 0
        %2438 = vmatpush2.bf16.msra.mxu0 %v1981
        %2439 = vmatprep.mubr.bf16.mxu0 %v1456
        %2440 = vmatmul.mubr.bf16.gmra.mxu0 %v1455
        %v2441 = vpop.f32.mrf.mxu0
        %v2442 = vadd.f32 %v2281, %v2441
        %v2443 = vpop.f32.mrf.mxu0
        %v2444 = vpop.f32.mrf.mxu0
        %v2445 = vadd.f32 %v2284, %v2444
        %v2446 = vpop.f32.mrf.mxu0
        %2447 = vmatprep.mubr.bf16.mxu0 %v1459
        %2448 = vmatmul.mubr.bf16.gmra.mxu0 %v1458
        %v2449 = vpop.f32.mrf.mxu0
        %v2450 = vadd.f32 %v2289, %v2449
        %v2451 = vpop.f32.mrf.mxu0
        %v2452 = vpop.f32.mrf.mxu0
        %v2453 = vadd.f32 %v2292, %v2452
        %v2454 = vpop.f32.mrf.mxu0
        %2455 = vmatprep.mubr.bf16.mxu0 %v1462
        %2456 = vmatmul.mubr.bf16.gmra.mxu0 %v1461
        %v2457 = vpop.f32.mrf.mxu0
        %v2458 = vadd.f32 %v2297, %v2457
        %v2459 = vpop.f32.mrf.mxu0
        %v2460 = vpop.f32.mrf.mxu0
        %v2461 = vadd.f32 %v2300, %v2460
        %v2462 = vpop.f32.mrf.mxu0
        %2463 = vmatprep.mubr.bf16.mxu0 %v1465
        %2464 = vmatmul.mubr.bf16.gmra.mxu0 %v1464
        %v2465 = vpop.f32.mrf.mxu0
        %v2466 = vadd.f32 %v2305, %v2465
        %v2467 = vpop.f32.mrf.mxu0
        %v2468 = vpop.f32.mrf.mxu0
        %v2469 = vadd.f32 %v2308, %v2468
        %v2470 = vpop.f32.mrf.mxu0
        %2471 = vmatprep.mubr.bf16.mxu0 %v1468
        %2472 = vmatmul.mubr.bf16.gmra.mxu0 %v1467
        %v2473 = vpop.f32.mrf.mxu0
        %v2474 = vadd.f32 %v2313, %v2473
        %v2475 = vpop.f32.mrf.mxu0
        %v2476 = vpop.f32.mrf.mxu0
        %v2477 = vadd.f32 %v2316, %v2476
        %v2478 = vpop.f32.mrf.mxu0
        %2479 = vmatprep.mubr.bf16.mxu0 %v1471
        %2480 = vmatmul.mubr.bf16.gmra.mxu0 %v1470
        %v2481 = vpop.f32.mrf.mxu0
        %v2482 = vadd.f32 %v2321, %v2481
        %v2483 = vpop.f32.mrf.mxu0
        %v2484 = vpop.f32.mrf.mxu0
        %v2485 = vadd.f32 %v2324, %v2484
        %v2486 = vpop.f32.mrf.mxu0
        %2487 = vmatprep.mubr.bf16.mxu0 %v1474
        %2488 = vmatmul.mubr.bf16.gmra.mxu0 %v1473
        %v2489 = vpop.f32.mrf.mxu0
        %v2490 = vadd.f32 %v2329, %v2489
        %v2491 = vpop.f32.mrf.mxu0
        %v2492 = vpop.f32.mrf.mxu0
        %v2493 = vadd.f32 %v2332, %v2492
        %v2494 = vpop.f32.mrf.mxu0
        %2495 = vmatprep.mubr.bf16.mxu0 %v1477
        %2496 = vmatmul.mubr.bf16.gmra.mxu0 %v1476
        %v2497 = vpop.f32.mrf.mxu0
        %v2498 = vadd.f32 %v2337, %v2497
        %v2499 = vpop.f32.mrf.mxu0
        %v2500 = vpop.f32.mrf.mxu0
        %v2501 = vadd.f32 %v2340, %v2500
        %v2502 = vpop.f32.mrf.mxu0
        %2503 = vmatprep.mubr.bf16.mxu0 %v1480
        %2504 = vmatmul.mubr.bf16.gmra.mxu0 %v1479
        %v2505 = vpop.f32.mrf.mxu0
        %v2506 = vadd.f32 %v2345, %v2505
        %v2507 = vpop.f32.mrf.mxu0
        %v2508 = vpop.f32.mrf.mxu0
        %v2509 = vadd.f32 %v2348, %v2508
        %v2510 = vpop.f32.mrf.mxu0
        %2511 = vmatprep.mubr.bf16.mxu0 %v1483
        %2512 = vmatmul.mubr.bf16.gmra.mxu0 %v1482
        %v2513 = vpop.f32.mrf.mxu0
        %v2514 = vadd.f32 %v2353, %v2513
        %v2515 = vpop.f32.mrf.mxu0
        %v2516 = vpop.f32.mrf.mxu0
        %v2517 = vadd.f32 %v2356, %v2516
        %v2518 = vpop.f32.mrf.mxu0
        %2519 = vmatprep.mubr.bf16.mxu0 %v1486
        %2520 = vmatmul.mubr.bf16.gmra.mxu0 %v1485
        %v2521 = vpop.f32.mrf.mxu0
        %v2522 = vadd.f32 %v2361, %v2521
        %v2523 = vpop.f32.mrf.mxu0
        %v2524 = vpop.f32.mrf.mxu0
        %v2525 = vadd.f32 %v2364, %v2524
        %v2526 = vpop.f32.mrf.mxu0
        %2527 = vmatprep.mubr.bf16.mxu0 %v1489
        %2528 = vmatmul.mubr.bf16.gmra.mxu0 %v1488
        %v2529 = vpop.f32.mrf.mxu0
        %v2530 = vadd.f32 %v2369, %v2529
        %v2531 = vpop.f32.mrf.mxu0
        %v2532 = vpop.f32.mrf.mxu0
        %v2533 = vadd.f32 %v2372, %v2532
        %v2534 = vpop.f32.mrf.mxu0
        %2535 = vmatprep.mubr.bf16.mxu0 %v1492
        %2536 = vmatmul.mubr.bf16.gmra.mxu0 %v1491
        %v2537 = vpop.f32.mrf.mxu0
        %v2538 = vadd.f32 %v2377, %v2537
        %v2539 = vpop.f32.mrf.mxu0
        %v2540 = vpop.f32.mrf.mxu0
        %v2541 = vadd.f32 %v2380, %v2540
        %v2542 = vpop.f32.mrf.mxu0
        %2543 = vmatprep.mubr.bf16.mxu0 %v1495
        %2544 = vmatmul.mubr.bf16.gmra.mxu0 %v1494
        %v2545 = vpop.f32.mrf.mxu0
        %v2546 = vadd.f32 %v2385, %v2545
        %v2547 = vpop.f32.mrf.mxu0
        %v2548 = vpop.f32.mrf.mxu0
        %v2549 = vadd.f32 %v2388, %v2548
        %v2550 = vpop.f32.mrf.mxu0
        %2551 = vmatprep.mubr.bf16.mxu0 %v1498
        %2552 = vmatmul.mubr.bf16.gmra.mxu0 %v1497
        %v2553 = vpop.f32.mrf.mxu0
        %v2554 = vadd.f32 %v2393, %v2553
        %v2555 = vpop.f32.mrf.mxu0
        %v2556 = vpop.f32.mrf.mxu0
        %v2557 = vadd.f32 %v2396, %v2556
        %v2558 = vpop.f32.mrf.mxu0
        %2559 = vmatprep.mubr.bf16.mxu0 %v1501
        %2560 = vmatmul.mubr.bf16.gmra.mxu0 %v1500
        %v2561 = vpop.f32.mrf.mxu0
        %v2562 = vadd.f32 %v2401, %v2561
        %v2563 = vpop.f32.mrf.mxu0
        %v2564 = vpop.f32.mrf.mxu0
        %v2565 = vadd.f32 %v2404, %v2564
        %v2566 = vpop.f32.mrf.mxu0
        %2567 = vdwg.mxu0
        %2568 = vmatprep.subr.bf16.mxu0 0
        %2569 = vmatpush1.bf16.msra.mxu0 %v1996
        %2570 = vmatprep.subr.bf16.mxu0 0
        %2571 = vmatpush1.bf16.msra.mxu0 %v1995
        %2572 = vmatprep.subr.bf16.mxu0 0
        %2573 = vmatpush1.bf16.msra.mxu0 %v1994
        %2574 = vmatprep.subr.bf16.mxu0 0
        %2575 = vmatpush1.bf16.msra.mxu0 %v1993
        %2576 = vmatprep.subr.bf16.mxu0 0
        %2577 = vmatpush1.bf16.msra.mxu0 %v1992
        %2578 = vmatprep.subr.bf16.mxu0 0
        %2579 = vmatpush1.bf16.msra.mxu0 %v1991
        %2580 = vmatprep.subr.bf16.mxu0 0
        %2581 = vmatpush1.bf16.msra.mxu0 %v1990
        %2582 = vmatprep.subr.bf16.mxu0 0
        %2583 = vmatpush1.bf16.msra.mxu0 %v1989
        %2584 = vmatprep.subr.bf16.mxu0 0
        %2585 = vmatpush2.bf16.msra.mxu0 %v2004
        %2586 = vmatprep.subr.bf16.mxu0 0
        %2587 = vmatpush2.bf16.msra.mxu0 %v2003
        %2588 = vmatprep.subr.bf16.mxu0 0
        %2589 = vmatpush2.bf16.msra.mxu0 %v2002
        %2590 = vmatprep.subr.bf16.mxu0 0
        %2591 = vmatpush2.bf16.msra.mxu0 %v2001
        %2592 = vmatprep.subr.bf16.mxu0 0
        %2593 = vmatpush2.bf16.msra.mxu0 %v2000
        %2594 = vmatprep.subr.bf16.mxu0 0
        %2595 = vmatpush2.bf16.msra.mxu0 %v1999
        %2596 = vmatprep.subr.bf16.mxu0 0
        %2597 = vmatpush2.bf16.msra.mxu0 %v1998
        %2598 = vmatprep.subr.bf16.mxu0 0
        %2599 = vmatpush2.bf16.msra.mxu0 %v1997
        %2600 = vmatprep.mubr.bf16.mxu0 %v1458
        %2601 = vmatmul.mubr.bf16.gmra.mxu0 %v1457
        %v2602 = vpop.f32.mrf.mxu0
        %v2603 = vadd.f32 %v2442, %v2602
        %v2604 = vpop.f32.mrf.mxu0
        %v2605 = vpop.f32.mrf.mxu0
        %v2606 = vadd.f32 %v2445, %v2605
        %v2607 = vpop.f32.mrf.mxu0
        %2608 = vmatprep.mubr.bf16.mxu0 %v1461
        %2609 = vmatmul.mubr.bf16.gmra.mxu0 %v1460
        %v2610 = vpop.f32.mrf.mxu0
        %v2611 = vadd.f32 %v2450, %v2610
        %v2612 = vpop.f32.mrf.mxu0
        %v2613 = vpop.f32.mrf.mxu0
        %v2614 = vadd.f32 %v2453, %v2613
        %v2615 = vpop.f32.mrf.mxu0
        %2616 = vmatprep.mubr.bf16.mxu0 %v1464
        %2617 = vmatmul.mubr.bf16.gmra.mxu0 %v1463
        %v2618 = vpop.f32.mrf.mxu0
        %v2619 = vadd.f32 %v2458, %v2618
        %v2620 = vpop.f32.mrf.mxu0
        %v2621 = vpop.f32.mrf.mxu0
        %v2622 = vadd.f32 %v2461, %v2621
        %v2623 = vpop.f32.mrf.mxu0
        %2624 = vmatprep.mubr.bf16.mxu0 %v1467
        %2625 = vmatmul.mubr.bf16.gmra.mxu0 %v1466
        %v2626 = vpop.f32.mrf.mxu0
        %v2627 = vadd.f32 %v2466, %v2626
        %v2628 = vpop.f32.mrf.mxu0
        %v2629 = vpop.f32.mrf.mxu0
        %v2630 = vadd.f32 %v2469, %v2629
        %v2631 = vpop.f32.mrf.mxu0
        %2632 = vmatprep.mubr.bf16.mxu0 %v1470
        %2633 = vmatmul.mubr.bf16.gmra.mxu0 %v1469
        %v2634 = vpop.f32.mrf.mxu0
        %v2635 = vadd.f32 %v2474, %v2634
        %v2636 = vpop.f32.mrf.mxu0
        %v2637 = vpop.f32.mrf.mxu0
        %v2638 = vadd.f32 %v2477, %v2637
        %v2639 = vpop.f32.mrf.mxu0
        %2640 = vmatprep.mubr.bf16.mxu0 %v1473
        %2641 = vmatmul.mubr.bf16.gmra.mxu0 %v1472
        %v2642 = vpop.f32.mrf.mxu0
        %v2643 = vadd.f32 %v2482, %v2642
        %v2644 = vpop.f32.mrf.mxu0
        %v2645 = vpop.f32.mrf.mxu0
        %v2646 = vadd.f32 %v2485, %v2645
        %v2647 = vpop.f32.mrf.mxu0
        %2648 = vmatprep.mubr.bf16.mxu0 %v1476
        %2649 = vmatmul.mubr.bf16.gmra.mxu0 %v1475
        %v2650 = vpop.f32.mrf.mxu0
        %v2651 = vadd.f32 %v2490, %v2650
        %v2652 = vpop.f32.mrf.mxu0
        %v2653 = vpop.f32.mrf.mxu0
        %v2654 = vadd.f32 %v2493, %v2653
        %v2655 = vpop.f32.mrf.mxu0
        %2656 = vmatprep.mubr.bf16.mxu0 %v1479
        %2657 = vmatmul.mubr.bf16.gmra.mxu0 %v1478
        %v2658 = vpop.f32.mrf.mxu0
        %v2659 = vadd.f32 %v2498, %v2658
        %v2660 = vpop.f32.mrf.mxu0
        %v2661 = vpop.f32.mrf.mxu0
        %v2662 = vadd.f32 %v2501, %v2661
        %v2663 = vpop.f32.mrf.mxu0
        %2664 = vmatprep.mubr.bf16.mxu0 %v1482
        %2665 = vmatmul.mubr.bf16.gmra.mxu0 %v1481
        %v2666 = vpop.f32.mrf.mxu0
        %v2667 = vadd.f32 %v2506, %v2666
        %v2668 = vpop.f32.mrf.mxu0
        %v2669 = vpop.f32.mrf.mxu0
        %v2670 = vadd.f32 %v2509, %v2669
        %v2671 = vpop.f32.mrf.mxu0
        %2672 = vmatprep.mubr.bf16.mxu0 %v1485
        %2673 = vmatmul.mubr.bf16.gmra.mxu0 %v1484
        %v2674 = vpop.f32.mrf.mxu0
        %v2675 = vadd.f32 %v2514, %v2674
        %v2676 = vpop.f32.mrf.mxu0
        %v2677 = vpop.f32.mrf.mxu0
        %v2678 = vadd.f32 %v2517, %v2677
        %v2679 = vpop.f32.mrf.mxu0
        %2680 = vmatprep.mubr.bf16.mxu0 %v1488
        %2681 = vmatmul.mubr.bf16.gmra.mxu0 %v1487
        %v2682 = vpop.f32.mrf.mxu0
        %v2683 = vadd.f32 %v2522, %v2682
        %v2684 = vpop.f32.mrf.mxu0
        %v2685 = vpop.f32.mrf.mxu0
        %v2686 = vadd.f32 %v2525, %v2685
        %v2687 = vpop.f32.mrf.mxu0
        %2688 = vmatprep.mubr.bf16.mxu0 %v1491
        %2689 = vmatmul.mubr.bf16.gmra.mxu0 %v1490
        %v2690 = vpop.f32.mrf.mxu0
        %v2691 = vadd.f32 %v2530, %v2690
        %v2692 = vpop.f32.mrf.mxu0
        %v2693 = vpop.f32.mrf.mxu0
        %v2694 = vadd.f32 %v2533, %v2693
        %v2695 = vpop.f32.mrf.mxu0
        %2696 = vmatprep.mubr.bf16.mxu0 %v1494
        %2697 = vmatmul.mubr.bf16.gmra.mxu0 %v1493
        %v2698 = vpop.f32.mrf.mxu0
        %v2699 = vadd.f32 %v2538, %v2698
        %v2700 = vpop.f32.mrf.mxu0
        %v2701 = vpop.f32.mrf.mxu0
        %v2702 = vadd.f32 %v2541, %v2701
        %v2703 = vpop.f32.mrf.mxu0
        %2704 = vmatprep.mubr.bf16.mxu0 %v1497
        %2705 = vmatmul.mubr.bf16.gmra.mxu0 %v1496
        %v2706 = vpop.f32.mrf.mxu0
        %v2707 = vadd.f32 %v2546, %v2706
        %v2708 = vpop.f32.mrf.mxu0
        %v2709 = vpop.f32.mrf.mxu0
        %v2710 = vadd.f32 %v2549, %v2709
        %v2711 = vpop.f32.mrf.mxu0
        %2712 = vmatprep.mubr.bf16.mxu0 %v1500
        %2713 = vmatmul.mubr.bf16.gmra.mxu0 %v1499
        %v2714 = vpop.f32.mrf.mxu0
        %v2715 = vadd.f32 %v2554, %v2714
        %v2716 = vpop.f32.mrf.mxu0
        %v2717 = vpop.f32.mrf.mxu0
        %v2718 = vadd.f32 %v2557, %v2717
        %v2719 = vpop.f32.mrf.mxu0
        %2720 = vmatprep.mubr.bf16.mxu0 %v1453
        %2721 = vmatmul.mubr.bf16.gmra.mxu0 %v1453
        %v2722 = vpop.f32.mrf.mxu0
        %v2723 = vadd.f32 %v2562, %v2722
        %v2724 = vpop.f32.mrf.mxu0
        %v2725 = vpop.f32.mrf.mxu0
        %v2726 = vadd.f32 %v2565, %v2725
        %v2727 = vpop.f32.mrf.mxu0
        %2728 = vdwg.mxu0
        %2729 = vmatprep.subr.bf16.mxu0 0
        %2730 = vmatpush1.bf16.msra.mxu0 %v2012
        %2731 = vmatprep.subr.bf16.mxu0 0
        %2732 = vmatpush1.bf16.msra.mxu0 %v2011
        %2733 = vmatprep.subr.bf16.mxu0 0
        %2734 = vmatpush1.bf16.msra.mxu0 %v2010
        %2735 = vmatprep.subr.bf16.mxu0 0
        %2736 = vmatpush1.bf16.msra.mxu0 %v2009
        %2737 = vmatprep.subr.bf16.mxu0 0
        %2738 = vmatpush1.bf16.msra.mxu0 %v2008
        %2739 = vmatprep.subr.bf16.mxu0 0
        %2740 = vmatpush1.bf16.msra.mxu0 %v2007
        %2741 = vmatprep.subr.bf16.mxu0 0
        %2742 = vmatpush1.bf16.msra.mxu0 %v2006
        %2743 = vmatprep.subr.bf16.mxu0 0
        %2744 = vmatpush1.bf16.msra.mxu0 %v2005
        %2745 = vmatprep.subr.bf16.mxu0 0
        %2746 = vmatpush2.bf16.msra.mxu0 0
        %2747 = vmatprep.subr.bf16.mxu0 0
        %2748 = vmatpush2.bf16.msra.mxu0 0
        %2749 = vmatprep.subr.bf16.mxu0 0
        %2750 = vmatpush2.bf16.msra.mxu0 0
        %2751 = vmatprep.subr.bf16.mxu0 0
        %2752 = vmatpush2.bf16.msra.mxu0 0
        %2753 = vmatprep.subr.bf16.mxu0 0
        %2754 = vmatpush2.bf16.msra.mxu0 0
        %2755 = vmatprep.subr.bf16.mxu0 0
        %2756 = vmatpush2.bf16.msra.mxu0 0
        %2757 = vmatprep.subr.bf16.mxu0 0
        %2758 = vmatpush2.bf16.msra.mxu0 0
        %2759 = vmatprep.subr.bf16.mxu0 0
        %2760 = vmatpush2.bf16.msra.mxu0 0
        %2761 = vmatprep.mubr.bf16.mxu0 0
        %2762 = vmatmul.mubr.bf16.gmra.mxu0 %v1459
        %v2763 = vpop.f32.mrf.mxu0
        %v2764 = vadd.f32 %v2603, %v2763
        %v2765 = vpop.f32.mrf.mxu0
        %v2766 = vpop.f32.mrf.mxu0
        %v2767 = vadd.f32 %v2606, %v2766
        %v2768 = vpop.f32.mrf.mxu0
        %2769 = vmatprep.mubr.bf16.mxu0 0
        %2770 = vmatmul.mubr.bf16.gmra.mxu0 %v1462
        %v2771 = vpop.f32.mrf.mxu0
        %v2772 = vadd.f32 %v2611, %v2771
        %v2773 = vpop.f32.mrf.mxu0
        %v2774 = vpop.f32.mrf.mxu0
        %v2775 = vadd.f32 %v2614, %v2774
        %v2776 = vpop.f32.mrf.mxu0
        %2777 = vmatprep.mubr.bf16.mxu0 0
        %2778 = vmatmul.mubr.bf16.gmra.mxu0 %v1465
        %v2779 = vpop.f32.mrf.mxu0
        %v2780 = vadd.f32 %v2619, %v2779
        %v2781 = vpop.f32.mrf.mxu0
        %v2782 = vpop.f32.mrf.mxu0
        %v2783 = vadd.f32 %v2622, %v2782
        %v2784 = vpop.f32.mrf.mxu0
        %2785 = vmatprep.mubr.bf16.mxu0 0
        %2786 = vmatmul.mubr.bf16.gmra.mxu0 %v1468
        %v2787 = vpop.f32.mrf.mxu0
        %v2788 = vadd.f32 %v2627, %v2787
        %v2789 = vpop.f32.mrf.mxu0
        %v2790 = vpop.f32.mrf.mxu0
        %v2791 = vadd.f32 %v2630, %v2790
        %v2792 = vpop.f32.mrf.mxu0
        %2793 = vmatprep.mubr.bf16.mxu0 0
        %2794 = vmatmul.mubr.bf16.gmra.mxu0 %v1471
        %v2795 = vpop.f32.mrf.mxu0
        %v2796 = vadd.f32 %v2635, %v2795
        %v2797 = vpop.f32.mrf.mxu0
        %v2798 = vpop.f32.mrf.mxu0
        %v2799 = vadd.f32 %v2638, %v2798
        %v2800 = vpop.f32.mrf.mxu0
        %2801 = vmatprep.mubr.bf16.mxu0 0
        %2802 = vmatmul.mubr.bf16.gmra.mxu0 %v1474
        %v2803 = vpop.f32.mrf.mxu0
        %v2804 = vadd.f32 %v2643, %v2803
        %v2805 = vpop.f32.mrf.mxu0
        %v2806 = vpop.f32.mrf.mxu0
        %v2807 = vadd.f32 %v2646, %v2806
        %v2808 = vpop.f32.mrf.mxu0
        %2809 = vmatprep.mubr.bf16.mxu0 0
        %2810 = vmatmul.mubr.bf16.gmra.mxu0 %v1477
        %v2811 = vpop.f32.mrf.mxu0
        %v2812 = vadd.f32 %v2651, %v2811
        %v2813 = vpop.f32.mrf.mxu0
        %v2814 = vpop.f32.mrf.mxu0
        %v2815 = vadd.f32 %v2654, %v2814
        %v2816 = vpop.f32.mrf.mxu0
        %2817 = vmatprep.mubr.bf16.mxu0 0
        %2818 = vmatmul.mubr.bf16.gmra.mxu0 %v1480
        %v2819 = vpop.f32.mrf.mxu0
        %v2820 = vadd.f32 %v2659, %v2819
        %v2821 = vpop.f32.mrf.mxu0
        %v2822 = vpop.f32.mrf.mxu0
        %v2823 = vadd.f32 %v2662, %v2822
        %v2824 = vpop.f32.mrf.mxu0
        %2825 = vmatprep.mubr.bf16.mxu0 0
        %2826 = vmatmul.mubr.bf16.gmra.mxu0 %v1483
        %v2827 = vpop.f32.mrf.mxu0
        %v2828 = vadd.f32 %v2667, %v2827
        %v2829 = vpop.f32.mrf.mxu0
        %v2830 = vpop.f32.mrf.mxu0
        %v2831 = vadd.f32 %v2670, %v2830
        %v2832 = vpop.f32.mrf.mxu0
        %2833 = vmatprep.mubr.bf16.mxu0 0
        %2834 = vmatmul.mubr.bf16.gmra.mxu0 %v1486
        %v2835 = vpop.f32.mrf.mxu0
        %v2836 = vadd.f32 %v2675, %v2835
        %v2837 = vpop.f32.mrf.mxu0
        %v2838 = vpop.f32.mrf.mxu0
        %v2839 = vadd.f32 %v2678, %v2838
        %v2840 = vpop.f32.mrf.mxu0
        %2841 = vmatprep.mubr.bf16.mxu0 0
        %2842 = vmatmul.mubr.bf16.gmra.mxu0 %v1489
        %v2843 = vpop.f32.mrf.mxu0
        %v2844 = vadd.f32 %v2683, %v2843
        %v2845 = vpop.f32.mrf.mxu0
        %v2846 = vpop.f32.mrf.mxu0
        %v2847 = vadd.f32 %v2686, %v2846
        %v2848 = vpop.f32.mrf.mxu0
        %2849 = vmatprep.mubr.bf16.mxu0 0
        %2850 = vmatmul.mubr.bf16.gmra.mxu0 %v1492
        %v2851 = vpop.f32.mrf.mxu0
        %v2852 = vadd.f32 %v2691, %v2851
        %v2853 = vpop.f32.mrf.mxu0
        %v2854 = vpop.f32.mrf.mxu0
        %v2855 = vadd.f32 %v2694, %v2854
        %v2856 = vpop.f32.mrf.mxu0
        %2857 = vmatprep.mubr.bf16.mxu0 0
        %2858 = vmatmul.mubr.bf16.gmra.mxu0 %v1495
        %v2859 = vpop.f32.mrf.mxu0
        %v2860 = vadd.f32 %v2699, %v2859
        %v2861 = vpop.f32.mrf.mxu0
        %v2862 = vpop.f32.mrf.mxu0
        %v2863 = vadd.f32 %v2702, %v2862
        %v2864 = vpop.f32.mrf.mxu0
        %2865 = vmatprep.mubr.bf16.mxu0 0
        %2866 = vmatmul.mubr.bf16.gmra.mxu0 %v1498
        %v2867 = vpop.f32.mrf.mxu0
        %v2868 = vadd.f32 %v2707, %v2867
        %v2869 = vpop.f32.mrf.mxu0
        %v2870 = vpop.f32.mrf.mxu0
        %v2871 = vadd.f32 %v2710, %v2870
        %v2872 = vpop.f32.mrf.mxu0
        %2873 = vmatprep.mubr.bf16.mxu0 0
        %2874 = vmatmul.mubr.bf16.gmra.mxu0 %v1501
        %v2875 = vpop.f32.mrf.mxu0
        %v2876 = vadd.f32 %v2715, %v2875
        %v2877 = vpop.f32.mrf.mxu0
        %v2878 = vpop.f32.mrf.mxu0
        %v2879 = vadd.f32 %v2718, %v2878
        %v2880 = vpop.f32.mrf.mxu0
        %2881 = vmatprep.mubr.bf16.mxu0 0
        %2882 = vmatmul.mubr.bf16.gmra.mxu0 %v1453
        %v2883 = vpop.f32.mrf.mxu0
        %v2884 = vadd.f32 %v2723, %v2883
        %v2885 = vpop.f32.mrf.mxu0
        %v2886 = vpop.f32.mrf.mxu0
        %v2887 = vadd.f32 %v2726, %v2886
        %v2888 = vpop.f32.mrf.mxu0
        %2889 = vdwg.mxu0
        %v2890 = vmax.f32 %v2764, 0.0
        %v2891 = vmax.f32 %v2767, 0.0
        %v2892 = vmax.f32 %v2772, 0.0
        %v2893 = vmax.f32 %v2775, 0.0
        %v2894 = vmax.f32 %v2780, 0.0
        %v2895 = vmax.f32 %v2783, 0.0
        %v2896 = vmax.f32 %v2788, 0.0
        %v2897 = vmax.f32 %v2791, 0.0
        %v2898 = vmax.f32 %v2796, 0.0
        %v2899 = vmax.f32 %v2799, 0.0
        %v2900 = vmax.f32 %v2804, 0.0
        %v2901 = vmax.f32 %v2807, 0.0
        %v2902 = vmax.f32 %v2812, 0.0
        %v2903 = vmax.f32 %v2815, 0.0
        %v2904 = vmax.f32 %v2820, 0.0
        %v2905 = vmax.f32 %v2823, 0.0
        %v2906 = vmax.f32 %v2828, 0.0
        %v2907 = vmax.f32 %v2831, 0.0
        %v2908 = vmax.f32 %v2836, 0.0
        %v2909 = vmax.f32 %v2839, 0.0
        %v2910 = vmax.f32 %v2844, 0.0
        %v2911 = vmax.f32 %v2847, 0.0
        %v2912 = vmax.f32 %v2852, 0.0
        %v2913 = vmax.f32 %v2855, 0.0
        %v2914 = vmax.f32 %v2860, 0.0
        %v2915 = vmax.f32 %v2863, 0.0
        %v2916 = vmax.f32 %v2868, 0.0
        %v2917 = vmax.f32 %v2871, 0.0
        %v2918 = vmax.f32 %v2876, 0.0
        %v2919 = vmax.f32 %v2879, 0.0
        %v2920 = vmax.f32 %v2884, 0.0
        %v2921 = vmax.f32 %v2887, 0.0
        %v2922 = vpack.c.bf16 %v2891, %v2890
        %v2923 = vpack.c.bf16 %v2893, %v2892
        %v2924 = vpack.c.bf16 %v2895, %v2894
        %v2925 = vpack.c.bf16 %v2897, %v2896
        %v2926 = vpack.c.bf16 %v2899, %v2898
        %v2927 = vpack.c.bf16 %v2901, %v2900
        %v2928 = vpack.c.bf16 %v2903, %v2902
        %v2929 = vpack.c.bf16 %v2905, %v2904
        %v2930 = vpack.c.bf16 %v2907, %v2906
        %v2931 = vpack.c.bf16 %v2909, %v2908
        %v2932 = vpack.c.bf16 %v2911, %v2910
        %v2933 = vpack.c.bf16 %v2913, %v2912
        %v2934 = vpack.c.bf16 %v2915, %v2914
        %v2935 = vpack.c.bf16 %v2917, %v2916
        %v2936 = vpack.c.bf16 %v2919, %v2918
        %v2937 = vpack.c.bf16 %v2921, %v2920
        %v2938 = vld [vmem:[#allocation8] sm:$0xf]
        %v2939 = vld [vmem:[#allocation8 + $0x4] sm:$0xf]
        %v2940 = vld [vmem:[#allocation8 + $0x8] sm:$0xf]
        %v2941 = vld [vmem:[#allocation8 + $0xc] sm:$0xf]
        %v2942 = vld [vmem:[#allocation8 + $0x10] sm:$0xf]
        %v2943 = vld [vmem:[#allocation8 + $0x14] sm:$0xf]
        %v2944 = vld [vmem:[#allocation8 + $0x18] sm:$0xf]
        %v2945 = vld [vmem:[#allocation8 + $0x1c] sm:$0xf]
        %v2946 = vld [vmem:[#allocation8 + $0x20] sm:$0xf]
        %v2947 = vld [vmem:[#allocation8 + $0x24] sm:$0xf]
        %v2948 = vld [vmem:[#allocation8 + $0x28] sm:$0xf]
        %v2949 = vld [vmem:[#allocation8 + $0x2c] sm:$0xf]
        %v2950 = vld [vmem:[#allocation8 + $0x30] sm:$0xf]
        %v2951 = vld [vmem:[#allocation8 + $0x34] sm:$0xf]
        %v2952 = vld [vmem:[#allocation8 + $0x38] sm:$0xf]
        %v2953 = vld [vmem:[#allocation8 + $0x3c] sm:$0xf]
        %v2954 = vld [vmem:[%s7] sm:$0x1]
        %v2956 = vlaneseq
        %v2957 = vshrl.u32 %v2956, 7
        %v2958 = vsub.s32 0, %v2957
        %v2959 = vrot.slane %v2954, %v2958
        %v2977 = vunpack.c.l.b16 %v2938
        %v2978 = vunpack.c.l.b16 %v2939
        %v2979 = vunpack.c.l.b16 %v2940
        %v2980 = vunpack.c.l.b16 %v2941
        %v2981 = vunpack.c.l.b16 %v2942
        %v2982 = vunpack.c.l.b16 %v2943
        %v2983 = vunpack.c.l.b16 %v2944
        %v2984 = vunpack.c.l.b16 %v2945
        %v2985 = vunpack.c.l.b16 %v2946
        %v2986 = vunpack.c.l.b16 %v2947
        %v2987 = vunpack.c.l.b16 %v2948
        %v2988 = vunpack.c.l.b16 %v2949
        %v2989 = vunpack.c.l.b16 %v2950
        %v2990 = vunpack.c.l.b16 %v2951
        %v2991 = vunpack.c.l.b16 %v2952
        %v2992 = vunpack.c.l.b16 %v2953
        %v2993 = vpack.c.b16 %v2978, %v2977
        %v2994 = vpack.c.b16 %v2980, %v2979
        %v2995 = vpack.c.b16 %v2982, %v2981
        %v2996 = vpack.c.b16 %v2984, %v2983
        %v2997 = vpack.c.b16 %v2986, %v2985
        %v2998 = vpack.c.b16 %v2988, %v2987
        %v2999 = vpack.c.b16 %v2990, %v2989
        %v3000 = vpack.c.b16 %v2992, %v2991
        %3009 = vmatprep.subr.bf16.mxu0 0
        %3010 = vmatpush1.bf16.msra.mxu0 %v3000
        %3011 = vmatprep.subr.bf16.mxu0 0
        %3012 = vmatpush1.bf16.msra.mxu0 %v2999
        %3013 = vmatprep.subr.bf16.mxu0 0
        %3014 = vmatpush1.bf16.msra.mxu0 %v2998
        %3015 = vmatprep.subr.bf16.mxu0 0
        %3016 = vmatpush1.bf16.msra.mxu0 %v2997
        %3017 = vmatprep.subr.bf16.mxu0 0
        %3018 = vmatpush1.bf16.msra.mxu0 %v2996
        %3019 = vmatprep.subr.bf16.mxu0 0
        %3020 = vmatpush1.bf16.msra.mxu0 %v2995
        %3021 = vmatprep.subr.bf16.mxu0 0
        %3022 = vmatpush1.bf16.msra.mxu0 %v2994
        %3023 = vmatprep.subr.bf16.mxu0 0
        %3024 = vmatpush1.bf16.msra.mxu0 %v2993
        %3025 = vmatprep.subr.bf16.mxu0 0
        %3026 = vmatpush2.bf16.msra.mxu0 0
        %3027 = vmatprep.subr.bf16.mxu0 0
        %3028 = vmatpush2.bf16.msra.mxu0 0
        %3029 = vmatprep.subr.bf16.mxu0 0
        %3030 = vmatpush2.bf16.msra.mxu0 0
        %3031 = vmatprep.subr.bf16.mxu0 0
        %3032 = vmatpush2.bf16.msra.mxu0 0
        %3033 = vmatprep.subr.bf16.mxu0 0
        %3034 = vmatpush2.bf16.msra.mxu0 0
        %3035 = vmatprep.subr.bf16.mxu0 0
        %3036 = vmatpush2.bf16.msra.mxu0 0
        %3037 = vmatprep.subr.bf16.mxu0 0
        %3038 = vmatpush2.bf16.msra.mxu0 0
        %3039 = vmatprep.subr.bf16.mxu0 0
        %3040 = vmatpush2.bf16.msra.mxu0 0
        %3041 = vmatprep.mubr.bf16.mxu0 0
        %3042 = vmatmul.mubr.bf16.gmra.mxu0 %v2922
        %v3043 = vpop.f32.mrf.mxu0
        %v3044 = vadd.f32 %v2959, %v3043
        %v3045 = vpop.f32.mrf.mxu0
        %v3046 = vpop.f32.mrf.mxu0
        %v3047 = vadd.f32 %v2959, %v3046
        %v3048 = vpop.f32.mrf.mxu0
        %3049 = vmatprep.mubr.bf16.mxu0 0
        %3050 = vmatmul.mubr.bf16.gmra.mxu0 %v2923
        %v3051 = vpop.f32.mrf.mxu0
        %v3052 = vadd.f32 %v2959, %v3051
        %v3053 = vpop.f32.mrf.mxu0
        %v3054 = vpop.f32.mrf.mxu0
        %v3055 = vadd.f32 %v2959, %v3054
        %v3056 = vpop.f32.mrf.mxu0
        %3057 = vmatprep.mubr.bf16.mxu0 0
        %3058 = vmatmul.mubr.bf16.gmra.mxu0 %v2924
        %v3059 = vpop.f32.mrf.mxu0
        %v3060 = vadd.f32 %v2959, %v3059
        %v3061 = vpop.f32.mrf.mxu0
        %v3062 = vpop.f32.mrf.mxu0
        %v3063 = vadd.f32 %v2959, %v3062
        %v3064 = vpop.f32.mrf.mxu0
        %3065 = vmatprep.mubr.bf16.mxu0 0
        %3066 = vmatmul.mubr.bf16.gmra.mxu0 %v2925
        %v3067 = vpop.f32.mrf.mxu0
        %v3068 = vadd.f32 %v2959, %v3067
        %v3069 = vpop.f32.mrf.mxu0
        %v3070 = vpop.f32.mrf.mxu0
        %v3071 = vadd.f32 %v2959, %v3070
        %v3072 = vpop.f32.mrf.mxu0
        %3073 = vmatprep.mubr.bf16.mxu0 0
        %3074 = vmatmul.mubr.bf16.gmra.mxu0 %v2926
        %v3075 = vpop.f32.mrf.mxu0
        %v3076 = vadd.f32 %v2959, %v3075
        %v3077 = vpop.f32.mrf.mxu0
        %v3078 = vpop.f32.mrf.mxu0
        %v3079 = vadd.f32 %v2959, %v3078
        %v3080 = vpop.f32.mrf.mxu0
        %3081 = vmatprep.mubr.bf16.mxu0 0
        %3082 = vmatmul.mubr.bf16.gmra.mxu0 %v2927
        %v3083 = vpop.f32.mrf.mxu0
        %v3084 = vadd.f32 %v2959, %v3083
        %v3085 = vpop.f32.mrf.mxu0
        %v3086 = vpop.f32.mrf.mxu0
        %v3087 = vadd.f32 %v2959, %v3086
        %v3088 = vpop.f32.mrf.mxu0
        %3089 = vmatprep.mubr.bf16.mxu0 0
        %3090 = vmatmul.mubr.bf16.gmra.mxu0 %v2928
        %v3091 = vpop.f32.mrf.mxu0
        %v3092 = vadd.f32 %v2959, %v3091
        %v3093 = vpop.f32.mrf.mxu0
        %v3094 = vpop.f32.mrf.mxu0
        %v3095 = vadd.f32 %v2959, %v3094
        %v3096 = vpop.f32.mrf.mxu0
        %3097 = vmatprep.mubr.bf16.mxu0 0
        %3098 = vmatmul.mubr.bf16.gmra.mxu0 %v2929
        %v3099 = vpop.f32.mrf.mxu0
        %v3100 = vadd.f32 %v2959, %v3099
        %v3101 = vpop.f32.mrf.mxu0
        %v3102 = vpop.f32.mrf.mxu0
        %v3103 = vadd.f32 %v2959, %v3102
        %v3104 = vpop.f32.mrf.mxu0
        %3105 = vmatprep.mubr.bf16.mxu0 0
        %3106 = vmatmul.mubr.bf16.gmra.mxu0 %v2930
        %v3107 = vpop.f32.mrf.mxu0
        %v3108 = vadd.f32 %v2959, %v3107
        %v3109 = vpop.f32.mrf.mxu0
        %v3110 = vpop.f32.mrf.mxu0
        %v3111 = vadd.f32 %v2959, %v3110
        %v3112 = vpop.f32.mrf.mxu0
        %3113 = vmatprep.mubr.bf16.mxu0 0
        %3114 = vmatmul.mubr.bf16.gmra.mxu0 %v2931
        %v3115 = vpop.f32.mrf.mxu0
        %v3116 = vadd.f32 %v2959, %v3115
        %v3117 = vpop.f32.mrf.mxu0
        %v3118 = vpop.f32.mrf.mxu0
        %v3119 = vadd.f32 %v2959, %v3118
        %v3120 = vpop.f32.mrf.mxu0
        %3121 = vmatprep.mubr.bf16.mxu0 0
        %3122 = vmatmul.mubr.bf16.gmra.mxu0 %v2932
        %v3123 = vpop.f32.mrf.mxu0
        %v3124 = vadd.f32 %v2959, %v3123
        %v3125 = vpop.f32.mrf.mxu0
        %v3126 = vpop.f32.mrf.mxu0
        %v3127 = vadd.f32 %v2959, %v3126
        %v3128 = vpop.f32.mrf.mxu0
        %3129 = vmatprep.mubr.bf16.mxu0 0
        %3130 = vmatmul.mubr.bf16.gmra.mxu0 %v2933
        %v3131 = vpop.f32.mrf.mxu0
        %v3132 = vadd.f32 %v2959, %v3131
        %v3133 = vpop.f32.mrf.mxu0
        %v3134 = vpop.f32.mrf.mxu0
        %v3135 = vadd.f32 %v2959, %v3134
        %v3136 = vpop.f32.mrf.mxu0
        %3137 = vmatprep.mubr.bf16.mxu0 0
        %3138 = vmatmul.mubr.bf16.gmra.mxu0 %v2934
        %v3139 = vpop.f32.mrf.mxu0
        %v3140 = vadd.f32 %v2959, %v3139
        %v3141 = vpop.f32.mrf.mxu0
        %v3142 = vpop.f32.mrf.mxu0
        %v3143 = vadd.f32 %v2959, %v3142
        %v3144 = vpop.f32.mrf.mxu0
        %3145 = vmatprep.mubr.bf16.mxu0 0
        %3146 = vmatmul.mubr.bf16.gmra.mxu0 %v2935
        %v3147 = vpop.f32.mrf.mxu0
        %v3148 = vadd.f32 %v2959, %v3147
        %v3149 = vpop.f32.mrf.mxu0
        %v3150 = vpop.f32.mrf.mxu0
        %v3151 = vadd.f32 %v2959, %v3150
        %v3152 = vpop.f32.mrf.mxu0
        %3153 = vmatprep.mubr.bf16.mxu0 0
        %3154 = vmatmul.mubr.bf16.gmra.mxu0 %v2936
        %v3155 = vpop.f32.mrf.mxu0
        %v3156 = vadd.f32 %v2959, %v3155
        %v3157 = vpop.f32.mrf.mxu0
        %v3158 = vpop.f32.mrf.mxu0
        %v3159 = vadd.f32 %v2959, %v3158
        %v3160 = vpop.f32.mrf.mxu0
        %3161 = vmatprep.mubr.bf16.mxu0 0
        %3162 = vmatmul.mubr.bf16.gmra.mxu0 %v2937
        %v3163 = vpop.f32.mrf.mxu0
        %v3164 = vadd.f32 %v2959, %v3163
        %v3165 = vpop.f32.mrf.mxu0
        %v3166 = vpop.f32.mrf.mxu0
        %v3167 = vadd.f32 %v2959, %v3166
        %v3168 = vpop.f32.mrf.mxu0
        %3169 = vdwg.mxu0
        %v3170 = vadd.f32 %v3044, %v644
        %v3171 = vadd.f32 %v3047, %v647
        %v3172 = vadd.f32 %v3052, %v652
        %v3173 = vadd.f32 %v3055, %v655
        %v3174 = vadd.f32 %v3060, %v660
        %v3175 = vadd.f32 %v3063, %v663
        %v3176 = vadd.f32 %v3068, %v668
        %v3177 = vadd.f32 %v3071, %v671
        %v3178 = vadd.f32 %v3076, %v676
        %v3179 = vadd.f32 %v3079, %v679
        %v3180 = vadd.f32 %v3084, %v684
        %v3181 = vadd.f32 %v3087, %v687
        %v3182 = vadd.f32 %v3092, %v692
        %v3183 = vadd.f32 %v3095, %v695
        %v3184 = vadd.f32 %v3100, %v700
        %v3185 = vadd.f32 %v3103, %v703
        %v3186 = vadd.f32 %v3108, %v708
        %v3187 = vadd.f32 %v3111, %v711
        %v3188 = vadd.f32 %v3116, %v716
        %v3189 = vadd.f32 %v3119, %v719
        %v3190 = vadd.f32 %v3124, %v724
        %v3191 = vadd.f32 %v3127, %v727
        %v3192 = vadd.f32 %v3132, %v732
        %v3193 = vadd.f32 %v3135, %v735
        %v3194 = vadd.f32 %v3140, %v740
        %v3195 = vadd.f32 %v3143, %v743
        %v3196 = vadd.f32 %v3148, %v748
        %v3197 = vadd.f32 %v3151, %v751
        %v3198 = vadd.f32 %v3156, %v756
        %v3199 = vadd.f32 %v3159, %v759
        %v3200 = vadd.f32 %v3164, %v764
        %v3201 = vadd.f32 %v3167, %v767
        %v3202 = vmax.f32 %v3170, 0.0
        %v3203 = vmax.f32 %v3171, 0.0
        %v3204 = vmax.f32 %v3172, 0.0
        %v3205 = vmax.f32 %v3173, 0.0
        %v3206 = vmax.f32 %v3174, 0.0
        %v3207 = vmax.f32 %v3175, 0.0
        %v3208 = vmax.f32 %v3176, 0.0
        %v3209 = vmax.f32 %v3177, 0.0
        %v3210 = vmax.f32 %v3178, 0.0
        %v3211 = vmax.f32 %v3179, 0.0
        %v3212 = vmax.f32 %v3180, 0.0
        %v3213 = vmax.f32 %v3181, 0.0
        %v3214 = vmax.f32 %v3182, 0.0
        %v3215 = vmax.f32 %v3183, 0.0
        %v3216 = vmax.f32 %v3184, 0.0
        %v3217 = vmax.f32 %v3185, 0.0
        %v3218 = vmax.f32 %v3186, 0.0
        %v3219 = vmax.f32 %v3187, 0.0
        %v3220 = vmax.f32 %v3188, 0.0
        %v3221 = vmax.f32 %v3189, 0.0
        %v3222 = vmax.f32 %v3190, 0.0
        %v3223 = vmax.f32 %v3191, 0.0
        %v3224 = vmax.f32 %v3192, 0.0
        %v3225 = vmax.f32 %v3193, 0.0
        %v3226 = vmax.f32 %v3194, 0.0
        %v3227 = vmax.f32 %v3195, 0.0
        %v3228 = vmax.f32 %v3196, 0.0
        %v3229 = vmax.f32 %v3197, 0.0
        %v3230 = vmax.f32 %v3198, 0.0
        %v3231 = vmax.f32 %v3199, 0.0
        %v3232 = vmax.f32 %v3200, 0.0
        %v3233 = vmax.f32 %v3201, 0.0
        %3234 = vst [vmem:[%s408] sm:$0xff] %v3202
        %3235 = vst [vmem:[%s408 + $0x8] sm:$0xff] %v3203
        %3236 = vst [vmem:[%s408 + $0x10] sm:$0xff] %v3204
        %3237 = vst [vmem:[%s408 + $0x18] sm:$0xff] %v3205
        %3238 = vst [vmem:[%s408 + $0x20] sm:$0xff] %v3206
        %3239 = vst [vmem:[%s408 + $0x28] sm:$0xff] %v3207
        %3240 = vst [vmem:[%s408 + $0x30] sm:$0xff] %v3208
        %3241 = vst [vmem:[%s408 + $0x38] sm:$0xff] %v3209
        %3242 = vst [vmem:[%s408 + $0x40] sm:$0xff] %v3210
        %3243 = vst [vmem:[%s408 + $0x48] sm:$0xff] %v3211
        %3244 = vst [vmem:[%s408 + $0x50] sm:$0xff] %v3212
        %3245 = vst [vmem:[%s408 + $0x58] sm:$0xff] %v3213
        %3246 = vst [vmem:[%s408 + $0x60] sm:$0xff] %v3214
        %3247 = vst [vmem:[%s408 + $0x68] sm:$0xff] %v3215
        %3248 = vst [vmem:[%s408 + $0x70] sm:$0xff] %v3216
        %3249 = vst [vmem:[%s408 + $0x78] sm:$0xff] %v3217
        %3250 = vst [vmem:[%s408 + $0x80] sm:$0xff] %v3218
        %3251 = vst [vmem:[%s408 + $0x88] sm:$0xff] %v3219
        %3252 = vst [vmem:[%s408 + $0x90] sm:$0xff] %v3220
        %3253 = vst [vmem:[%s408 + $0x98] sm:$0xff] %v3221
        %3254 = vst [vmem:[%s408 + $0xa0] sm:$0xff] %v3222
        %3255 = vst [vmem:[%s408 + $0xa8] sm:$0xff] %v3223
        %3256 = vst [vmem:[%s408 + $0xb0] sm:$0xff] %v3224
        %3257 = vst [vmem:[%s408 + $0xb8] sm:$0xff] %v3225
        %3258 = vst [vmem:[%s408 + $0xc0] sm:$0xff] %v3226
        %3259 = vst [vmem:[%s408 + $0xc8] sm:$0xff] %v3227
        %3260 = vst [vmem:[%s408 + $0xd0] sm:$0xff] %v3228
        %3261 = vst [vmem:[%s408 + $0xd8] sm:$0xff] %v3229
        %3262 = vst [vmem:[%s408 + $0xe0] sm:$0xff] %v3230
        %3263 = vst [vmem:[%s408 + $0xe8] sm:$0xff] %v3231
        %3264 = vst [vmem:[%s408 + $0xf0] sm:$0xff] %v3232
        %3265 = vst [vmem:[%s408 + $0xf8] sm:$0xff] %v3233
        %s3266 = sand.u32 %s230, 1
        %s3267 = scalar_lea.sflag [#allocation4], %s3266
        %s3268 = sand.u32 %s230, 1
        %s3269 = smul.addr %s3268, 256
        %s3270 = scalar_lea.vmem [#allocation11], %s3269
        // Predicated region
        $region77: #{tpu_custom_call.1} parent=55 // pred_check
          %p3271 = pneg %p240
        $region78: #{tpu_custom_call.1} parent=55 // pred_check_branch
          %3273 = sbr.rel (%p3271) target = $region80
        $region79: #{tpu_custom_call.1} parent=55 // pred_region
          %s3275 = ssub.s32 4096, 4096
          %3276 = vsyncadd %s3267, %s3275
          %s3277 = smul.addr %s28, 32
          %s3278 = smul.addr %s3277, 128
          %s3279 = scalar_lea.hbm %s9, %s3278
          %s3280 = sshll.u32 %s3270, 4
          %s3281 = int_to_ptr.vmem [resolvable:$true] %s3280
          %3286 = dma.vmem_to_hbm [thread:$0]  %s3281, 4096, %s3279, %s3267, 128, 128, 8
        $region80: #{tpu_custom_call.1} parent=55 // pred_fallthru
          _
      $region56: #{tpu_custom_call.1} parent=5 // pred_fallthru
        _
      %p3287 = scmp.le.s32.totalorder 2, %s23
      // Predicated region
      $region81: #{tpu_custom_call.1} parent=5 // pred_check
        %p3288 = pneg %p3287
      $region82: #{tpu_custom_call.1} parent=5 // pred_check_branch
        %3290 = sbr.rel (%p3288) target = $region84
      $region83: #{tpu_custom_call.1} parent=5 // pred_region
        %s3291 = ssub.s32 %s23, 2
        // Predicated region
        $region85: #{tpu_custom_call.1} parent=83 // pred_check
          %p3292 = pneg %p246
        $region86: #{tpu_custom_call.1} parent=83 // pred_check_branch
          %3294 = sbr.rel (%p3292) target = $region88
        $region87: #{tpu_custom_call.1} parent=83 // pred_region
          %s3295 = sand.u32 %s231, 1
          %s3296 = scalar_lea.sflag [#allocation4], %s3295
          %s3297 = sand.u32 %s231, 1
          %s3298 = smul.addr %s3297, 256
          %s3299 = scalar_lea.vmem [#allocation11], %s3298
          %3300 = dma.done %s3296, 4096
        $region88: #{tpu_custom_call.1} parent=83 // pred_fallthru
          _
      $region84: #{tpu_custom_call.1} parent=5 // pred_fallthru
        _
    $region6: #{tpu_custom_call.1} parent=1 // loop_footer
      %s27 = sadd.s32 1, %s23
    $region7: #{tpu_custom_call.1} parent=1 // loop_footer_branch
      %22 = sbr.rel target = $region3
    $region8: #{tpu_custom_call.1} parent=1 // loop_exit
      _
    %3301 = vsyncpa [#allocation3], 1
    %s3302 = scalar_lea.sflag [#allocation3], 1
    %3303 = vsyncpa %s3302, 1
    %3304 = vsyncpa [#allocation6], 1
    %3305 = vsyncpa [#allocation9], 1
    %3306 = vsyncpa [#allocation4], 1
    %s3307 = scalar_lea.sflag [#allocation4], 1
    %3308 = vsyncpa %s3307, 1

</llo_original>
